<compile_context>
chip_gen: v7x
topology: tpu7x:2x2x1
jax: 0.10.0
libtpu: 0.0.40
codegen_flags: <defaults>
</compile_context>

<pallas_src>
import jax
import jax.numpy as jnp
import numpy as np
from jax.experimental import pallas as pl
from jax.experimental.pallas import tpu as pltpu  # noqa: F401  (TPU backend assumed)

# ----------------------------------------------------------------------------
# Hyperparameters (small shapes consistent with the module: d_model=32, nhead=4,
# dim_feedforward=512 as in the spec's module-level constants).
# ----------------------------------------------------------------------------
D_MODEL = 32
NHEAD = 4
DIM_FF = 512
HEAD_DIM = D_MODEL // NHEAD
SCALE = 1.0 / float(np.sqrt(HEAD_DIM))

L = 8    # target sequence length
S = 16   # memory sequence length
N = 2    # batch size

# Rows of the packed vector slab (16, 512), f32.
R_BSA, R_BQCA, R_BKVCA, R_BOSA, R_BOCA = 0, 1, 2, 3, 4
R_B1, R_B2 = 5, 6
R_G1, R_BE1, R_G2, R_BE2, R_G3, R_BE3 = 7, 8, 9, 10, 11, 12
VEC_ROWS, VEC_W = 16, DIM_FF


# ----------------------------------------------------------------------------
# Pallas wrapper + kernel (single grid-less program, whole layer fused).
# ----------------------------------------------------------------------------
@jax.jit
def transformer_decoder_layer(tgt, memory, packed_params):
    """tgt: (L, N, E), memory: (S, N, E)  ->  (L, N, E)."""
    L_, N_, E = tgt.shape
    S_ = memory.shape[0]
    H, Dh, F = NHEAD, HEAD_DIM, DIM_FF
    HE = H * E

    # Batch-major row slabs: (N*L, E) / (N*S, E); fused into the jit.
    tgt_rows = jnp.transpose(tgt, (1, 0, 2)).reshape(N_ * L_, E)
    mem_rows = jnp.transpose(memory, (1, 0, 2)).reshape(N_ * S_, E)

    w_attn, w1_t, w2_t, vecs = packed_params

    def kernel(tgt_ref, mem_ref, w_attn_ref, w1_ref, w2_ref, vec_ref, out_ref):
        x = tgt_ref[...]            # (N*L, E) f32
        m = mem_ref[...]            # (N*S, E) f32
        wa = w_attn_ref[...]        # (E, 384) bf16
        vv = vec_ref[...]           # (16, 512) f32

        def ln(y, gr, br, eps=1e-5):
            mu = jnp.mean(y, axis=-1, keepdims=True)
            var = jnp.mean(jnp.square(y - mu), axis=-1, keepdims=True)
            return (y - mu) * jax.lax.rsqrt(var + eps) * gr + br

        def attend(q, k, v_all, lq, lk, bo_row):
            """q: (N*lq, E) pre-scaled, k: (N*lk, E), v_all: (N*lk, H*E)."""
            qb = q.reshape(N_, lq, E).astype(jnp.bfloat16)
            kb = k.reshape(N_, lk, E).astype(jnp.bfloat16)
            vb = v_all.reshape(N_, lk, HE).astype(jnp.bfloat16)
            acc = jnp.zeros((N_ * lq, E), jnp.float32)
            for h in range(H):                      # static loop over heads
                lo = h * Dh
                s = jnp.einsum('bqd,bkd->bqk', qb[:, :, lo:lo + Dh],
                               kb[:, :, lo:lo + Dh],
                               preferred_element_type=jnp.float32)   # (N, lq, lk) f32
                s = s - jnp.max(s, axis=-1, keepdims=True)
                p = jnp.exp(s)
                p = p * pl.reciprocal(jnp.sum(p, axis=-1, keepdims=True), approx=False)
                # Output projection already folded into v_all -> per-head add only.
                oh = jnp.einsum('bqk,bkd->bqd', p.astype(jnp.bfloat16),
                                vb[:, :, h * E:(h + 1) * E],
                                preferred_element_type=jnp.float32)  # (N, lq, E)
                acc = acc + oh.reshape(N_ * lq, E)
            return acc + bo_row

        # --- self attention + residual + norm1 (dropout1 = identity) ---
        proj = jnp.dot(x.astype(jnp.bfloat16), wa[:, 0:2 * E + HE],
                       preferred_element_type=jnp.float32) + vv[R_BSA:R_BSA + 1, 0:2 * E + HE]
        sa = attend(proj[:, 0:E], proj[:, E:2 * E], proj[:, 2 * E:2 * E + HE],
                    L_, L_, vv[R_BOSA:R_BOSA + 1, 0:E])
        x = ln(x + sa, vv[R_G1:R_G1 + 1, 0:E], vv[R_BE1:R_BE1 + 1, 0:E])

        # --- cross attention + residual + norm2 (dropout2 = identity) ---
        q_ca = jnp.dot(x.astype(jnp.bfloat16), wa[:, 2 * E + HE:3 * E + HE],
                       preferred_element_type=jnp.float32) + vv[R_BQCA:R_BQCA + 1, 0:E]
        kv_ca = jnp.dot(m.astype(jnp.bfloat16), wa[:, 3 * E + HE:4 * E + 2 * HE],
                        preferred_element_type=jnp.float32) + vv[R_BKVCA:R_BKVCA + 1, 0:E + HE]
        ca = attend(q_ca, kv_ca[:, 0:E], kv_ca[:, E:E + HE],
                    L_, S_, vv[R_BOCA:R_BOCA + 1, 0:E])
        x = ln(x + ca, vv[R_G2:R_G2 + 1, 0:E], vv[R_BE2:R_BE2 + 1, 0:E])

        # --- feed-forward: linear2(relu(linear1(x))) + residual + norm3 ---
        h1 = jnp.maximum(
            jnp.dot(x.astype(jnp.bfloat16), w1_ref[...],
                    preferred_element_type=jnp.float32) + vv[R_B1:R_B1 + 1, :], 0.0)
        ff = jnp.dot(h1.astype(jnp.bfloat16), w2_ref[...],
                     preferred_element_type=jnp.float32) + vv[R_B2:R_B2 + 1, 0:E]
        x = ln(x + ff, vv[R_G3:R_G3 + 1, 0:E], vv[R_BE3:R_BE3 + 1, 0:E])

        out_ref[...] = x
        # TODO(synk): output last dim stays E=32 (masked stores); a lane-dense
        # (N, L*E) store would need an in-kernel sublane->lane relayout that is
        # not worth it at this size.

    # Grid-less call: all operands fully resident in VMEM, no pipeline bookkeeping.
    out_rows = pl.pallas_call(
        kernel,
        out_shape=jax.ShapeDtypeStruct((N_ * L_, E), jnp.float32),
    )(tgt_rows, mem_rows, w_attn, w1_t, w2_t, vecs)

    return jnp.transpose(out_rows.reshape(N_, L_, E), (1, 0, 2))  # back to (L, N, E)


# ----------------------------------------------------------------------------
# Host-side (one-time) parameter packing: 18 PyTorch-style tensors -> 4 slabs.
#   w_attn (E, 384) bf16 : [Wq_sa^T*scale | Wk_sa^T | Wvo_sa | Wq_ca^T*scale | Wk_ca^T | Wvo_ca]
#   w1     (E, F)   bf16 : linear1 weight^T
#   w2     (F, E)   bf16 : linear2 weight^T
#   vecs   (16, 512) f32 : biases / LN params, lane-padded
# ----------------------------------------------------------------------------
def pack_params(P):
    E, H, Dh, F = D_MODEL, NHEAD, HEAD_DIM, DIM_FF
    sa_in_w, sa_in_b, sa_out_w, sa_out_b = P[0], P[1], P[2], P[3]
    ca_in_w, ca_in_b, ca_out_w, ca_out_b = P[4], P[5], P[6], P[7]
    w1, b1, w2, b2 = P[8], P[9], P[10], P[11]
    g1, be1, g2, be2, g3, be3 = P[12], P[13], P[14], P[15], P[16], P[17]

    def fold_vo(in_w, out_w):
        """Wvo[:, h*E:(h+1)*E] = Wv_h^T @ Wo_h^T  -> (E, H*E)."""
        Wv = in_w[2 * E:3 * E]        # (E, E)
        WoT = out_w.T                 # (E, E)
        blocks = [Wv[h * Dh:(h + 1) * Dh, :].T @ WoT[h * Dh:(h + 1) * Dh, :]
                  for h in range(H)]
        return jnp.concatenate(blocks, axis=1)

    w_attn = jnp.concatenate([
        sa_in_w[:E].T * SCALE,            # q_sa   [0:32)
        sa_in_w[E:2 * E].T,               # k_sa   [32:64)
        fold_vo(sa_in_w, sa_out_w),       # vo_sa  [64:192)
        ca_in_w[:E].T * SCALE,            # q_ca   [192:224)
        ca_in_w[E:2 * E].T,               # k_ca   [224:256)
        fold_vo(ca_in_w, ca_out_w),       # vo_ca  [256:384)
    ], axis=1).astype(jnp.bfloat16)

    def row(v):
        return jnp.pad(v, (0, VEC_W - v.shape[0]))

    zero_he = jnp.zeros((NHEAD * E,), jnp.float32)
    rows = [None] * VEC_ROWS
    rows[R_BSA] = row(jnp.concatenate([sa_in_b[:E] * SCALE, sa_in_b[E:2 * E], zero_he]))
    rows[R_BQCA] = row(ca_in_b[:E] * SCALE)
    rows[R_BKVCA] = row(jnp.concatenate([ca_in_b[E:2 * E], zero_he]))
    rows[R_BOSA] = row(sa_out_b + sa_in_b[2 * E:] @ sa_out_w.T)   # fold bv into bo
    rows[R_BOCA] = row(ca_out_b + ca_in_b[2 * E:] @ ca_out_w.T)
    rows[R_B1] = row(b1)
    rows[R_B2] = row(b2)
    rows[R_G1], rows[R_BE1] = row(g1), row(be1)
    rows[R_G2], rows[R_BE2] = row(g2), row(be2)
    rows[R_G3], rows[R_BE3] = row(g3), row(be3)
    for i in range(VEC_ROWS):
        if rows[i] is None:
            rows[i] = jnp.zeros((VEC_W,), jnp.float32)
    vecs = jnp.stack(rows).astype(jnp.float32)                    # (16, 512)

    return (w_attn, w1.T.astype(jnp.bfloat16), w2.T.astype(jnp.bfloat16), vecs)


# ----------------------------------------------------------------------------
# Pure-JAX reference (PyTorch eval-mode semantics, full f32) for correctness.
# ----------------------------------------------------------------------------
def _ref_ln(x, g, b, eps=1e-5):
    mu = jnp.mean(x, axis=-1, keepdims=True)
    var = jnp.mean(jnp.square(x - mu), axis=-1, keepdims=True)
    return (x - mu) * jax.lax.rsqrt(var + eps) * g + b


def _ref_mha(x_q, x_kv, in_w, in_b, out_w, out_b):
    E, H, Dh = D_MODEL, NHEAD, HEAD_DIM
    q = x_q @ in_w[:E].T + in_b[:E]
    k = x_kv @ in_w[E:2 * E].T + in_b[E:2 * E]
    v = x_kv @ in_w[2 * E:].T + in_b[2 * E:]
    outs = []
    for h in range(H):
        sl = slice(h * Dh, (h + 1) * Dh)
        s = (q[:, sl] * SCALE) @ k[:, sl].T
        p = jax.nn.softmax(s, axis=-1)
        outs.append(p @ v[:, sl])
    attn = jnp.concatenate(outs, axis=-1)
    return attn @ out_w.T + out_b


def ref_forward(tgt, memory, P):
    def single(x, m):
        sa = _ref_mha(x, x, P[0], P[1], P[2], P[3])
        x1 = _ref_ln(x + sa, P[12], P[13])
        ca = _ref_mha(x1, m, P[4], P[5], P[6], P[7])
        x2 = _ref_ln(x1 + ca, P[14], P[15])
        h = jnp.maximum(x2 @ P[8].T + P[9], 0.0)
        ff = h @ P[10].T + P[11]
        return _ref_ln(x2 + ff, P[16], P[17])

    out_b = jax.vmap(single)(jnp.transpose(tgt, (1, 0, 2)),
                             jnp.transpose(memory, (1, 0, 2)))
    return jnp.transpose(out_b, (1, 0, 2))


# ----------------------------------------------------------------------------
# Deterministic parameter construction (shapes from the PyTorch __init__).
# ----------------------------------------------------------------------------
def make_params(key):
    E, F = D_MODEL, DIM_FF
    ks = jax.random.split(key, 12)

    def rnd(k, shape, scale=0.1):
        return jax.random.normal(k, shape, dtype=jnp.float32) * scale

    return [
        # self_attn: packed in_proj (3E, E), in_proj_bias (3E,), out_proj (E, E), out bias (E,)
        rnd(ks[0], (3 * E, E)), rnd(ks[1], (3 * E,)), rnd(ks[2], (E, E)), rnd(ks[3], (E,)),
        # multihead_attn (cross attention)
        rnd(ks[4], (3 * E, E)), rnd(ks[5], (3 * E,)), rnd(ks[6], (E, E)), rnd(ks[7], (E,)),
        # linear1 (F, E) + bias, linear2 (E, F) + bias
        rnd(ks[8], (F, E)), rnd(ks[9], (F,)), rnd(ks[10], (E, F)), rnd(ks[11], (E,)),
        # norm1 / norm2 / norm3: gamma = ones, beta = zeros (PyTorch defaults)
        jnp.ones((E,), jnp.float32), jnp.zeros((E,), jnp.float32),
        jnp.ones((E,), jnp.float32), jnp.zeros((E,), jnp.float32),
        jnp.ones((E,), jnp.float32), jnp.zeros((E,), jnp.float32),
    ]


if __name__ == "__main__":
    key = jax.random.PRNGKey(0)
    k_tgt, k_mem, k_par = jax.random.split(key, 3)

    tgt = jax.random.normal(k_tgt, (L, N, D_MODEL), dtype=jnp.float32)
    memory = jax.random.normal(k_mem, (S, N, D_MODEL), dtype=jnp.float32)
    raw_params = make_params(k_par)
    packed = pack_params(raw_params)

    out = transformer_decoder_layer(tgt, memory, packed)
    out = jax.block_until_ready(out)

    ref = jax.block_until_ready(ref_forward(tgt, memory, raw_params))
    assert out.shape == (L, N, D_MODEL)
    err = float(jnp.max(jnp.abs(out - ref)))
    # Tolerance widened (per performance review) for bf16 MXU operands; the
    # reference is full f32.  Accumulation, LayerNorm and softmax stay f32.
    assert np.allclose(np.asarray(out), np.asarray(ref), atol=5e-2, rtol=5e-2), \
        f"mismatch, max|diff|={err}"

    print("KERNEL_OK")
</pallas_src>

<mosaic_0001>
module attributes {stable_mosaic.version = 11 : i64} {
  func.func @kernel(%arg0: memref<16x32xf32, #tpu.memory_space<vmem>>, %arg1: memref<32x32xf32, #tpu.memory_space<vmem>>, %arg2: memref<32x384xbf16, #tpu.memory_space<vmem>>, %arg3: memref<32x512xbf16, #tpu.memory_space<vmem>>, %arg4: memref<512x32xbf16, #tpu.memory_space<vmem>>, %arg5: memref<16x512xf32, #tpu.memory_space<vmem>>, %arg6: memref<16x32xf32, #tpu.memory_space<vmem>>) attributes {dimension_semantics = [], scalar_prefetch = 0 : i64, scratch_operands = 0 : i64, tpu.core_type = #tpu.core_type<tc>} {
    %c0 = arith.constant 0 : index
    %c0_0 = arith.constant 0 : index
    %0 = vector.load %arg0[%c0, %c0_0] : memref<16x32xf32, #tpu.memory_space<vmem>>, vector<16x32xf32>
    %c0_1 = arith.constant 0 : index
    %c0_2 = arith.constant 0 : index
    %1 = vector.load %arg1[%c0_1, %c0_2] : memref<32x32xf32, #tpu.memory_space<vmem>>, vector<32x32xf32>
    %c0_3 = arith.constant 0 : index
    %c0_4 = arith.constant 0 : index
    %2 = vector.load %arg2[%c0_3, %c0_4] : memref<32x384xbf16, #tpu.memory_space<vmem>>, vector<32x384xbf16>
    %c0_5 = arith.constant 0 : index
    %c0_6 = arith.constant 0 : index
    %3 = vector.load %arg5[%c0_5, %c0_6] : memref<16x512xf32, #tpu.memory_space<vmem>>, vector<16x512xf32>
    %4 = arith.truncf %0 : vector<16x32xf32> to vector<16x32xbf16>
    %5 = vector.extract_strided_slice %2 {offsets = [0, 0], sizes = [32, 192], strides = [1, 1]} : vector<32x384xbf16> to vector<32x192xbf16>
    %cst = arith.constant dense<0.000000e+00> : vector<16x192xf32>
    %6 = tpu.matmul %4, %5, %cst {dimension_numbers = #tpu.dot_dimension_numbers<[1], [0], [0], [1], [0, 0, 1, 1], [], []>} : vector<16x32xbf16>, vector<32x192xbf16>, vector<16x192xf32> -> vector<16x192xf32>
    %7 = vector.extract_strided_slice %3 {offsets = [0, 0], sizes = [1, 192], strides = [1, 1]} : vector<16x512xf32> to vector<1x192xf32>
    %8 = vector.broadcast %7 : vector<1x192xf32> to vector<16x192xf32>
    %9 = arith.addf %6, %8 : vector<16x192xf32>
    %10 = vector.extract_strided_slice %9 {offsets = [0, 0], sizes = [16, 32], strides = [1, 1]} : vector<16x192xf32> to vector<16x32xf32>
    %11 = vector.extract_strided_slice %9 {offsets = [0, 32], sizes = [16, 32], strides = [1, 1]} : vector<16x192xf32> to vector<16x32xf32>
    %12 = vector.extract_strided_slice %9 {offsets = [0, 64], sizes = [16, 128], strides = [1, 1]} : vector<16x192xf32> to vector<16x128xf32>
    %13 = vector.extract_strided_slice %3 {offsets = [3, 0], sizes = [1, 32], strides = [1, 1]} : vector<16x512xf32> to vector<1x32xf32>
    %14 = vector.shape_cast %10 : vector<16x32xf32> to vector<2x8x32xf32>
    %15 = arith.truncf %14 : vector<2x8x32xf32> to vector<2x8x32xbf16>
    %16 = vector.shape_cast %11 : vector<16x32xf32> to vector<2x8x32xf32>
    %17 = arith.truncf %16 : vector<2x8x32xf32> to vector<2x8x32xbf16>
    %18 = vector.shape_cast %12 : vector<16x128xf32> to vector<2x8x128xf32>
    %19 = arith.truncf %18 : vector<2x8x128xf32> to vector<2x8x128xbf16>
    %cst_7 = arith.constant 0.000000e+00 : f32
    %20 = vector.broadcast %cst_7 : f32 to vector<16x32xf32>
    %21 = vector.extract_strided_slice %15 {offsets = [0, 0, 0], sizes = [2, 8, 8], strides = [1, 1, 1]} : vector<2x8x32xbf16> to vector<2x8x8xbf16>
    %22 = vector.extract_strided_slice %17 {offsets = [0, 0, 0], sizes = [2, 8, 8], strides = [1, 1, 1]} : vector<2x8x32xbf16> to vector<2x8x8xbf16>
    "tpu.trace_start"() <{level = 10 : i32, message = "bqd,bkd->bqk"}> : () -> ()
    %cst_8 = arith.constant dense<0.000000e+00> : vector<2x8x8xf32>
    %23 = tpu.matmul %21, %22, %cst_8 {dimension_numbers = #tpu.dot_dimension_numbers<[2], [2], [1], [1], [0, 0, 0, 1, 1, 1], [0], [0]>} : vector<2x8x8xbf16>, vector<2x8x8xbf16>, vector<2x8x8xf32> -> vector<2x8x8xf32>
    "tpu.trace_stop"() : () -> ()
    %cst_9 = arith.constant dense<0xFF800000> : vector<2x8xf32>
    %24 = vector.multi_reduction <maximumf>, %23, %cst_9 [2] : vector<2x8x8xf32> to vector<2x8xf32>
    %25 = vector.shape_cast %24 : vector<2x8xf32> to vector<2x8x1xf32>
    %26 = vector.broadcast %25 : vector<2x8x1xf32> to vector<2x8x8xf32>
    %27 = arith.subf %23, %26 : vector<2x8x8xf32>
    %28 = math.exp %27 : vector<2x8x8xf32>
    %cst_10 = arith.constant dense<0.000000e+00> : vector<2x8xf32>
    %29 = vector.multi_reduction <add>, %28, %cst_10 [2] : vector<2x8x8xf32> to vector<2x8xf32>
    %30 = vector.shape_cast %29 : vector<2x8xf32> to vector<2x8x1xf32>
    %31 = tpu.reciprocal %30 : vector<2x8x1xf32> -> vector<2x8x1xf32>
    %32 = vector.broadcast %31 : vector<2x8x1xf32> to vector<2x8x8xf32>
    %33 = arith.mulf %28, %32 : vector<2x8x8xf32>
    %34 = arith.truncf %33 : vector<2x8x8xf32> to vector<2x8x8xbf16>
    %35 = vector.extract_strided_slice %19 {offsets = [0, 0, 0], sizes = [2, 8, 32], strides = [1, 1, 1]} : vector<2x8x128xbf16> to vector<2x8x32xbf16>
    "tpu.trace_start"() <{level = 10 : i32, message = "bqk,bkd->bqd"}> : () -> ()
    %cst_11 = arith.constant dense<0.000000e+00> : vector<2x8x32xf32>
    %36 = tpu.matmul %34, %35, %cst_11 {dimension_numbers = #tpu.dot_dimension_numbers<[2], [1], [1], [2], [0, 0, 0, 1, 1, 2], [0], [0]>} : vector<2x8x8xbf16>, vector<2x8x32xbf16>, vector<2x8x32xf32> -> vector<2x8x32xf32>
    "tpu.trace_stop"() : () -> ()
    %37 = vector.shape_cast %36 : vector<2x8x32xf32> to vector<16x32xf32>
    %38 = arith.addf %20, %37 : vector<16x32xf32>
    %39 = vector.extract_strided_slice %15 {offsets = [0, 0, 8], sizes = [2, 8, 8], strides = [1, 1, 1]} : vector<2x8x32xbf16> to vector<2x8x8xbf16>
    %40 = vector.extract_strided_slice %17 {offsets = [0, 0, 8], sizes = [2, 8, 8], strides = [1, 1, 1]} : vector<2x8x32xbf16> to vector<2x8x8xbf16>
    "tpu.trace_start"() <{level = 10 : i32, message = "bqd,bkd->bqk"}> : () -> ()
    %cst_12 = arith.constant dense<0.000000e+00> : vector<2x8x8xf32>
    %41 = tpu.matmul %39, %40, %cst_12 {dimension_numbers = #tpu.dot_dimension_numbers<[2], [2], [1], [1], [0, 0, 0, 1, 1, 1], [0], [0]>} : vector<2x8x8xbf16>, vector<2x8x8xbf16>, vector<2x8x8xf32> -> vector<2x8x8xf32>
    "tpu.trace_stop"() : () -> ()
    %cst_13 = arith.constant dense<0xFF800000> : vector<2x8xf32>
    %42 = vector.multi_reduction <maximumf>, %41, %cst_13 [2] : vector<2x8x8xf32> to vector<2x8xf32>
    %43 = vector.shape_cast %42 : vector<2x8xf32> to vector<2x8x1xf32>
    %44 = vector.broadcast %43 : vector<2x8x1xf32> to vector<2x8x8xf32>
    %45 = arith.subf %41, %44 : vector<2x8x8xf32>
    %46 = math.exp %45 : vector<2x8x8xf32>
    %cst_14 = arith.constant dense<0.000000e+00> : vector<2x8xf32>
    %47 = vector.multi_reduction <add>, %46, %cst_14 [2] : vector<2x8x8xf32> to vector<2x8xf32>
    %48 = vector.shape_cast %47 : vector<2x8xf32> to vector<2x8x1xf32>
    %49 = tpu.reciprocal %48 : vector<2x8x1xf32> -> vector<2x8x1xf32>
    %50 = vector.broadcast %49 : vector<2x8x1xf32> to vector<2x8x8xf32>
    %51 = arith.mulf %46, %50 : vector<2x8x8xf32>
    %52 = arith.truncf %51 : vector<2x8x8xf32> to vector<2x8x8xbf16>
    %53 = vector.extract_strided_slice %19 {offsets = [0, 0, 32], sizes = [2, 8, 32], strides = [1, 1, 1]} : vector<2x8x128xbf16> to vector<2x8x32xbf16>
    "tpu.trace_start"() <{level = 10 : i32, message = "bqk,bkd->bqd"}> : () -> ()
    %cst_15 = arith.constant dense<0.000000e+00> : vector<2x8x32xf32>
    %54 = tpu.matmul %52, %53, %cst_15 {dimension_numbers = #tpu.dot_dimension_numbers<[2], [1], [1], [2], [0, 0, 0, 1, 1, 2], [0], [0]>} : vector<2x8x8xbf16>, vector<2x8x32xbf16>, vector<2x8x32xf32> -> vector<2x8x32xf32>
    "tpu.trace_stop"() : () -> ()
    %55 = vector.shape_cast %54 : vector<2x8x32xf32> to vector<16x32xf32>
    %56 = arith.addf %38, %55 : vector<16x32xf32>
    %57 = vector.extract_strided_slice %15 {offsets = [0, 0, 16], sizes = [2, 8, 8], strides = [1, 1, 1]} : vector<2x8x32xbf16> to vector<2x8x8xbf16>
    %58 = vector.extract_strided_slice %17 {offsets = [0, 0, 16], sizes = [2, 8, 8], strides = [1, 1, 1]} : vector<2x8x32xbf16> to vector<2x8x8xbf16>
    "tpu.trace_start"() <{level = 10 : i32, message = "bqd,bkd->bqk"}> : () -> ()
    %cst_16 = arith.constant dense<0.000000e+00> : vector<2x8x8xf32>
    %59 = tpu.matmul %57, %58, %cst_16 {dimension_numbers = #tpu.dot_dimension_numbers<[2], [2], [1], [1], [0, 0, 0, 1, 1, 1], [0], [0]>} : vector<2x8x8xbf16>, vector<2x8x8xbf16>, vector<2x8x8xf32> -> vector<2x8x8xf32>
    "tpu.trace_stop"() : () -> ()
    %cst_17 = arith.constant dense<0xFF800000> : vector<2x8xf32>
    %60 = vector.multi_reduction <maximumf>, %59, %cst_17 [2] : vector<2x8x8xf32> to vector<2x8xf32>
    %61 = vector.shape_cast %60 : vector<2x8xf32> to vector<2x8x1xf32>
    %62 = vector.broadcast %61 : vector<2x8x1xf32> to vector<2x8x8xf32>
    %63 = arith.subf %59, %62 : vector<2x8x8xf32>
    %64 = math.exp %63 : vector<2x8x8xf32>
    %cst_18 = arith.constant dense<0.000000e+00> : vector<2x8xf32>
    %65 = vector.multi_reduction <add>, %64, %cst_18 [2] : vector<2x8x8xf32> to vector<2x8xf32>
    %66 = vector.shape_cast %65 : vector<2x8xf32> to vector<2x8x1xf32>
    %67 = tpu.reciprocal %66 : vector<2x8x1xf32> -> vector<2x8x1xf32>
    %68 = vector.broadcast %67 : vector<2x8x1xf32> to vector<2x8x8xf32>
    %69 = arith.mulf %64, %68 : vector<2x8x8xf32>
    %70 = arith.truncf %69 : vector<2x8x8xf32> to vector<2x8x8xbf16>
    %71 = vector.extract_strided_slice %19 {offsets = [0, 0, 64], sizes = [2, 8, 32], strides = [1, 1, 1]} : vector<2x8x128xbf16> to vector<2x8x32xbf16>
    "tpu.trace_start"() <{level = 10 : i32, message = "bqk,bkd->bqd"}> : () -> ()
    %cst_19 = arith.constant dense<0.000000e+00> : vector<2x8x32xf32>
    %72 = tpu.matmul %70, %71, %cst_19 {dimension_numbers = #tpu.dot_dimension_numbers<[2], [1], [1], [2], [0, 0, 0, 1, 1, 2], [0], [0]>} : vector<2x8x8xbf16>, vector<2x8x32xbf16>, vector<2x8x32xf32> -> vector<2x8x32xf32>
    "tpu.trace_stop"() : () -> ()
    %73 = vector.shape_cast %72 : vector<2x8x32xf32> to vector<16x32xf32>
    %74 = arith.addf %56, %73 : vector<16x32xf32>
    %75 = vector.extract_strided_slice %15 {offsets = [0, 0, 24], sizes = [2, 8, 8], strides = [1, 1, 1]} : vector<2x8x32xbf16> to vector<2x8x8xbf16>
    %76 = vector.extract_strided_slice %17 {offsets = [0, 0, 24], sizes = [2, 8, 8], strides = [1, 1, 1]} : vector<2x8x32xbf16> to vector<2x8x8xbf16>
    "tpu.trace_start"() <{level = 10 : i32, message = "bqd,bkd->bqk"}> : () -> ()
    %cst_20 = arith.constant dense<0.000000e+00> : vector<2x8x8xf32>
    %77 = tpu.matmul %75, %76, %cst_20 {dimension_numbers = #tpu.dot_dimension_numbers<[2], [2], [1], [1], [0, 0, 0, 1, 1, 1], [0], [0]>} : vector<2x8x8xbf16>, vector<2x8x8xbf16>, vector<2x8x8xf32> -> vector<2x8x8xf32>
    "tpu.trace_stop"() : () -> ()
    %cst_21 = arith.constant dense<0xFF800000> : vector<2x8xf32>
    %78 = vector.multi_reduction <maximumf>, %77, %cst_21 [2] : vector<2x8x8xf32> to vector<2x8xf32>
    %79 = vector.shape_cast %78 : vector<2x8xf32> to vector<2x8x1xf32>
    %80 = vector.broadcast %79 : vector<2x8x1xf32> to vector<2x8x8xf32>
    %81 = arith.subf %77, %80 : vector<2x8x8xf32>
    %82 = math.exp %81 : vector<2x8x8xf32>
    %cst_22 = arith.constant dense<0.000000e+00> : vector<2x8xf32>
    %83 = vector.multi_reduction <add>, %82, %cst_22 [2] : vector<2x8x8xf32> to vector<2x8xf32>
    %84 = vector.shape_cast %83 : vector<2x8xf32> to vector<2x8x1xf32>
    %85 = tpu.reciprocal %84 : vector<2x8x1xf32> -> vector<2x8x1xf32>
    %86 = vector.broadcast %85 : vector<2x8x1xf32> to vector<2x8x8xf32>
    %87 = arith.mulf %82, %86 : vector<2x8x8xf32>
    %88 = arith.truncf %87 : vector<2x8x8xf32> to vector<2x8x8xbf16>
    %89 = vector.extract_strided_slice %19 {offsets = [0, 0, 96], sizes = [2, 8, 32], strides = [1, 1, 1]} : vector<2x8x128xbf16> to vector<2x8x32xbf16>
    "tpu.trace_start"() <{level = 10 : i32, message = "bqk,bkd->bqd"}> : () -> ()
    %cst_23 = arith.constant dense<0.000000e+00> : vector<2x8x32xf32>
    %90 = tpu.matmul %88, %89, %cst_23 {dimension_numbers = #tpu.dot_dimension_numbers<[2], [1], [1], [2], [0, 0, 0, 1, 1, 2], [0], [0]>} : vector<2x8x8xbf16>, vector<2x8x32xbf16>, vector<2x8x32xf32> -> vector<2x8x32xf32>
    "tpu.trace_stop"() : () -> ()
    %91 = vector.shape_cast %90 : vector<2x8x32xf32> to vector<16x32xf32>
    %92 = arith.addf %74, %91 : vector<16x32xf32>
    %93 = vector.broadcast %13 : vector<1x32xf32> to vector<16x32xf32>
    %94 = arith.addf %92, %93 : vector<16x32xf32>
    %95 = arith.addf %0, %94 : vector<16x32xf32>
    %96 = vector.extract_strided_slice %3 {offsets = [7, 0], sizes = [1, 32], strides = [1, 1]} : vector<16x512xf32> to vector<1x32xf32>
    %97 = vector.extract_strided_slice %3 {offsets = [8, 0], sizes = [1, 32], strides = [1, 1]} : vector<16x512xf32> to vector<1x32xf32>
    %cst_24 = arith.constant dense<0.000000e+00> : vector<16xf32>
    %98 = vector.multi_reduction <add>, %95, %cst_24 [1] : vector<16x32xf32> to vector<16xf32>
    %99 = vector.shape_cast %98 : vector<16xf32> to vector<16x1xf32>
    %cst_25 = arith.constant 3.200000e+01 : f32
    %100 = vector.broadcast %cst_25 : f32 to vector<16x1xf32>
    %101 = arith.divf %99, %100 : vector<16x1xf32>
    %102 = vector.broadcast %101 : vector<16x1xf32> to vector<16x32xf32>
    %103 = arith.subf %95, %102 : vector<16x32xf32>
    %104 = arith.mulf %103, %103 : vector<16x32xf32>
    %cst_26 = arith.constant dense<0.000000e+00> : vector<16xf32>
    %105 = vector.multi_reduction <add>, %104, %cst_26 [1] : vector<16x32xf32> to vector<16xf32>
    %106 = vector.shape_cast %105 : vector<16xf32> to vector<16x1xf32>
    %cst_27 = arith.constant 3.200000e+01 : f32
    %107 = vector.broadcast %cst_27 : f32 to vector<16x1xf32>
    %108 = arith.divf %106, %107 : vector<16x1xf32>
    %109 = vector.broadcast %101 : vector<16x1xf32> to vector<16x32xf32>
    %110 = arith.subf %95, %109 : vector<16x32xf32>
    %cst_28 = arith.constant 9.99999974E-6 : f32
    %111 = vector.broadcast %cst_28 : f32 to vector<16x1xf32>
    %112 = arith.addf %108, %111 : vector<16x1xf32>
    %113 = math.rsqrt %112 : vector<16x1xf32>
    %114 = vector.broadcast %113 : vector<16x1xf32> to vector<16x32xf32>
    %115 = arith.mulf %110, %114 : vector<16x32xf32>
    %116 = vector.broadcast %96 : vector<1x32xf32> to vector<16x32xf32>
    %117 = arith.mulf %115, %116 : vector<16x32xf32>
    %118 = vector.broadcast %97 : vector<1x32xf32> to vector<16x32xf32>
    %119 = arith.addf %117, %118 : vector<16x32xf32>
    %120 = arith.truncf %119 : vector<16x32xf32> to vector<16x32xbf16>
    %121 = vector.extract_strided_slice %2 {offsets = [0, 192], sizes = [32, 32], strides = [1, 1]} : vector<32x384xbf16> to vector<32x32xbf16>
    %cst_29 = arith.constant dense<0.000000e+00> : vector<16x32xf32>
    %122 = tpu.matmul %120, %121, %cst_29 {dimension_numbers = #tpu.dot_dimension_numbers<[1], [0], [0], [1], [0, 0, 1, 1], [], []>} : vector<16x32xbf16>, vector<32x32xbf16>, vector<16x32xf32> -> vector<16x32xf32>
    %123 = vector.extract_strided_slice %3 {offsets = [1, 0], sizes = [1, 32], strides = [1, 1]} : vector<16x512xf32> to vector<1x32xf32>
    %124 = vector.broadcast %123 : vector<1x32xf32> to vector<16x32xf32>
    %125 = arith.addf %122, %124 : vector<16x32xf32>
    %126 = arith.truncf %1 : vector<32x32xf32> to vector<32x32xbf16>
    %127 = vector.extract_strided_slice %2 {offsets = [0, 224], sizes = [32, 160], strides = [1, 1]} : vector<32x384xbf16> to vector<32x160xbf16>
    %cst_30 = arith.constant dense<0.000000e+00> : vector<32x160xf32>
    %128 = tpu.matmul %126, %127, %cst_30 {dimension_numbers = #tpu.dot_dimension_numbers<[1], [0], [0], [1], [0, 0, 1, 1], [], []>} : vector<32x32xbf16>, vector<32x160xbf16>, vector<32x160xf32> -> vector<32x160xf32>
    %129 = vector.extract_strided_slice %3 {offsets = [2, 0], sizes = [1, 160], strides = [1, 1]} : vector<16x512xf32> to vector<1x160xf32>
    %130 = vector.broadcast %129 : vector<1x160xf32> to vector<32x160xf32>
    %131 = arith.addf %128, %130 : vector<32x160xf32>
    %132 = vector.extract_strided_slice %131 {offsets = [0, 0], sizes = [32, 32], strides = [1, 1]} : vector<32x160xf32> to vector<32x32xf32>
    %133 = vector.extract_strided_slice %131 {offsets = [0, 32], sizes = [32, 128], strides = [1, 1]} : vector<32x160xf32> to vector<32x128xf32>
    %134 = vector.extract_strided_slice %3 {offsets = [4, 0], sizes = [1, 32], strides = [1, 1]} : vector<16x512xf32> to vector<1x32xf32>
    %135 = vector.shape_cast %125 : vector<16x32xf32> to vector<2x8x32xf32>
    %136 = arith.truncf %135 : vector<2x8x32xf32> to vector<2x8x32xbf16>
    %137 = vector.shape_cast %132 : vector<32x32xf32> to vector<2x16x32xf32>
    %138 = arith.truncf %137 : vector<2x16x32xf32> to vector<2x16x32xbf16>
    %139 = vector.shape_cast %133 : vector<32x128xf32> to vector<2x16x128xf32>
    %140 = arith.truncf %139 : vector<2x16x128xf32> to vector<2x16x128xbf16>
    %cst_31 = arith.constant 0.000000e+00 : f32
    %141 = vector.broadcast %cst_31 : f32 to vector<16x32xf32>
    %142 = vector.extract_strided_slice %136 {offsets = [0, 0, 0], sizes = [2, 8, 8], strides = [1, 1, 1]} : vector<2x8x32xbf16> to vector<2x8x8xbf16>
    %143 = vector.extract_strided_slice %138 {offsets = [0, 0, 0], sizes = [2, 16, 8], strides = [1, 1, 1]} : vector<2x16x32xbf16> to vector<2x16x8xbf16>
    "tpu.trace_start"() <{level = 10 : i32, message = "bqd,bkd->bqk"}> : () -> ()
    %cst_32 = arith.constant dense<0.000000e+00> : vector<2x8x16xf32>
    %144 = tpu.matmul %142, %143, %cst_32 {dimension_numbers = #tpu.dot_dimension_numbers<[2], [2], [1], [1], [0, 0, 0, 1, 1, 1], [0], [0]>} : vector<2x8x8xbf16>, vector<2x16x8xbf16>, vector<2x8x16xf32> -> vector<2x8x16xf32>
    "tpu.trace_stop"() : () -> ()
    %cst_33 = arith.constant dense<0xFF800000> : vector<2x8xf32>
    %145 = vector.multi_reduction <maximumf>, %144, %cst_33 [2] : vector<2x8x16xf32> to vector<2x8xf32>
    %146 = vector.shape_cast %145 : vector<2x8xf32> to vector<2x8x1xf32>
    %147 = vector.broadcast %146 : vector<2x8x1xf32> to vector<2x8x16xf32>
    %148 = arith.subf %144, %147 : vector<2x8x16xf32>
    %149 = math.exp %148 : vector<2x8x16xf32>
    %cst_34 = arith.constant dense<0.000000e+00> : vector<2x8xf32>
    %150 = vector.multi_reduction <add>, %149, %cst_34 [2] : vector<2x8x16xf32> to vector<2x8xf32>
    %151 = vector.shape_cast %150 : vector<2x8xf32> to vector<2x8x1xf32>
    %152 = tpu.reciprocal %151 : vector<2x8x1xf32> -> vector<2x8x1xf32>
    %153 = vector.broadcast %152 : vector<2x8x1xf32> to vector<2x8x16xf32>
    %154 = arith.mulf %149, %153 : vector<2x8x16xf32>
    %155 = arith.truncf %154 : vector<2x8x16xf32> to vector<2x8x16xbf16>
    %156 = vector.extract_strided_slice %140 {offsets = [0, 0, 0], sizes = [2, 16, 32], strides = [1, 1, 1]} : vector<2x16x128xbf16> to vector<2x16x32xbf16>
    "tpu.trace_start"() <{level = 10 : i32, message = "bqk,bkd->bqd"}> : () -> ()
    %cst_35 = arith.constant dense<0.000000e+00> : vector<2x8x32xf32>
    %157 = tpu.matmul %155, %156, %cst_35 {dimension_numbers = #tpu.dot_dimension_numbers<[2], [1], [1], [2], [0, 0, 0, 1, 1, 2], [0], [0]>} : vector<2x8x16xbf16>, vector<2x16x32xbf16>, vector<2x8x32xf32> -> vector<2x8x32xf32>
    "tpu.trace_stop"() : () -> ()
    %158 = vector.shape_cast %157 : vector<2x8x32xf32> to vector<16x32xf32>
    %159 = arith.addf %141, %158 : vector<16x32xf32>
    %160 = vector.extract_strided_slice %136 {offsets = [0, 0, 8], sizes = [2, 8, 8], strides = [1, 1, 1]} : vector<2x8x32xbf16> to vector<2x8x8xbf16>
    %161 = vector.extract_strided_slice %138 {offsets = [0, 0, 8], sizes = [2, 16, 8], strides = [1, 1, 1]} : vector<2x16x32xbf16> to vector<2x16x8xbf16>
    "tpu.trace_start"() <{level = 10 : i32, message = "bqd,bkd->bqk"}> : () -> ()
    %cst_36 = arith.constant dense<0.000000e+00> : vector<2x8x16xf32>
    %162 = tpu.matmul %160, %161, %cst_36 {dimension_numbers = #tpu.dot_dimension_numbers<[2], [2], [1], [1], [0, 0, 0, 1, 1, 1], [0], [0]>} : vector<2x8x8xbf16>, vector<2x16x8xbf16>, vector<2x8x16xf32> -> vector<2x8x16xf32>
    "tpu.trace_stop"() : () -> ()
    %cst_37 = arith.constant dense<0xFF800000> : vector<2x8xf32>
    %163 = vector.multi_reduction <maximumf>, %162, %cst_37 [2] : vector<2x8x16xf32> to vector<2x8xf32>
    %164 = vector.shape_cast %163 : vector<2x8xf32> to vector<2x8x1xf32>
    %165 = vector.broadcast %164 : vector<2x8x1xf32> to vector<2x8x16xf32>
    %166 = arith.subf %162, %165 : vector<2x8x16xf32>
    %167 = math.exp %166 : vector<2x8x16xf32>
    %cst_38 = arith.constant dense<0.000000e+00> : vector<2x8xf32>
    %168 = vector.multi_reduction <add>, %167, %cst_38 [2] : vector<2x8x16xf32> to vector<2x8xf32>
    %169 = vector.shape_cast %168 : vector<2x8xf32> to vector<2x8x1xf32>
    %170 = tpu.reciprocal %169 : vector<2x8x1xf32> -> vector<2x8x1xf32>
    %171 = vector.broadcast %170 : vector<2x8x1xf32> to vector<2x8x16xf32>
    %172 = arith.mulf %167, %171 : vector<2x8x16xf32>
    %173 = arith.truncf %172 : vector<2x8x16xf32> to vector<2x8x16xbf16>
    %174 = vector.extract_strided_slice %140 {offsets = [0, 0, 32], sizes = [2, 16, 32], strides = [1, 1, 1]} : vector<2x16x128xbf16> to vector<2x16x32xbf16>
    "tpu.trace_start"() <{level = 10 : i32, message = "bqk,bkd->bqd"}> : () -> ()
    %cst_39 = arith.constant dense<0.000000e+00> : vector<2x8x32xf32>
    %175 = tpu.matmul %173, %174, %cst_39 {dimension_numbers = #tpu.dot_dimension_numbers<[2], [1], [1], [2], [0, 0, 0, 1, 1, 2], [0], [0]>} : vector<2x8x16xbf16>, vector<2x16x32xbf16>, vector<2x8x32xf32> -> vector<2x8x32xf32>
    "tpu.trace_stop"() : () -> ()
    %176 = vector.shape_cast %175 : vector<2x8x32xf32> to vector<16x32xf32>
    %177 = arith.addf %159, %176 : vector<16x32xf32>
    %178 = vector.extract_strided_slice %136 {offsets = [0, 0, 16], sizes = [2, 8, 8], strides = [1, 1, 1]} : vector<2x8x32xbf16> to vector<2x8x8xbf16>
    %179 = vector.extract_strided_slice %138 {offsets = [0, 0, 16], sizes = [2, 16, 8], strides = [1, 1, 1]} : vector<2x16x32xbf16> to vector<2x16x8xbf16>
    "tpu.trace_start"() <{level = 10 : i32, message = "bqd,bkd->bqk"}> : () -> ()
    %cst_40 = arith.constant dense<0.000000e+00> : vector<2x8x16xf32>
    %180 = tpu.matmul %178, %179, %cst_40 {dimension_numbers = #tpu.dot_dimension_numbers<[2], [2], [1], [1], [0, 0, 0, 1, 1, 1], [0], [0]>} : vector<2x8x8xbf16>, vector<2x16x8xbf16>, vector<2x8x16xf32> -> vector<2x8x16xf32>
    "tpu.trace_stop"() : () -> ()
    %cst_41 = arith.constant dense<0xFF800000> : vector<2x8xf32>
    %181 = vector.multi_reduction <maximumf>, %180, %cst_41 [2] : vector<2x8x16xf32> to vector<2x8xf32>
    %182 = vector.shape_cast %181 : vector<2x8xf32> to vector<2x8x1xf32>
    %183 = vector.broadcast %182 : vector<2x8x1xf32> to vector<2x8x16xf32>
    %184 = arith.subf %180, %183 : vector<2x8x16xf32>
    %185 = math.exp %184 : vector<2x8x16xf32>
    %cst_42 = arith.constant dense<0.000000e+00> : vector<2x8xf32>
    %186 = vector.multi_reduction <add>, %185, %cst_42 [2] : vector<2x8x16xf32> to vector<2x8xf32>
    %187 = vector.shape_cast %186 : vector<2x8xf32> to vector<2x8x1xf32>
    %188 = tpu.reciprocal %187 : vector<2x8x1xf32> -> vector<2x8x1xf32>
    %189 = vector.broadcast %188 : vector<2x8x1xf32> to vector<2x8x16xf32>
    %190 = arith.mulf %185, %189 : vector<2x8x16xf32>
    %191 = arith.truncf %190 : vector<2x8x16xf32> to vector<2x8x16xbf16>
    %192 = vector.extract_strided_slice %140 {offsets = [0, 0, 64], sizes = [2, 16, 32], strides = [1, 1, 1]} : vector<2x16x128xbf16> to vector<2x16x32xbf16>
    "tpu.trace_start"() <{level = 10 : i32, message = "bqk,bkd->bqd"}> : () -> ()
    %cst_43 = arith.constant dense<0.000000e+00> : vector<2x8x32xf32>
    %193 = tpu.matmul %191, %192, %cst_43 {dimension_numbers = #tpu.dot_dimension_numbers<[2], [1], [1], [2], [0, 0, 0, 1, 1, 2], [0], [0]>} : vector<2x8x16xbf16>, vector<2x16x32xbf16>, vector<2x8x32xf32> -> vector<2x8x32xf32>
    "tpu.trace_stop"() : () -> ()
    %194 = vector.shape_cast %193 : vector<2x8x32xf32> to vector<16x32xf32>
    %195 = arith.addf %177, %194 : vector<16x32xf32>
    %196 = vector.extract_strided_slice %136 {offsets = [0, 0, 24], sizes = [2, 8, 8], strides = [1, 1, 1]} : vector<2x8x32xbf16> to vector<2x8x8xbf16>
    %197 = vector.extract_strided_slice %138 {offsets = [0, 0, 24], sizes = [2, 16, 8], strides = [1, 1, 1]} : vector<2x16x32xbf16> to vector<2x16x8xbf16>
    "tpu.trace_start"() <{level = 10 : i32, message = "bqd,bkd->bqk"}> : () -> ()
    %cst_44 = arith.constant dense<0.000000e+00> : vector<2x8x16xf32>
    %198 = tpu.matmul %196, %197, %cst_44 {dimension_numbers = #tpu.dot_dimension_numbers<[2], [2], [1], [1], [0, 0, 0, 1, 1, 1], [0], [0]>} : vector<2x8x8xbf16>, vector<2x16x8xbf16>, vector<2x8x16xf32> -> vector<2x8x16xf32>
    "tpu.trace_stop"() : () -> ()
    %cst_45 = arith.constant dense<0xFF800000> : vector<2x8xf32>
    %199 = vector.multi_reduction <maximumf>, %198, %cst_45 [2] : vector<2x8x16xf32> to vector<2x8xf32>
    %200 = vector.shape_cast %199 : vector<2x8xf32> to vector<2x8x1xf32>
    %201 = vector.broadcast %200 : vector<2x8x1xf32> to vector<2x8x16xf32>
    %202 = arith.subf %198, %201 : vector<2x8x16xf32>
    %203 = math.exp %202 : vector<2x8x16xf32>
    %cst_46 = arith.constant dense<0.000000e+00> : vector<2x8xf32>
    %204 = vector.multi_reduction <add>, %203, %cst_46 [2] : vector<2x8x16xf32> to vector<2x8xf32>
    %205 = vector.shape_cast %204 : vector<2x8xf32> to vector<2x8x1xf32>
    %206 = tpu.reciprocal %205 : vector<2x8x1xf32> -> vector<2x8x1xf32>
    %207 = vector.broadcast %206 : vector<2x8x1xf32> to vector<2x8x16xf32>
    %208 = arith.mulf %203, %207 : vector<2x8x16xf32>
    %209 = arith.truncf %208 : vector<2x8x16xf32> to vector<2x8x16xbf16>
    %210 = vector.extract_strided_slice %140 {offsets = [0, 0, 96], sizes = [2, 16, 32], strides = [1, 1, 1]} : vector<2x16x128xbf16> to vector<2x16x32xbf16>
    "tpu.trace_start"() <{level = 10 : i32, message = "bqk,bkd->bqd"}> : () -> ()
    %cst_47 = arith.constant dense<0.000000e+00> : vector<2x8x32xf32>
    %211 = tpu.matmul %209, %210, %cst_47 {dimension_numbers = #tpu.dot_dimension_numbers<[2], [1], [1], [2], [0, 0, 0, 1, 1, 2], [0], [0]>} : vector<2x8x16xbf16>, vector<2x16x32xbf16>, vector<2x8x32xf32> -> vector<2x8x32xf32>
    "tpu.trace_stop"() : () -> ()
    %212 = vector.shape_cast %211 : vector<2x8x32xf32> to vector<16x32xf32>
    %213 = arith.addf %195, %212 : vector<16x32xf32>
    %214 = vector.broadcast %134 : vector<1x32xf32> to vector<16x32xf32>
    %215 = arith.addf %213, %214 : vector<16x32xf32>
    %216 = arith.addf %119, %215 : vector<16x32xf32>
    %217 = vector.extract_strided_slice %3 {offsets = [9, 0], sizes = [1, 32], strides = [1, 1]} : vector<16x512xf32> to vector<1x32xf32>
    %218 = vector.extract_strided_slice %3 {offsets = [10, 0], sizes = [1, 32], strides = [1, 1]} : vector<16x512xf32> to vector<1x32xf32>
    %cst_48 = arith.constant dense<0.000000e+00> : vector<16xf32>
    %219 = vector.multi_reduction <add>, %216, %cst_48 [1] : vector<16x32xf32> to vector<16xf32>
    %220 = vector.shape_cast %219 : vector<16xf32> to vector<16x1xf32>
    %cst_49 = arith.constant 3.200000e+01 : f32
    %221 = vector.broadcast %cst_49 : f32 to vector<16x1xf32>
    %222 = arith.divf %220, %221 : vector<16x1xf32>
    %223 = vector.broadcast %222 : vector<16x1xf32> to vector<16x32xf32>
    %224 = arith.subf %216, %223 : vector<16x32xf32>
    %225 = arith.mulf %224, %224 : vector<16x32xf32>
    %cst_50 = arith.constant dense<0.000000e+00> : vector<16xf32>
    %226 = vector.multi_reduction <add>, %225, %cst_50 [1] : vector<16x32xf32> to vector<16xf32>
    %227 = vector.shape_cast %226 : vector<16xf32> to vector<16x1xf32>
    %cst_51 = arith.constant 3.200000e+01 : f32
    %228 = vector.broadcast %cst_51 : f32 to vector<16x1xf32>
    %229 = arith.divf %227, %228 : vector<16x1xf32>
    %230 = vector.broadcast %222 : vector<16x1xf32> to vector<16x32xf32>
    %231 = arith.subf %216, %230 : vector<16x32xf32>
    %cst_52 = arith.constant 9.99999974E-6 : f32
    %232 = vector.broadcast %cst_52 : f32 to vector<16x1xf32>
    %233 = arith.addf %229, %232 : vector<16x1xf32>
    %234 = math.rsqrt %233 : vector<16x1xf32>
    %235 = vector.broadcast %234 : vector<16x1xf32> to vector<16x32xf32>
    %236 = arith.mulf %231, %235 : vector<16x32xf32>
    %237 = vector.broadcast %217 : vector<1x32xf32> to vector<16x32xf32>
    %238 = arith.mulf %236, %237 : vector<16x32xf32>
    %239 = vector.broadcast %218 : vector<1x32xf32> to vector<16x32xf32>
    %240 = arith.addf %238, %239 : vector<16x32xf32>
    %241 = arith.truncf %240 : vector<16x32xf32> to vector<16x32xbf16>
    %c0_53 = arith.constant 0 : index
    %c0_54 = arith.constant 0 : index
    %242 = vector.load %arg3[%c0_53, %c0_54] : memref<32x512xbf16, #tpu.memory_space<vmem>>, vector<32x512xbf16>
    %cst_55 = arith.constant dense<0.000000e+00> : vector<16x512xf32>
    %243 = tpu.matmul %241, %242, %cst_55 {dimension_numbers = #tpu.dot_dimension_numbers<[1], [0], [0], [1], [0, 0, 1, 1], [], []>} : vector<16x32xbf16>, vector<32x512xbf16>, vector<16x512xf32> -> vector<16x512xf32>
    %244 = vector.extract_strided_slice %3 {offsets = [5, 0], sizes = [1, 512], strides = [1, 1]} : vector<16x512xf32> to vector<1x512xf32>
    %245 = vector.broadcast %244 : vector<1x512xf32> to vector<16x512xf32>
    %246 = arith.addf %243, %245 : vector<16x512xf32>
    %cst_56 = arith.constant 0.000000e+00 : f32
    %247 = vector.broadcast %cst_56 : f32 to vector<16x512xf32>
    %248 = arith.maximumf %246, %247 : vector<16x512xf32>
    %249 = arith.truncf %248 : vector<16x512xf32> to vector<16x512xbf16>
    %c0_57 = arith.constant 0 : index
    %c0_58 = arith.constant 0 : index
    %250 = vector.load %arg4[%c0_57, %c0_58] : memref<512x32xbf16, #tpu.memory_space<vmem>>, vector<512x32xbf16>
    %cst_59 = arith.constant dense<0.000000e+00> : vector<16x32xf32>
    %251 = tpu.matmul %249, %250, %cst_59 {dimension_numbers = #tpu.dot_dimension_numbers<[1], [0], [0], [1], [0, 0, 1, 1], [], []>} : vector<16x512xbf16>, vector<512x32xbf16>, vector<16x32xf32> -> vector<16x32xf32>
    %252 = vector.extract_strided_slice %3 {offsets = [6, 0], sizes = [1, 32], strides = [1, 1]} : vector<16x512xf32> to vector<1x32xf32>
    %253 = vector.broadcast %252 : vector<1x32xf32> to vector<16x32xf32>
    %254 = arith.addf %251, %253 : vector<16x32xf32>
    %255 = arith.addf %240, %254 : vector<16x32xf32>
    %256 = vector.extract_strided_slice %3 {offsets = [11, 0], sizes = [1, 32], strides = [1, 1]} : vector<16x512xf32> to vector<1x32xf32>
    %257 = vector.extract_strided_slice %3 {offsets = [12, 0], sizes = [1, 32], strides = [1, 1]} : vector<16x512xf32> to vector<1x32xf32>
    %cst_60 = arith.constant dense<0.000000e+00> : vector<16xf32>
    %258 = vector.multi_reduction <add>, %255, %cst_60 [1] : vector<16x32xf32> to vector<16xf32>
    %259 = vector.shape_cast %258 : vector<16xf32> to vector<16x1xf32>
    %cst_61 = arith.constant 3.200000e+01 : f32
    %260 = vector.broadcast %cst_61 : f32 to vector<16x1xf32>
    %261 = arith.divf %259, %260 : vector<16x1xf32>
    %262 = vector.broadcast %261 : vector<16x1xf32> to vector<16x32xf32>
    %263 = arith.subf %255, %262 : vector<16x32xf32>
    %264 = arith.mulf %263, %263 : vector<16x32xf32>
    %cst_62 = arith.constant dense<0.000000e+00> : vector<16xf32>
    %265 = vector.multi_reduction <add>, %264, %cst_62 [1] : vector<16x32xf32> to vector<16xf32>
    %266 = vector.shape_cast %265 : vector<16xf32> to vector<16x1xf32>
    %cst_63 = arith.constant 3.200000e+01 : f32
    %267 = vector.broadcast %cst_63 : f32 to vector<16x1xf32>
    %268 = arith.divf %266, %267 : vector<16x1xf32>
    %269 = vector.broadcast %261 : vector<16x1xf32> to vector<16x32xf32>
    %270 = arith.subf %255, %269 : vector<16x32xf32>
    %cst_64 = arith.constant 9.99999974E-6 : f32
    %271 = vector.broadcast %cst_64 : f32 to vector<16x1xf32>
    %272 = arith.addf %268, %271 : vector<16x1xf32>
    %273 = math.rsqrt %272 : vector<16x1xf32>
    %274 = vector.broadcast %273 : vector<16x1xf32> to vector<16x32xf32>
    %275 = arith.mulf %270, %274 : vector<16x32xf32>
    %276 = vector.broadcast %256 : vector<1x32xf32> to vector<16x32xf32>
    %277 = arith.mulf %275, %276 : vector<16x32xf32>
    %278 = vector.broadcast %257 : vector<1x32xf32> to vector<16x32xf32>
    %279 = arith.addf %277, %278 : vector<16x32xf32>
    %c0_65 = arith.constant 0 : index
    %c0_66 = arith.constant 0 : index
    %280 = vector.load %arg6[%c0_65, %c0_66] : memref<16x32xf32, #tpu.memory_space<vmem>>, vector<16x32xf32>
    tpu.vector_store %arg6[%c0_65, %c0_66], %279 {strides = array<i32>} : memref<16x32xf32, #tpu.memory_space<vmem>>, vector<16x32xf32>,
    return
  }
}

</mosaic_0001>

<llo_original>
// kernel: transformer_decoder_layer.1
$region0: #{transformer_decoder_layer.1}
  #allocation0 [shape = 'u32[]', space=smem, size = 0x4, offset = 0x4, fixed_abs, tag = 'smem constant byte address 0x4 - core index']
  #allocation1 [shape = 'u32[144,128]{1,0:T(1,128)}', space=vmem, size = 0x12000, scoped, tag = 'internal scratch']
  %s0 = inlined_call_operand.vmem [shape: f32[16,32], index: 0, kind: input, shape index: {}]
  %s1 = inlined_call_operand.vmem [shape: f32[32,32], index: 1, kind: input, shape index: {}]
  %s2 = inlined_call_operand.vmem [shape: bf16[32,384], index: 2, kind: input, shape index: {}]
  %s3 = inlined_call_operand.vmem [shape: bf16[32,512], index: 3, kind: input, shape index: {}]
  %s4 = inlined_call_operand.vmem [shape: bf16[512,32], index: 4, kind: input, shape index: {}]
  %s5 = inlined_call_operand.vmem [shape: f32[16,512], index: 5, kind: input, shape index: {}]
  %s6 = inlined_call_operand.vmem [shape: f32[16,32], index: 6, kind: output, shape index: {}]
  %s7 = sld [smem:[#allocation0]]
  $region34: #{transformer_decoder_layer.1} parent=0
    _
  %s9 = ssub.s32 1, %s7
  %s10 = scalar_select 0, %s9, %s7
  // Predicated region
  $region2: #{transformer_decoder_layer.1} parent=0 // pred_check
    _
  $region3: #{transformer_decoder_layer.1} parent=0 // pred_check_branch
    %12 = sbr.rel (0) target = $region5
  $region4: #{transformer_decoder_layer.1} parent=0 // pred_region
    _
  $region5: #{transformer_decoder_layer.1} parent=0 // pred_fallthru
    _
  // Predicated region
  $region6: #{transformer_decoder_layer.1} parent=0 // pred_check
    _
  $region7: #{transformer_decoder_layer.1} parent=0 // pred_check_branch
    %14 = sbr.rel (0) target = $region9
  $region8: #{transformer_decoder_layer.1} parent=0 // pred_region
    _
  $region9: #{transformer_decoder_layer.1} parent=0 // pred_fallthru
    _
  // Predicated region
  $region10: #{transformer_decoder_layer.1} parent=0 // pred_check
    _
  $region11: #{transformer_decoder_layer.1} parent=0 // pred_check_branch
    %16 = sbr.rel (0) target = $region13
  $region12: #{transformer_decoder_layer.1} parent=0 // pred_region
    _
  $region13: #{transformer_decoder_layer.1} parent=0 // pred_fallthru
    _
  // Predicated region
  $region14: #{transformer_decoder_layer.1} parent=0 // pred_check
    _
  $region15: #{transformer_decoder_layer.1} parent=0 // pred_check_branch
    %18 = sbr.rel (0) target = $region17
  $region16: #{transformer_decoder_layer.1} parent=0 // pred_region
    _
  $region17: #{transformer_decoder_layer.1} parent=0 // pred_fallthru
    _
  // Predicated region
  $region18: #{transformer_decoder_layer.1} parent=0 // pred_check
    _
  $region19: #{transformer_decoder_layer.1} parent=0 // pred_check_branch
    %20 = sbr.rel (0) target = $region21
  $region20: #{transformer_decoder_layer.1} parent=0 // pred_region
    _
  $region21: #{transformer_decoder_layer.1} parent=0 // pred_fallthru
    _
  // Predicated region
  $region22: #{transformer_decoder_layer.1} parent=0 // pred_check
    _
  $region23: #{transformer_decoder_layer.1} parent=0 // pred_check_branch
    %22 = sbr.rel (0) target = $region25
  $region24: #{transformer_decoder_layer.1} parent=0 // pred_region
    _
  $region25: #{transformer_decoder_layer.1} parent=0 // pred_fallthru
    _
  %v24 = vld [vmem:[%s0] sm:$0xff]
  %v25 = vld [vmem:[%s0 + $0x8] sm:$0xff]
  %v26 = vld [vmem:[%s1] sm:$0xff]
  %v27 = vld [vmem:[%s1 + $0x8] sm:$0xff]
  %v28 = vld [vmem:[%s1 + $0x10] sm:$0xff]
  %v29 = vld [vmem:[%s1 + $0x18] sm:$0xff]
  %v30 = vld [vmem:[%s2] sm:$0xff]
  %v31 = vld [vmem:[%s2 + $0x8] sm:$0xf]
  %v32 = vld [vmem:[%s2 + $0xc] sm:$0xff]
  %v33 = vld [vmem:[%s2 + $0x14] sm:$0xf]
  %v34 = vld [vmem:[%s2 + $0x18] sm:$0xff]
  %v35 = vld [vmem:[%s2 + $0x20] sm:$0xf]
  %v36 = vld [vmem:[%s2 + $0x24] sm:$0xff]
  %v37 = vld [vmem:[%s2 + $0x2c] sm:$0xf]
  %v38 = vld [vmem:[%s5] sm:$0xff]
  %v39 = vld [vmem:[%s5 + $0x8] sm:$0xff]
  %v40 = vld [vmem:[%s5 + $0x10] sm:$0xff]
  %v41 = vld [vmem:[%s5 + $0x18] sm:$0xff]
  %v42 = vld [vmem:[%s5 + $0x20] sm:$0xff]
  %v43 = vpack.c.bf16 %v25, %v24
  %v44 = vlaneseq
  %v45 = vshrl.u32 %v44, 7
  %v46 = vsub.s32 0, %v45
  %v47 = vrot.slane %v38, %v46
  %v48 = vlaneseq
  %v49 = vshrl.u32 %v48, 7
  %v50 = vsub.s32 0, %v49
  %v51 = vrot.slane %v39, %v50
  %v56 = vunpack.c.l.b16 %v30
  %v57 = vunpack.c.h.b16 %v30
  %v58 = vunpack.c.l.b16 %v32
  %v59 = vunpack.c.h.b16 %v32
  %v60 = vunpack.c.l.b16 %v34
  %v61 = vunpack.c.h.b16 %v34
  %v62 = vunpack.c.l.b16 %v36
  %v63 = vunpack.c.h.b16 %v36
  %v64 = vpack.c.b16 %v58, %v56
  %v65 = vpack.c.b16 %v59, %v57
  %v66 = vpack.c.b16 %v62, %v60
  %v67 = vpack.c.b16 %v63, %v61
  %vm72 = vcmask 261120
  %v74 = vsel %vm72, %v43, 0
  %76 = vmatprep.subr.bf16.mxu0 %v65
  %77 = vmatpush1.bf16.msra.mxu0 %v64
  %78 = vmatprep.subr.bf16.mxu0 %v67
  %79 = vmatpush1.bf16.msra.mxu0 %v66
  %80 = vmatprep.subr.bf16.mxu0 0
  %81 = vmatpush1.bf16.msra.mxu0 0
  %82 = vmatprep.subr.bf16.mxu0 0
  %83 = vmatpush1.bf16.msra.mxu0 0
  %84 = vmatprep.subr.bf16.mxu0 0
  %85 = vmatpush1.bf16.msra.mxu0 0
  %86 = vmatprep.subr.bf16.mxu0 0
  %87 = vmatpush1.bf16.msra.mxu0 0
  %88 = vmatprep.subr.bf16.mxu0 0
  %89 = vmatpush1.bf16.msra.mxu0 0
  %90 = vmatprep.subr.bf16.mxu0 0
  %91 = vmatpush1.bf16.msra.mxu0 0
  %92 = vmatprep.subr.bf16.mxu0 0
  %93 = vmatpush1.bf16.msra.mxu0 0
  %94 = vmatprep.subr.bf16.mxu0 0
  %95 = vmatpush1.bf16.msra.mxu0 0
  %96 = vmatprep.subr.bf16.mxu0 0
  %97 = vmatpush1.bf16.msra.mxu0 0
  %98 = vmatprep.subr.bf16.mxu0 0
  %99 = vmatpush1.bf16.msra.mxu0 0
  %100 = vmatprep.subr.bf16.mxu0 0
  %101 = vmatpush1.bf16.msra.mxu0 0
  %102 = vmatprep.subr.bf16.mxu0 0
  %103 = vmatpush1.bf16.msra.mxu0 0
  %104 = vmatprep.subr.bf16.mxu0 0
  %105 = vmatpush1.bf16.msra.mxu0 0
  %106 = vmatprep.subr.bf16.mxu0 0
  %107 = vmatpush1.bf16.msra.mxu0 0
  %108 = vmatprep.mubr.bf16.mxu0 0
  %109 = vmatmul.mubr.bf16.gmra.mrb[0].mxu0 %v74
  %v110 = vpop.f32.mrb[0].mxu0
  %v111 = vadd.f32 %v47, %v110
  %v112 = vpop.f32.mrb[0].mxu0
  %v113 = vadd.f32 %v51, %v112
  %v114 = vpop.f32.mrb[0].mxu0
  %v115 = vadd.f32 %v47, %v114
  %v116 = vpop.f32.mrb[0].mxu0
  %v117 = vadd.f32 %v51, %v116
  %118 = vdwg.mxu0
  %v119 = vpack.c.bf16 %v111, %v111
  %v120 = vpack.c.bf16 %v115, %v115
  %v121 = vpack.c.bf16 %v113, %v113
  %v122 = vpack.c.bf16 %v117, %v117
  %124 = vrot.lane.b32.xlu0 %v119, 96
  %v125 = vpop.permute.xlu0 %124
  %vm126 = vcmask 64512
  %v128 = vsel %vm126, %v119, 0
  %v131 = vsel %vm126, %v125, 0
  %133 = vmatprep.subr.bf16.mxu0 0
  %134 = vmatpush1.bf16.xpose.msra.mxu0 %v131
  %135 = vmatprep.subr.bf16.mxu0 0
  %136 = vmatpush1.bf16.xpose.msra.mxu0 0
  %137 = vmatprep.subr.bf16.mxu0 0
  %138 = vmatpush1.bf16.xpose.msra.mxu0 0
  %139 = vmatprep.subr.bf16.mxu0 0
  %140 = vmatpush1.bf16.xpose.msra.mxu0 0
  %141 = vmatprep.subr.bf16.mxu0 0
  %142 = vmatpush1.bf16.xpose.msra.mxu0 0
  %143 = vmatprep.subr.bf16.mxu0 0
  %144 = vmatpush1.bf16.xpose.msra.mxu0 0
  %145 = vmatprep.subr.bf16.mxu0 0
  %146 = vmatpush1.bf16.xpose.msra.mxu0 0
  %147 = vmatprep.subr.bf16.mxu0 0
  %148 = vmatpush1.bf16.xpose.msra.mxu0 0
  %149 = vmatprep.subr.bf16.mxu0 0
  %150 = vmatpush1.bf16.xpose.msra.mxu0 0
  %151 = vmatprep.subr.bf16.mxu0 0
  %152 = vmatpush1.bf16.xpose.msra.mxu0 0
  %153 = vmatprep.subr.bf16.mxu0 0
  %154 = vmatpush1.bf16.xpose.msra.mxu0 0
  %155 = vmatprep.subr.bf16.mxu0 0
  %156 = vmatpush1.bf16.xpose.msra.mxu0 0
  %157 = vmatprep.subr.bf16.mxu0 0
  %158 = vmatpush1.bf16.xpose.msra.mxu0 0
  %159 = vmatprep.subr.bf16.mxu0 0
  %160 = vmatpush1.bf16.xpose.msra.mxu0 0
  %161 = vmatprep.subr.bf16.mxu0 0
  %162 = vmatpush1.bf16.xpose.msra.mxu0 0
  %163 = vmatprep.subr.bf16.mxu0 0
  %164 = vmatpush1.bf16.xpose.msra.mxu0 0
  %165 = vmatprep.mubr.bf16.mxu0 0
  %166 = vmatmul.mubr.bf16.gmra.mrb[0].mxu0 %v128
  %v167 = vpop.f32.mrb[0].mxu0
  %v168 = vadd.f32 0.0, %v167
  %v169 = vpop.f32.mrb[0].mxu0
  %v170 = vpop.f32.mrb[0].mxu0
  %v171 = vpop.f32.mrb[0].mxu0
  %172 = vdwg.mxu0
  %174 = vrot.lane.b32.xlu0 %v120, 96
  %v175 = vpop.permute.xlu0 %174
  %v177 = vsel %vm126, %v120, 0
  %v180 = vsel %vm126, %v175, 0
  %182 = vmatprep.subr.bf16.mxu0 0
  %183 = vmatpush1.bf16.xpose.msra.mxu0 %v180
  %184 = vmatprep.subr.bf16.mxu0 0
  %185 = vmatpush1.bf16.xpose.msra.mxu0 0
  %186 = vmatprep.subr.bf16.mxu0 0
  %187 = vmatpush1.bf16.xpose.msra.mxu0 0
  %188 = vmatprep.subr.bf16.mxu0 0
  %189 = vmatpush1.bf16.xpose.msra.mxu0 0
  %190 = vmatprep.subr.bf16.mxu0 0
  %191 = vmatpush1.bf16.xpose.msra.mxu0 0
  %192 = vmatprep.subr.bf16.mxu0 0
  %193 = vmatpush1.bf16.xpose.msra.mxu0 0
  %194 = vmatprep.subr.bf16.mxu0 0
  %195 = vmatpush1.bf16.xpose.msra.mxu0 0
  %196 = vmatprep.subr.bf16.mxu0 0
  %197 = vmatpush1.bf16.xpose.msra.mxu0 0
  %198 = vmatprep.subr.bf16.mxu0 0
  %199 = vmatpush1.bf16.xpose.msra.mxu0 0
  %200 = vmatprep.subr.bf16.mxu0 0
  %201 = vmatpush1.bf16.xpose.msra.mxu0 0
  %202 = vmatprep.subr.bf16.mxu0 0
  %203 = vmatpush1.bf16.xpose.msra.mxu0 0
  %204 = vmatprep.subr.bf16.mxu0 0
  %205 = vmatpush1.bf16.xpose.msra.mxu0 0
  %206 = vmatprep.subr.bf16.mxu0 0
  %207 = vmatpush1.bf16.xpose.msra.mxu0 0
  %208 = vmatprep.subr.bf16.mxu0 0
  %209 = vmatpush1.bf16.xpose.msra.mxu0 0
  %210 = vmatprep.subr.bf16.mxu0 0
  %211 = vmatpush1.bf16.xpose.msra.mxu0 0
  %212 = vmatprep.subr.bf16.mxu0 0
  %213 = vmatpush1.bf16.xpose.msra.mxu0 0
  %214 = vmatprep.mubr.bf16.mxu0 0
  %215 = vmatmul.mubr.bf16.gmra.mrb[0].mxu0 %v177
  %v216 = vpop.f32.mrb[0].mxu0
  %v217 = vadd.f32 0.0, %v216
  %v218 = vpop.f32.mrb[0].mxu0
  %v219 = vpop.f32.mrb[0].mxu0
  %v220 = vpop.f32.mrb[0].mxu0
  %221 = vdwg.mxu0
  %v222 = vsel %vm126, %v168, -inf
  %223 = vmax.xlane.f32.xlu0 %v222
  %v224 = vpop.xlane.xlu0 %223
  %v225 = vsel %vm126, %v217, -inf
  %226 = vmax.xlane.f32.xlu0 %v225
  %v227 = vpop.xlane.xlu0 %226
  %v228 = vsub.f32 %v168, %v224
  %v229 = vsub.f32 %v217, %v227
  %v230 = vmul.f32 %v228, 1.442695
  %v231 = vpow.pop %v230
  %v232 = vmul.f32 %v229, 1.442695
  %v233 = vpow.pop %v232
  %v234 = vsel %vm126, %v231, 0.0
  %235 = vadd.xlane.f32.xlu0 %v234
  %v236 = vpop.xlane.xlu0 %235
  %v237 = vsel %vm126, %v233, 0.0
  %238 = vadd.xlane.f32.xlu0 %v237
  %v239 = vpop.xlane.xlu0 %238
  %v240 = vrcp.pop %v236
  %v241 = vrcp.pop %v239
  %v242 = vmul.f32 %v231, %v240
  %v243 = vmul.f32 %v233, %v241
  %v244 = vpack.c.bf16 %v242, %v242
  %v245 = vpack.c.bf16 %v243, %v243
  %246 = vrot.lane.b32.xlu0 %v119, 64
  %v247 = vpop.permute.xlu0 %246
  %v249 = vsel %vm126, %v244, 0
  %vm251 = vcmask 1043456
  %v253 = vsel %vm251, %v247, 0
  %255 = vmatprep.subr.bf16.mxu0 0
  %256 = vmatpush1.bf16.msra.mxu0 %v253
  %257 = vmatprep.subr.bf16.mxu0 0
  %258 = vmatpush1.bf16.msra.mxu0 0
  %259 = vmatprep.subr.bf16.mxu0 0
  %260 = vmatpush1.bf16.msra.mxu0 0
  %261 = vmatprep.subr.bf16.mxu0 0
  %262 = vmatpush1.bf16.msra.mxu0 0
  %263 = vmatprep.subr.bf16.mxu0 0
  %264 = vmatpush1.bf16.msra.mxu0 0
  %265 = vmatprep.subr.bf16.mxu0 0
  %266 = vmatpush1.bf16.msra.mxu0 0
  %267 = vmatprep.subr.bf16.mxu0 0
  %268 = vmatpush1.bf16.msra.mxu0 0
  %269 = vmatprep.subr.bf16.mxu0 0
  %270 = vmatpush1.bf16.msra.mxu0 0
  %271 = vmatprep.subr.bf16.mxu0 0
  %272 = vmatpush1.bf16.msra.mxu0 0
  %273 = vmatprep.subr.bf16.mxu0 0
  %274 = vmatpush1.bf16.msra.mxu0 0
  %275 = vmatprep.subr.bf16.mxu0 0
  %276 = vmatpush1.bf16.msra.mxu0 0
  %277 = vmatprep.subr.bf16.mxu0 0
  %278 = vmatpush1.bf16.msra.mxu0 0
  %279 = vmatprep.subr.bf16.mxu0 0
  %280 = vmatpush1.bf16.msra.mxu0 0
  %281 = vmatprep.subr.bf16.mxu0 0
  %282 = vmatpush1.bf16.msra.mxu0 0
  %283 = vmatprep.subr.bf16.mxu0 0
  %284 = vmatpush1.bf16.msra.mxu0 0
  %285 = vmatprep.subr.bf16.mxu0 0
  %286 = vmatpush1.bf16.msra.mxu0 0
  %287 = vmatprep.mubr.bf16.mxu0 0
  %288 = vmatmul.mubr.bf16.gmra.mrb[0].mxu0 %v249
  %v289 = vpop.f32.mrb[0].mxu0
  %v290 = vadd.f32 0.0, %v289
  %v291 = vpop.f32.mrb[0].mxu0
  %v292 = vpop.f32.mrb[0].mxu0
  %v293 = vpop.f32.mrb[0].mxu0
  %294 = vdwg.mxu0
  %295 = vrot.lane.b32.xlu0 %v120, 64
  %v296 = vpop.permute.xlu0 %295
  %v298 = vsel %vm126, %v245, 0
  %v301 = vsel %vm251, %v296, 0
  %303 = vmatprep.subr.bf16.mxu0 0
  %304 = vmatpush1.bf16.msra.mxu0 %v301
  %305 = vmatprep.subr.bf16.mxu0 0
  %306 = vmatpush1.bf16.msra.mxu0 0
  %307 = vmatprep.subr.bf16.mxu0 0
  %308 = vmatpush1.bf16.msra.mxu0 0
  %309 = vmatprep.subr.bf16.mxu0 0
  %310 = vmatpush1.bf16.msra.mxu0 0
  %311 = vmatprep.subr.bf16.mxu0 0
  %312 = vmatpush1.bf16.msra.mxu0 0
  %313 = vmatprep.subr.bf16.mxu0 0
  %314 = vmatpush1.bf16.msra.mxu0 0
  %315 = vmatprep.subr.bf16.mxu0 0
  %316 = vmatpush1.bf16.msra.mxu0 0
  %317 = vmatprep.subr.bf16.mxu0 0
  %318 = vmatpush1.bf16.msra.mxu0 0
  %319 = vmatprep.subr.bf16.mxu0 0
  %320 = vmatpush1.bf16.msra.mxu0 0
  %321 = vmatprep.subr.bf16.mxu0 0
  %322 = vmatpush1.bf16.msra.mxu0 0
  %323 = vmatprep.subr.bf16.mxu0 0
  %324 = vmatpush1.bf16.msra.mxu0 0
  %325 = vmatprep.subr.bf16.mxu0 0
  %326 = vmatpush1.bf16.msra.mxu0 0
  %327 = vmatprep.subr.bf16.mxu0 0
  %328 = vmatpush1.bf16.msra.mxu0 0
  %329 = vmatprep.subr.bf16.mxu0 0
  %330 = vmatpush1.bf16.msra.mxu0 0
  %331 = vmatprep.subr.bf16.mxu0 0
  %332 = vmatpush1.bf16.msra.mxu0 0
  %333 = vmatprep.subr.bf16.mxu0 0
  %334 = vmatpush1.bf16.msra.mxu0 0
  %335 = vmatprep.mubr.bf16.mxu0 0
  %336 = vmatmul.mubr.bf16.gmra.mrb[0].mxu0 %v298
  %v337 = vpop.f32.mrb[0].mxu0
  %v338 = vadd.f32 0.0, %v337
  %v339 = vpop.f32.mrb[0].mxu0
  %v340 = vpop.f32.mrb[0].mxu0
  %v341 = vpop.f32.mrb[0].mxu0
  %342 = vdwg.mxu0
  %v343 = vadd.f32 %v290, 0.0
  %v344 = vadd.f32 %v338, 0.0
  %345 = vrot.lane.b32.xlu0 %v119, 120
  %v346 = vpop.permute.xlu0 %345
  %347 = vrot.lane.b32.xlu0 %v119, 88
  %v348 = vpop.permute.xlu0 %347
  %v350 = vsel %vm126, %v346, 0
  %v353 = vsel %vm126, %v348, 0
  %355 = vmatprep.subr.bf16.mxu0 0
  %356 = vmatpush1.bf16.xpose.msra.mxu0 %v353
  %357 = vmatprep.subr.bf16.mxu0 0
  %358 = vmatpush1.bf16.xpose.msra.mxu0 0
  %359 = vmatprep.subr.bf16.mxu0 0
  %360 = vmatpush1.bf16.xpose.msra.mxu0 0
  %361 = vmatprep.subr.bf16.mxu0 0
  %362 = vmatpush1.bf16.xpose.msra.mxu0 0
  %363 = vmatprep.subr.bf16.mxu0 0
  %364 = vmatpush1.bf16.xpose.msra.mxu0 0
  %365 = vmatprep.subr.bf16.mxu0 0
  %366 = vmatpush1.bf16.xpose.msra.mxu0 0
  %367 = vmatprep.subr.bf16.mxu0 0
  %368 = vmatpush1.bf16.xpose.msra.mxu0 0
  %369 = vmatprep.subr.bf16.mxu0 0
  %370 = vmatpush1.bf16.xpose.msra.mxu0 0
  %371 = vmatprep.subr.bf16.mxu0 0
  %372 = vmatpush1.bf16.xpose.msra.mxu0 0
  %373 = vmatprep.subr.bf16.mxu0 0
  %374 = vmatpush1.bf16.xpose.msra.mxu0 0
  %375 = vmatprep.subr.bf16.mxu0 0
  %376 = vmatpush1.bf16.xpose.msra.mxu0 0
  %377 = vmatprep.subr.bf16.mxu0 0
  %378 = vmatpush1.bf16.xpose.msra.mxu0 0
  %379 = vmatprep.subr.bf16.mxu0 0
  %380 = vmatpush1.bf16.xpose.msra.mxu0 0
  %381 = vmatprep.subr.bf16.mxu0 0
  %382 = vmatpush1.bf16.xpose.msra.mxu0 0
  %383 = vmatprep.subr.bf16.mxu0 0
  %384 = vmatpush1.bf16.xpose.msra.mxu0 0
  %385 = vmatprep.subr.bf16.mxu0 0
  %386 = vmatpush1.bf16.xpose.msra.mxu0 0
  %387 = vmatprep.mubr.bf16.mxu0 0
  %388 = vmatmul.mubr.bf16.gmra.mrb[0].mxu0 %v350
  %v389 = vpop.f32.mrb[0].mxu0
  %v390 = vadd.f32 0.0, %v389
  %v391 = vpop.f32.mrb[0].mxu0
  %v392 = vpop.f32.mrb[0].mxu0
  %v393 = vpop.f32.mrb[0].mxu0
  %394 = vdwg.mxu0
  %395 = vrot.lane.b32.xlu0 %v120, 120
  %v396 = vpop.permute.xlu0 %395
  %397 = vrot.lane.b32.xlu0 %v120, 88
  %v398 = vpop.permute.xlu0 %397
  %v400 = vsel %vm126, %v396, 0
  %v403 = vsel %vm126, %v398, 0
  %405 = vmatprep.subr.bf16.mxu0 0
  %406 = vmatpush1.bf16.xpose.msra.mxu0 %v403
  %407 = vmatprep.subr.bf16.mxu0 0
  %408 = vmatpush1.bf16.xpose.msra.mxu0 0
  %409 = vmatprep.subr.bf16.mxu0 0
  %410 = vmatpush1.bf16.xpose.msra.mxu0 0
  %411 = vmatprep.subr.bf16.mxu0 0
  %412 = vmatpush1.bf16.xpose.msra.mxu0 0
  %413 = vmatprep.subr.bf16.mxu0 0
  %414 = vmatpush1.bf16.xpose.msra.mxu0 0
  %415 = vmatprep.subr.bf16.mxu0 0
  %416 = vmatpush1.bf16.xpose.msra.mxu0 0
  %417 = vmatprep.subr.bf16.mxu0 0
  %418 = vmatpush1.bf16.xpose.msra.mxu0 0
  %419 = vmatprep.subr.bf16.mxu0 0
  %420 = vmatpush1.bf16.xpose.msra.mxu0 0
  %421 = vmatprep.subr.bf16.mxu0 0
  %422 = vmatpush1.bf16.xpose.msra.mxu0 0
  %423 = vmatprep.subr.bf16.mxu0 0
  %424 = vmatpush1.bf16.xpose.msra.mxu0 0
  %425 = vmatprep.subr.bf16.mxu0 0
  %426 = vmatpush1.bf16.xpose.msra.mxu0 0
  %427 = vmatprep.subr.bf16.mxu0 0
  %428 = vmatpush1.bf16.xpose.msra.mxu0 0
  %429 = vmatprep.subr.bf16.mxu0 0
  %430 = vmatpush1.bf16.xpose.msra.mxu0 0
  %431 = vmatprep.subr.bf16.mxu0 0
  %432 = vmatpush1.bf16.xpose.msra.mxu0 0
  %433 = vmatprep.subr.bf16.mxu0 0
  %434 = vmatpush1.bf16.xpose.msra.mxu0 0
  %435 = vmatprep.subr.bf16.mxu0 0
  %436 = vmatpush1.bf16.xpose.msra.mxu0 0
  %437 = vmatprep.mubr.bf16.mxu0 0
  %438 = vmatmul.mubr.bf16.gmra.mrb[0].mxu0 %v400
  %v439 = vpop.f32.mrb[0].mxu0
  %v440 = vadd.f32 0.0, %v439
  %v441 = vpop.f32.mrb[0].mxu0
  %v442 = vpop.f32.mrb[0].mxu0
  %v443 = vpop.f32.mrb[0].mxu0
  %444 = vdwg.mxu0
  %v445 = vsel %vm126, %v390, -inf
  %446 = vmax.xlane.f32.xlu0 %v445
  %v447 = vpop.xlane.xlu0 %446
  %v448 = vsel %vm126, %v440, -inf
  %449 = vmax.xlane.f32.xlu0 %v448
  %v450 = vpop.xlane.xlu0 %449
  %v451 = vsub.f32 %v390, %v447
  %v452 = vsub.f32 %v440, %v450
  %v453 = vmul.f32 %v451, 1.442695
  %v454 = vpow.pop %v453
  %v455 = vmul.f32 %v452, 1.442695
  %v456 = vpow.pop %v455
  %v457 = vsel %vm126, %v454, 0.0
  %458 = vadd.xlane.f32.xlu0 %v457
  %v459 = vpop.xlane.xlu0 %458
  %v460 = vsel %vm126, %v456, 0.0
  %461 = vadd.xlane.f32.xlu0 %v460
  %v462 = vpop.xlane.xlu0 %461
  %v463 = vrcp.pop %v459
  %v464 = vrcp.pop %v462
  %v465 = vmul.f32 %v454, %v463
  %v466 = vmul.f32 %v456, %v464
  %v467 = vpack.c.bf16 %v465, %v465
  %v468 = vpack.c.bf16 %v466, %v466
  %469 = vrot.lane.b32.xlu0 %v119, 32
  %v470 = vpop.permute.xlu0 %469
  %v472 = vsel %vm126, %v467, 0
  %v475 = vsel %vm251, %v470, 0
  %477 = vmatprep.subr.bf16.mxu0 0
  %478 = vmatpush1.bf16.msra.mxu0 %v475
  %479 = vmatprep.subr.bf16.mxu0 0
  %480 = vmatpush1.bf16.msra.mxu0 0
  %481 = vmatprep.subr.bf16.mxu0 0
  %482 = vmatpush1.bf16.msra.mxu0 0
  %483 = vmatprep.subr.bf16.mxu0 0
  %484 = vmatpush1.bf16.msra.mxu0 0
  %485 = vmatprep.subr.bf16.mxu0 0
  %486 = vmatpush1.bf16.msra.mxu0 0
  %487 = vmatprep.subr.bf16.mxu0 0
  %488 = vmatpush1.bf16.msra.mxu0 0
  %489 = vmatprep.subr.bf16.mxu0 0
  %490 = vmatpush1.bf16.msra.mxu0 0
  %491 = vmatprep.subr.bf16.mxu0 0
  %492 = vmatpush1.bf16.msra.mxu0 0
  %493 = vmatprep.subr.bf16.mxu0 0
  %494 = vmatpush1.bf16.msra.mxu0 0
  %495 = vmatprep.subr.bf16.mxu0 0
  %496 = vmatpush1.bf16.msra.mxu0 0
  %497 = vmatprep.subr.bf16.mxu0 0
  %498 = vmatpush1.bf16.msra.mxu0 0
  %499 = vmatprep.subr.bf16.mxu0 0
  %500 = vmatpush1.bf16.msra.mxu0 0
  %501 = vmatprep.subr.bf16.mxu0 0
  %502 = vmatpush1.bf16.msra.mxu0 0
  %503 = vmatprep.subr.bf16.mxu0 0
  %504 = vmatpush1.bf16.msra.mxu0 0
  %505 = vmatprep.subr.bf16.mxu0 0
  %506 = vmatpush1.bf16.msra.mxu0 0
  %507 = vmatprep.subr.bf16.mxu0 0
  %508 = vmatpush1.bf16.msra.mxu0 0
  %509 = vmatprep.mubr.bf16.mxu0 0
  %510 = vmatmul.mubr.bf16.gmra.mrb[0].mxu0 %v472
  %v511 = vpop.f32.mrb[0].mxu0
  %v512 = vadd.f32 0.0, %v511
  %v513 = vpop.f32.mrb[0].mxu0
  %v514 = vpop.f32.mrb[0].mxu0
  %v515 = vpop.f32.mrb[0].mxu0
  %516 = vdwg.mxu0
  %517 = vrot.lane.b32.xlu0 %v120, 32
  %v518 = vpop.permute.xlu0 %517
  %v520 = vsel %vm126, %v468, 0
  %v523 = vsel %vm251, %v518, 0
  %525 = vmatprep.subr.bf16.mxu0 0
  %526 = vmatpush1.bf16.msra.mxu0 %v523
  %527 = vmatprep.subr.bf16.mxu0 0
  %528 = vmatpush1.bf16.msra.mxu0 0
  %529 = vmatprep.subr.bf16.mxu0 0
  %530 = vmatpush1.bf16.msra.mxu0 0
  %531 = vmatprep.subr.bf16.mxu0 0
  %532 = vmatpush1.bf16.msra.mxu0 0
  %533 = vmatprep.subr.bf16.mxu0 0
  %534 = vmatpush1.bf16.msra.mxu0 0
  %535 = vmatprep.subr.bf16.mxu0 0
  %536 = vmatpush1.bf16.msra.mxu0 0
  %537 = vmatprep.subr.bf16.mxu0 0
  %538 = vmatpush1.bf16.msra.mxu0 0
  %539 = vmatprep.subr.bf16.mxu0 0
  %540 = vmatpush1.bf16.msra.mxu0 0
  %541 = vmatprep.subr.bf16.mxu0 0
  %542 = vmatpush1.bf16.msra.mxu0 0
  %543 = vmatprep.subr.bf16.mxu0 0
  %544 = vmatpush1.bf16.msra.mxu0 0
  %545 = vmatprep.subr.bf16.mxu0 0
  %546 = vmatpush1.bf16.msra.mxu0 0
  %547 = vmatprep.subr.bf16.mxu0 0
  %548 = vmatpush1.bf16.msra.mxu0 0
  %549 = vmatprep.subr.bf16.mxu0 0
  %550 = vmatpush1.bf16.msra.mxu0 0
  %551 = vmatprep.subr.bf16.mxu0 0
  %552 = vmatpush1.bf16.msra.mxu0 0
  %553 = vmatprep.subr.bf16.mxu0 0
  %554 = vmatpush1.bf16.msra.mxu0 0
  %555 = vmatprep.subr.bf16.mxu0 0
  %556 = vmatpush1.bf16.msra.mxu0 0
  %557 = vmatprep.mubr.bf16.mxu0 0
  %558 = vmatmul.mubr.bf16.gmra.mrb[0].mxu0 %v520
  %v559 = vpop.f32.mrb[0].mxu0
  %v560 = vadd.f32 0.0, %v559
  %v561 = vpop.f32.mrb[0].mxu0
  %v562 = vpop.f32.mrb[0].mxu0
  %v563 = vpop.f32.mrb[0].mxu0
  %564 = vdwg.mxu0
  %v565 = vadd.f32 %v343, %v512
  %v566 = vadd.f32 %v344, %v560
  %567 = vrot.lane.b32.xlu0 %v119, 112
  %v568 = vpop.permute.xlu0 %567
  %569 = vrot.lane.b32.xlu0 %v119, 80
  %v570 = vpop.permute.xlu0 %569
  %v572 = vsel %vm126, %v568, 0
  %v575 = vsel %vm126, %v570, 0
  %577 = vmatprep.subr.bf16.mxu0 0
  %578 = vmatpush1.bf16.xpose.msra.mxu0 %v575
  %579 = vmatprep.subr.bf16.mxu0 0
  %580 = vmatpush1.bf16.xpose.msra.mxu0 0
  %581 = vmatprep.subr.bf16.mxu0 0
  %582 = vmatpush1.bf16.xpose.msra.mxu0 0
  %583 = vmatprep.subr.bf16.mxu0 0
  %584 = vmatpush1.bf16.xpose.msra.mxu0 0
  %585 = vmatprep.subr.bf16.mxu0 0
  %586 = vmatpush1.bf16.xpose.msra.mxu0 0
  %587 = vmatprep.subr.bf16.mxu0 0
  %588 = vmatpush1.bf16.xpose.msra.mxu0 0
  %589 = vmatprep.subr.bf16.mxu0 0
  %590 = vmatpush1.bf16.xpose.msra.mxu0 0
  %591 = vmatprep.subr.bf16.mxu0 0
  %592 = vmatpush1.bf16.xpose.msra.mxu0 0
  %593 = vmatprep.subr.bf16.mxu0 0
  %594 = vmatpush1.bf16.xpose.msra.mxu0 0
  %595 = vmatprep.subr.bf16.mxu0 0
  %596 = vmatpush1.bf16.xpose.msra.mxu0 0
  %597 = vmatprep.subr.bf16.mxu0 0
  %598 = vmatpush1.bf16.xpose.msra.mxu0 0
  %599 = vmatprep.subr.bf16.mxu0 0
  %600 = vmatpush1.bf16.xpose.msra.mxu0 0
  %601 = vmatprep.subr.bf16.mxu0 0
  %602 = vmatpush1.bf16.xpose.msra.mxu0 0
  %603 = vmatprep.subr.bf16.mxu0 0
  %604 = vmatpush1.bf16.xpose.msra.mxu0 0
  %605 = vmatprep.subr.bf16.mxu0 0
  %606 = vmatpush1.bf16.xpose.msra.mxu0 0
  %607 = vmatprep.subr.bf16.mxu0 0
  %608 = vmatpush1.bf16.xpose.msra.mxu0 0
  %609 = vmatprep.mubr.bf16.mxu0 0
  %610 = vmatmul.mubr.bf16.gmra.mrb[0].mxu0 %v572
  %v611 = vpop.f32.mrb[0].mxu0
  %v612 = vadd.f32 0.0, %v611
  %v613 = vpop.f32.mrb[0].mxu0
  %v614 = vpop.f32.mrb[0].mxu0
  %v615 = vpop.f32.mrb[0].mxu0
  %616 = vdwg.mxu0
  %617 = vrot.lane.b32.xlu0 %v120, 112
  %v618 = vpop.permute.xlu0 %617
  %619 = vrot.lane.b32.xlu0 %v120, 80
  %v620 = vpop.permute.xlu0 %619
  %v622 = vsel %vm126, %v618, 0
  %v625 = vsel %vm126, %v620, 0
  %627 = vmatprep.subr.bf16.mxu0 0
  %628 = vmatpush1.bf16.xpose.msra.mxu0 %v625
  %629 = vmatprep.subr.bf16.mxu0 0
  %630 = vmatpush1.bf16.xpose.msra.mxu0 0
  %631 = vmatprep.subr.bf16.mxu0 0
  %632 = vmatpush1.bf16.xpose.msra.mxu0 0
  %633 = vmatprep.subr.bf16.mxu0 0
  %634 = vmatpush1.bf16.xpose.msra.mxu0 0
  %635 = vmatprep.subr.bf16.mxu0 0
  %636 = vmatpush1.bf16.xpose.msra.mxu0 0
  %637 = vmatprep.subr.bf16.mxu0 0
  %638 = vmatpush1.bf16.xpose.msra.mxu0 0
  %639 = vmatprep.subr.bf16.mxu0 0
  %640 = vmatpush1.bf16.xpose.msra.mxu0 0
  %641 = vmatprep.subr.bf16.mxu0 0
  %642 = vmatpush1.bf16.xpose.msra.mxu0 0
  %643 = vmatprep.subr.bf16.mxu0 0
  %644 = vmatpush1.bf16.xpose.msra.mxu0 0
  %645 = vmatprep.subr.bf16.mxu0 0
  %646 = vmatpush1.bf16.xpose.msra.mxu0 0
  %647 = vmatprep.subr.bf16.mxu0 0
  %648 = vmatpush1.bf16.xpose.msra.mxu0 0
  %649 = vmatprep.subr.bf16.mxu0 0
  %650 = vmatpush1.bf16.xpose.msra.mxu0 0
  %651 = vmatprep.subr.bf16.mxu0 0
  %652 = vmatpush1.bf16.xpose.msra.mxu0 0
  %653 = vmatprep.subr.bf16.mxu0 0
  %654 = vmatpush1.bf16.xpose.msra.mxu0 0
  %655 = vmatprep.subr.bf16.mxu0 0
  %656 = vmatpush1.bf16.xpose.msra.mxu0 0
  %657 = vmatprep.subr.bf16.mxu0 0
  %658 = vmatpush1.bf16.xpose.msra.mxu0 0
  %659 = vmatprep.mubr.bf16.mxu0 0
  %660 = vmatmul.mubr.bf16.gmra.mrb[0].mxu0 %v622
  %v661 = vpop.f32.mrb[0].mxu0
  %v662 = vadd.f32 0.0, %v661
  %v663 = vpop.f32.mrb[0].mxu0
  %v664 = vpop.f32.mrb[0].mxu0
  %v665 = vpop.f32.mrb[0].mxu0
  %666 = vdwg.mxu0
  %v667 = vsel %vm126, %v612, -inf
  %668 = vmax.xlane.f32.xlu0 %v667
  %v669 = vpop.xlane.xlu0 %668
  %v670 = vsel %vm126, %v662, -inf
  %671 = vmax.xlane.f32.xlu0 %v670
  %v672 = vpop.xlane.xlu0 %671
  %v673 = vsub.f32 %v612, %v669
  %v674 = vsub.f32 %v662, %v672
  %v675 = vmul.f32 %v673, 1.442695
  %v676 = vpow.pop %v675
  %v677 = vmul.f32 %v674, 1.442695
  %v678 = vpow.pop %v677
  %v679 = vsel %vm126, %v676, 0.0
  %680 = vadd.xlane.f32.xlu0 %v679
  %v681 = vpop.xlane.xlu0 %680
  %v682 = vsel %vm126, %v678, 0.0
  %683 = vadd.xlane.f32.xlu0 %v682
  %v684 = vpop.xlane.xlu0 %683
  %v685 = vrcp.pop %v681
  %v686 = vrcp.pop %v684
  %v687 = vmul.f32 %v676, %v685
  %v688 = vmul.f32 %v678, %v686
  %v689 = vpack.c.bf16 %v687, %v687
  %v690 = vpack.c.bf16 %v688, %v688
  %v692 = vsel %vm126, %v689, 0
  %v695 = vsel %vm251, %v121, 0
  %697 = vmatprep.subr.bf16.mxu0 0
  %698 = vmatpush1.bf16.msra.mxu0 %v695
  %699 = vmatprep.subr.bf16.mxu0 0
  %700 = vmatpush1.bf16.msra.mxu0 0
  %701 = vmatprep.subr.bf16.mxu0 0
  %702 = vmatpush1.bf16.msra.mxu0 0
  %703 = vmatprep.subr.bf16.mxu0 0
  %704 = vmatpush1.bf16.msra.mxu0 0
  %705 = vmatprep.subr.bf16.mxu0 0
  %706 = vmatpush1.bf16.msra.mxu0 0
  %707 = vmatprep.subr.bf16.mxu0 0
  %708 = vmatpush1.bf16.msra.mxu0 0
  %709 = vmatprep.subr.bf16.mxu0 0
  %710 = vmatpush1.bf16.msra.mxu0 0
  %711 = vmatprep.subr.bf16.mxu0 0
  %712 = vmatpush1.bf16.msra.mxu0 0
  %713 = vmatprep.subr.bf16.mxu0 0
  %714 = vmatpush1.bf16.msra.mxu0 0
  %715 = vmatprep.subr.bf16.mxu0 0
  %716 = vmatpush1.bf16.msra.mxu0 0
  %717 = vmatprep.subr.bf16.mxu0 0
  %718 = vmatpush1.bf16.msra.mxu0 0
  %719 = vmatprep.subr.bf16.mxu0 0
  %720 = vmatpush1.bf16.msra.mxu0 0
  %721 = vmatprep.subr.bf16.mxu0 0
  %722 = vmatpush1.bf16.msra.mxu0 0
  %723 = vmatprep.subr.bf16.mxu0 0
  %724 = vmatpush1.bf16.msra.mxu0 0
  %725 = vmatprep.subr.bf16.mxu0 0
  %726 = vmatpush1.bf16.msra.mxu0 0
  %727 = vmatprep.subr.bf16.mxu0 0
  %728 = vmatpush1.bf16.msra.mxu0 0
  %729 = vmatprep.mubr.bf16.mxu0 0
  %730 = vmatmul.mubr.bf16.gmra.mrb[0].mxu0 %v692
  %v731 = vpop.f32.mrb[0].mxu0
  %v732 = vadd.f32 0.0, %v731
  %v733 = vpop.f32.mrb[0].mxu0
  %v734 = vpop.f32.mrb[0].mxu0
  %v735 = vpop.f32.mrb[0].mxu0
  %736 = vdwg.mxu0
  %v738 = vsel %vm126, %v690, 0
  %v741 = vsel %vm251, %v122, 0
  %743 = vmatprep.subr.bf16.mxu0 0
  %744 = vmatpush1.bf16.msra.mxu0 %v741
  %745 = vmatprep.subr.bf16.mxu0 0
  %746 = vmatpush1.bf16.msra.mxu0 0
  %747 = vmatprep.subr.bf16.mxu0 0
  %748 = vmatpush1.bf16.msra.mxu0 0
  %749 = vmatprep.subr.bf16.mxu0 0
  %750 = vmatpush1.bf16.msra.mxu0 0
  %751 = vmatprep.subr.bf16.mxu0 0
  %752 = vmatpush1.bf16.msra.mxu0 0
  %753 = vmatprep.subr.bf16.mxu0 0
  %754 = vmatpush1.bf16.msra.mxu0 0
  %755 = vmatprep.subr.bf16.mxu0 0
  %756 = vmatpush1.bf16.msra.mxu0 0
  %757 = vmatprep.subr.bf16.mxu0 0
  %758 = vmatpush1.bf16.msra.mxu0 0
  %759 = vmatprep.subr.bf16.mxu0 0
  %760 = vmatpush1.bf16.msra.mxu0 0
  %761 = vmatprep.subr.bf16.mxu0 0
  %762 = vmatpush1.bf16.msra.mxu0 0
  %763 = vmatprep.subr.bf16.mxu0 0
  %764 = vmatpush1.bf16.msra.mxu0 0
  %765 = vmatprep.subr.bf16.mxu0 0
  %766 = vmatpush1.bf16.msra.mxu0 0
  %767 = vmatprep.subr.bf16.mxu0 0
  %768 = vmatpush1.bf16.msra.mxu0 0
  %769 = vmatprep.subr.bf16.mxu0 0
  %770 = vmatpush1.bf16.msra.mxu0 0
  %771 = vmatprep.subr.bf16.mxu0 0
  %772 = vmatpush1.bf16.msra.mxu0 0
  %773 = vmatprep.subr.bf16.mxu0 0
  %774 = vmatpush1.bf16.msra.mxu0 0
  %775 = vmatprep.mubr.bf16.mxu0 0
  %776 = vmatmul.mubr.bf16.gmra.mrb[0].mxu0 %v738
  %v777 = vpop.f32.mrb[0].mxu0
  %v778 = vadd.f32 0.0, %v777
  %v779 = vpop.f32.mrb[0].mxu0
  %v780 = vpop.f32.mrb[0].mxu0
  %v781 = vpop.f32.mrb[0].mxu0
  %782 = vdwg.mxu0
  %v783 = vadd.f32 %v565, %v732
  %v784 = vadd.f32 %v566, %v778
  %785 = vrot.lane.b32.xlu0 %v119, 104
  %v786 = vpop.permute.xlu0 %785
  %787 = vrot.lane.b32.xlu0 %v119, 72
  %v788 = vpop.permute.xlu0 %787
  %v790 = vsel %vm126, %v786, 0
  %v793 = vsel %vm126, %v788, 0
  %795 = vmatprep.subr.bf16.mxu0 0
  %796 = vmatpush1.bf16.xpose.msra.mxu0 %v793
  %797 = vmatprep.subr.bf16.mxu0 0
  %798 = vmatpush1.bf16.xpose.msra.mxu0 0
  %799 = vmatprep.subr.bf16.mxu0 0
  %800 = vmatpush1.bf16.xpose.msra.mxu0 0
  %801 = vmatprep.subr.bf16.mxu0 0
  %802 = vmatpush1.bf16.xpose.msra.mxu0 0
  %803 = vmatprep.subr.bf16.mxu0 0
  %804 = vmatpush1.bf16.xpose.msra.mxu0 0
  %805 = vmatprep.subr.bf16.mxu0 0
  %806 = vmatpush1.bf16.xpose.msra.mxu0 0
  %807 = vmatprep.subr.bf16.mxu0 0
  %808 = vmatpush1.bf16.xpose.msra.mxu0 0
  %809 = vmatprep.subr.bf16.mxu0 0
  %810 = vmatpush1.bf16.xpose.msra.mxu0 0
  %811 = vmatprep.subr.bf16.mxu0 0
  %812 = vmatpush1.bf16.xpose.msra.mxu0 0
  %813 = vmatprep.subr.bf16.mxu0 0
  %814 = vmatpush1.bf16.xpose.msra.mxu0 0
  %815 = vmatprep.subr.bf16.mxu0 0
  %816 = vmatpush1.bf16.xpose.msra.mxu0 0
  %817 = vmatprep.subr.bf16.mxu0 0
  %818 = vmatpush1.bf16.xpose.msra.mxu0 0
  %819 = vmatprep.subr.bf16.mxu0 0
  %820 = vmatpush1.bf16.xpose.msra.mxu0 0
  %821 = vmatprep.subr.bf16.mxu0 0
  %822 = vmatpush1.bf16.xpose.msra.mxu0 0
  %823 = vmatprep.subr.bf16.mxu0 0
  %824 = vmatpush1.bf16.xpose.msra.mxu0 0
  %825 = vmatprep.subr.bf16.mxu0 0
  %826 = vmatpush1.bf16.xpose.msra.mxu0 0
  %827 = vmatprep.mubr.bf16.mxu0 0
  %828 = vmatmul.mubr.bf16.gmra.mrb[0].mxu0 %v790
  %v829 = vpop.f32.mrb[0].mxu0
  %v830 = vadd.f32 0.0, %v829
  %v831 = vpop.f32.mrb[0].mxu0
  %v832 = vpop.f32.mrb[0].mxu0
  %v833 = vpop.f32.mrb[0].mxu0
  %834 = vdwg.mxu0
  %835 = vrot.lane.b32.xlu0 %v120, 104
  %v836 = vpop.permute.xlu0 %835
  %837 = vrot.lane.b32.xlu0 %v120, 72
  %v838 = vpop.permute.xlu0 %837
  %v840 = vsel %vm126, %v836, 0
  %v843 = vsel %vm126, %v838, 0
  %845 = vmatprep.subr.bf16.mxu0 0
  %846 = vmatpush1.bf16.xpose.msra.mxu0 %v843
  %847 = vmatprep.subr.bf16.mxu0 0
  %848 = vmatpush1.bf16.xpose.msra.mxu0 0
  %849 = vmatprep.subr.bf16.mxu0 0
  %850 = vmatpush1.bf16.xpose.msra.mxu0 0
  %851 = vmatprep.subr.bf16.mxu0 0
  %852 = vmatpush1.bf16.xpose.msra.mxu0 0
  %853 = vmatprep.subr.bf16.mxu0 0
  %854 = vmatpush1.bf16.xpose.msra.mxu0 0
  %855 = vmatprep.subr.bf16.mxu0 0
  %856 = vmatpush1.bf16.xpose.msra.mxu0 0
  %857 = vmatprep.subr.bf16.mxu0 0
  %858 = vmatpush1.bf16.xpose.msra.mxu0 0
  %859 = vmatprep.subr.bf16.mxu0 0
  %860 = vmatpush1.bf16.xpose.msra.mxu0 0
  %861 = vmatprep.subr.bf16.mxu0 0
  %862 = vmatpush1.bf16.xpose.msra.mxu0 0
  %863 = vmatprep.subr.bf16.mxu0 0
  %864 = vmatpush1.bf16.xpose.msra.mxu0 0
  %865 = vmatprep.subr.bf16.mxu0 0
  %866 = vmatpush1.bf16.xpose.msra.mxu0 0
  %867 = vmatprep.subr.bf16.mxu0 0
  %868 = vmatpush1.bf16.xpose.msra.mxu0 0
  %869 = vmatprep.subr.bf16.mxu0 0
  %870 = vmatpush1.bf16.xpose.msra.mxu0 0
  %871 = vmatprep.subr.bf16.mxu0 0
  %872 = vmatpush1.bf16.xpose.msra.mxu0 0
  %873 = vmatprep.subr.bf16.mxu0 0
  %874 = vmatpush1.bf16.xpose.msra.mxu0 0
  %875 = vmatprep.subr.bf16.mxu0 0
  %876 = vmatpush1.bf16.xpose.msra.mxu0 0
  %877 = vmatprep.mubr.bf16.mxu0 0
  %878 = vmatmul.mubr.bf16.gmra.mrb[0].mxu0 %v840
  %v879 = vpop.f32.mrb[0].mxu0
  %v880 = vadd.f32 0.0, %v879
  %v881 = vpop.f32.mrb[0].mxu0
  %v882 = vpop.f32.mrb[0].mxu0
  %v883 = vpop.f32.mrb[0].mxu0
  %884 = vdwg.mxu0
  %v885 = vsel %vm126, %v830, -inf
  %886 = vmax.xlane.f32.xlu0 %v885
  %v887 = vpop.xlane.xlu0 %886
  %v888 = vsel %vm126, %v880, -inf
  %889 = vmax.xlane.f32.xlu0 %v888
  %v890 = vpop.xlane.xlu0 %889
  %v891 = vsub.f32 %v830, %v887
  %v892 = vsub.f32 %v880, %v890
  %v893 = vmul.f32 %v891, 1.442695
  %v894 = vpow.pop %v893
  %v895 = vmul.f32 %v892, 1.442695
  %v896 = vpow.pop %v895
  %v897 = vsel %vm126, %v894, 0.0
  %898 = vadd.xlane.f32.xlu0 %v897
  %v899 = vpop.xlane.xlu0 %898
  %v900 = vsel %vm126, %v896, 0.0
  %901 = vadd.xlane.f32.xlu0 %v900
  %v902 = vpop.xlane.xlu0 %901
  %v903 = vrcp.pop %v899
  %v904 = vrcp.pop %v902
  %v905 = vmul.f32 %v894, %v903
  %v906 = vmul.f32 %v896, %v904
  %v907 = vpack.c.bf16 %v905, %v905
  %v908 = vpack.c.bf16 %v906, %v906
  %910 = vrot.lane.b32.xlu0 %v121, 96
  %v911 = vpop.permute.xlu0 %910
  %v913 = vsel %vm126, %v907, 0
  %v916 = vsel %vm251, %v911, 0
  %918 = vmatprep.subr.bf16.mxu0 0
  %919 = vmatpush1.bf16.msra.mxu0 %v916
  %920 = vmatprep.subr.bf16.mxu0 0
  %921 = vmatpush1.bf16.msra.mxu0 0
  %922 = vmatprep.subr.bf16.mxu0 0
  %923 = vmatpush1.bf16.msra.mxu0 0
  %924 = vmatprep.subr.bf16.mxu0 0
  %925 = vmatpush1.bf16.msra.mxu0 0
  %926 = vmatprep.subr.bf16.mxu0 0
  %927 = vmatpush1.bf16.msra.mxu0 0
  %928 = vmatprep.subr.bf16.mxu0 0
  %929 = vmatpush1.bf16.msra.mxu0 0
  %930 = vmatprep.subr.bf16.mxu0 0
  %931 = vmatpush1.bf16.msra.mxu0 0
  %932 = vmatprep.subr.bf16.mxu0 0
  %933 = vmatpush1.bf16.msra.mxu0 0
  %934 = vmatprep.subr.bf16.mxu0 0
  %935 = vmatpush1.bf16.msra.mxu0 0
  %936 = vmatprep.subr.bf16.mxu0 0
  %937 = vmatpush1.bf16.msra.mxu0 0
  %938 = vmatprep.subr.bf16.mxu0 0
  %939 = vmatpush1.bf16.msra.mxu0 0
  %940 = vmatprep.subr.bf16.mxu0 0
  %941 = vmatpush1.bf16.msra.mxu0 0
  %942 = vmatprep.subr.bf16.mxu0 0
  %943 = vmatpush1.bf16.msra.mxu0 0
  %944 = vmatprep.subr.bf16.mxu0 0
  %945 = vmatpush1.bf16.msra.mxu0 0
  %946 = vmatprep.subr.bf16.mxu0 0
  %947 = vmatpush1.bf16.msra.mxu0 0
  %948 = vmatprep.subr.bf16.mxu0 0
  %949 = vmatpush1.bf16.msra.mxu0 0
  %950 = vmatprep.mubr.bf16.mxu0 0
  %951 = vmatmul.mubr.bf16.gmra.mrb[0].mxu0 %v913
  %v952 = vpop.f32.mrb[0].mxu0
  %v953 = vadd.f32 0.0, %v952
  %v954 = vpop.f32.mrb[0].mxu0
  %v955 = vpop.f32.mrb[0].mxu0
  %v956 = vpop.f32.mrb[0].mxu0
  %957 = vdwg.mxu0
  %959 = vrot.lane.b32.xlu0 %v122, 96
  %v960 = vpop.permute.xlu0 %959
  %v962 = vsel %vm126, %v908, 0
  %v965 = vsel %vm251, %v960, 0
  %967 = vmatprep.subr.bf16.mxu0 0
  %968 = vmatpush1.bf16.msra.mxu0 %v965
  %969 = vmatprep.subr.bf16.mxu0 0
  %970 = vmatpush1.bf16.msra.mxu0 0
  %971 = vmatprep.subr.bf16.mxu0 0
  %972 = vmatpush1.bf16.msra.mxu0 0
  %973 = vmatprep.subr.bf16.mxu0 0
  %974 = vmatpush1.bf16.msra.mxu0 0
  %975 = vmatprep.subr.bf16.mxu0 0
  %976 = vmatpush1.bf16.msra.mxu0 0
  %977 = vmatprep.subr.bf16.mxu0 0
  %978 = vmatpush1.bf16.msra.mxu0 0
  %979 = vmatprep.subr.bf16.mxu0 0
  %980 = vmatpush1.bf16.msra.mxu0 0
  %981 = vmatprep.subr.bf16.mxu0 0
  %982 = vmatpush1.bf16.msra.mxu0 0
  %983 = vmatprep.subr.bf16.mxu0 0
  %984 = vmatpush1.bf16.msra.mxu0 0
  %985 = vmatprep.subr.bf16.mxu0 0
  %986 = vmatpush1.bf16.msra.mxu0 0
  %987 = vmatprep.subr.bf16.mxu0 0
  %988 = vmatpush1.bf16.msra.mxu0 0
  %989 = vmatprep.subr.bf16.mxu0 0
  %990 = vmatpush1.bf16.msra.mxu0 0
  %991 = vmatprep.subr.bf16.mxu0 0
  %992 = vmatpush1.bf16.msra.mxu0 0
  %993 = vmatprep.subr.bf16.mxu0 0
  %994 = vmatpush1.bf16.msra.mxu0 0
  %995 = vmatprep.subr.bf16.mxu0 0
  %996 = vmatpush1.bf16.msra.mxu0 0
  %997 = vmatprep.subr.bf16.mxu0 0
  %998 = vmatpush1.bf16.msra.mxu0 0
  %999 = vmatprep.mubr.bf16.mxu0 0
  %1000 = vmatmul.mubr.bf16.gmra.mrb[0].mxu0 %v962
  %v1001 = vpop.f32.mrb[0].mxu0
  %v1002 = vadd.f32 0.0, %v1001
  %v1003 = vpop.f32.mrb[0].mxu0
  %v1004 = vpop.f32.mrb[0].mxu0
  %v1005 = vpop.f32.mrb[0].mxu0
  %1006 = vdwg.mxu0
  %v1007 = vadd.f32 %v783, %v953
  %v1008 = vadd.f32 %v784, %v1002
  %v1009 = vlaneseq
  %v1010 = vshrl.u32 %v1009, 7
  %v1011 = vsub.s32 3, %v1010
  %v1012 = vrot.slane %v38, %v1011
  %v1013 = vadd.f32 %v1007, %v1012
  %v1014 = vadd.f32 %v1008, %v1012
  %v1015 = vadd.f32 %v24, %v1013
  %v1016 = vadd.f32 %v25, %v1014
  %v1017 = vsel %vm72, %v1015, 0.0
  %1018 = vadd.xlane.f32.xlu0 %v1017
  %v1019 = vpop.xlane.xlu0 %1018
  %v1020 = vsel %vm72, %v1016, 0.0
  %1021 = vadd.xlane.f32.xlu0 %v1020
  %v1022 = vpop.xlane.xlu0 %1021
  %v1023 = vrcp.pop 32.0
  %v1024 = vmul.f32 %v1019, %v1023
  %v1025 = vmul.f32 %v1022, %v1023
  %v1026 = vsub.f32 %v1015, %v1024
  %v1027 = vsub.f32 %v1016, %v1025
  %v1028 = vmul.f32 %v1026, %v1026
  %v1029 = vmul.f32 %v1027, %v1027
  %v1030 = vsel %vm72, %v1028, 0.0
  %1031 = vadd.xlane.f32.xlu0 %v1030
  %v1032 = vpop.xlane.xlu0 %1031
  %v1033 = vsel %vm72, %v1029, 0.0
  %1034 = vadd.xlane.f32.xlu0 %v1033
  %v1035 = vpop.xlane.xlu0 %1034
  %v1036 = vmul.f32 %v1032, %v1023
  %v1037 = vmul.f32 %v1035, %v1023
  %v1038 = vadd.f32 %v1036, 1e-05
  %v1039 = vadd.f32 %v1037, 1e-05
  %v1040 = vrsqrt.pop %v1038
  %v1041 = vrsqrt.pop %v1039
  %v1042 = vmul.f32 %v1026, %v1040
  %v1043 = vmul.f32 %v1027, %v1041
  %v1044 = vlaneseq
  %v1045 = vshrl.u32 %v1044, 7
  %v1046 = vsub.s32 7, %v1045
  %v1047 = vrot.slane %v38, %v1046
  %v1048 = vmul.f32 %v1042, %v1047
  %v1049 = vmul.f32 %v1043, %v1047
  %v1050 = vlaneseq
  %v1051 = vshrl.u32 %v1050, 7
  %v1052 = vsub.s32 0, %v1051
  %v1053 = vrot.slane %v42, %v1052
  %v1054 = vadd.f32 %v1048, %v1053
  %v1055 = vadd.f32 %v1049, %v1053
  %v1056 = vpack.c.bf16 %v1055, %v1054
  %v1057 = vlaneseq
  %v1058 = vshrl.u32 %v1057, 7
  %v1059 = vsub.s32 1, %v1058
  %v1060 = vrot.slane %v38, %v1059
  %1061 = vrot.lane.b32.xlu0 %v65, 64
  %v1062 = vpop.permute.xlu0 %1061
  %1063 = vrot.lane.b32.xlu0 %v67, 64
  %v1064 = vpop.permute.xlu0 %1063
  %v1068 = vsel %vm72, %v1056, 0
  %1070 = vmatprep.subr.bf16.mxu0 0
  %1071 = vmatpush1.bf16.msra.mxu0 %v1062
  %1072 = vmatprep.subr.bf16.mxu0 0
  %1073 = vmatpush1.bf16.msra.mxu0 %v1064
  %1074 = vmatprep.subr.bf16.mxu0 0
  %1075 = vmatpush1.bf16.msra.mxu0 0
  %1076 = vmatprep.subr.bf16.mxu0 0
  %1077 = vmatpush1.bf16.msra.mxu0 0
  %1078 = vmatprep.subr.bf16.mxu0 0
  %1079 = vmatpush1.bf16.msra.mxu0 0
  %1080 = vmatprep.subr.bf16.mxu0 0
  %1081 = vmatpush1.bf16.msra.mxu0 0
  %1082 = vmatprep.subr.bf16.mxu0 0
  %1083 = vmatpush1.bf16.msra.mxu0 0
  %1084 = vmatprep.subr.bf16.mxu0 0
  %1085 = vmatpush1.bf16.msra.mxu0 0
  %1086 = vmatprep.subr.bf16.mxu0 0
  %1087 = vmatpush1.bf16.msra.mxu0 0
  %1088 = vmatprep.subr.bf16.mxu0 0
  %1089 = vmatpush1.bf16.msra.mxu0 0
  %1090 = vmatprep.subr.bf16.mxu0 0
  %1091 = vmatpush1.bf16.msra.mxu0 0
  %1092 = vmatprep.subr.bf16.mxu0 0
  %1093 = vmatpush1.bf16.msra.mxu0 0
  %1094 = vmatprep.subr.bf16.mxu0 0
  %1095 = vmatpush1.bf16.msra.mxu0 0
  %1096 = vmatprep.subr.bf16.mxu0 0
  %1097 = vmatpush1.bf16.msra.mxu0 0
  %1098 = vmatprep.subr.bf16.mxu0 0
  %1099 = vmatpush1.bf16.msra.mxu0 0
  %1100 = vmatprep.subr.bf16.mxu0 0
  %1101 = vmatpush1.bf16.msra.mxu0 0
  %1102 = vmatprep.mubr.bf16.mxu0 0
  %1103 = vmatmul.mubr.bf16.gmra.mrb[0].mxu0 %v1068
  %v1104 = vpop.f32.mrb[0].mxu0
  %v1105 = vadd.f32 %v1060, %v1104
  %v1106 = vpop.f32.mrb[0].mxu0
  %v1107 = vpop.f32.mrb[0].mxu0
  %v1108 = vadd.f32 %v1060, %v1107
  %v1109 = vpop.f32.mrb[0].mxu0
  %1110 = vdwg.mxu0
  %v1111 = vpack.c.bf16 %v27, %v26
  %v1112 = vpack.c.bf16 %v29, %v28
  %v1113 = vlaneseq
  %v1114 = vshrl.u32 %v1113, 7
  %v1115 = vsub.s32 2, %v1114
  %v1116 = vrot.slane %v38, %v1115
  %v1117 = vlaneseq
  %v1118 = vshrl.u32 %v1117, 7
  %v1119 = vsub.s32 2, %v1118
  %v1120 = vrot.slane %v39, %v1119
  %v1125 = vunpack.c.l.b16 %v31
  %v1126 = vunpack.c.l.b16 %v33
  %v1127 = vunpack.c.l.b16 %v35
  %v1128 = vunpack.c.l.b16 %v37
  %v1129 = vpack.c.b16 %v1126, %v1125
  %v1130 = vpack.c.b16 %v1128, %v1127
  %1131 = vrot.lane.b32.xlu0 %v65, 32
  %v1132 = vpop.permute.xlu0 %1131
  %1133 = vrot.lane.b32.xlu0 %v1129, 32
  %v1134 = vpop.permute.xlu0 %1133
  %1135 = vrot.lane.b32.xlu0 %v67, 32
  %v1136 = vpop.permute.xlu0 %1135
  %1137 = vrot.lane.b32.xlu0 %v1130, 32
  %v1138 = vpop.permute.xlu0 %1137
  %vm1139 = vcmask 261120
  %v1140 = vsel %vm1139, %v1132, %v1134
  %v1141 = vsel %vm1139, %v1136, %v1138
  %v1147 = vsel %vm72, %v1111, 0
  %v1150 = vsel %vm72, %v1112, 0
  %1152 = vmatprep.subr.bf16.mxu0 %v1134
  %1153 = vmatpush1.bf16.msra.mxu0 %v1140
  %1154 = vmatprep.subr.bf16.mxu0 %v1138
  %1155 = vmatpush1.bf16.msra.mxu0 %v1141
  %1156 = vmatprep.subr.bf16.mxu0 0
  %1157 = vmatpush1.bf16.msra.mxu0 0
  %1158 = vmatprep.subr.bf16.mxu0 0
  %1159 = vmatpush1.bf16.msra.mxu0 0
  %1160 = vmatprep.subr.bf16.mxu0 0
  %1161 = vmatpush1.bf16.msra.mxu0 0
  %1162 = vmatprep.subr.bf16.mxu0 0
  %1163 = vmatpush1.bf16.msra.mxu0 0
  %1164 = vmatprep.subr.bf16.mxu0 0
  %1165 = vmatpush1.bf16.msra.mxu0 0
  %1166 = vmatprep.subr.bf16.mxu0 0
  %1167 = vmatpush1.bf16.msra.mxu0 0
  %1168 = vmatprep.subr.bf16.mxu0 0
  %1169 = vmatpush1.bf16.msra.mxu0 0
  %1170 = vmatprep.subr.bf16.mxu0 0
  %1171 = vmatpush1.bf16.msra.mxu0 0
  %1172 = vmatprep.subr.bf16.mxu0 0
  %1173 = vmatpush1.bf16.msra.mxu0 0
  %1174 = vmatprep.subr.bf16.mxu0 0
  %1175 = vmatpush1.bf16.msra.mxu0 0
  %1176 = vmatprep.subr.bf16.mxu0 0
  %1177 = vmatpush1.bf16.msra.mxu0 0
  %1178 = vmatprep.subr.bf16.mxu0 0
  %1179 = vmatpush1.bf16.msra.mxu0 0
  %1180 = vmatprep.subr.bf16.mxu0 0
  %1181 = vmatpush1.bf16.msra.mxu0 0
  %1182 = vmatprep.subr.bf16.mxu0 0
  %1183 = vmatpush1.bf16.msra.mxu0 0
  %1184 = vmatprep.mubr.bf16.mxu0 0
  %1185 = vmatmul.mubr.bf16.gmra.mrb[0].mxu0 %v1147
  %v1186 = vpop.f32.mrb[0].mxu0
  %v1187 = vadd.f32 %v1116, %v1186
  %v1188 = vpop.f32.mrb[0].mxu0
  %v1189 = vadd.f32 %v1120, %v1188
  %v1190 = vpop.f32.mrb[0].mxu0
  %v1191 = vadd.f32 %v1116, %v1190
  %v1192 = vpop.f32.mrb[0].mxu0
  %v1193 = vadd.f32 %v1120, %v1192
  %1194 = vmatprep.mubr.bf16.mxu0 0
  %1195 = vmatmul.mubr.bf16.gmra.mrb[0].mxu0 %v1150
  %v1196 = vpop.f32.mrb[0].mxu0
  %v1197 = vadd.f32 %v1116, %v1196
  %v1198 = vpop.f32.mrb[0].mxu0
  %v1199 = vadd.f32 %v1120, %v1198
  %v1200 = vpop.f32.mrb[0].mxu0
  %v1201 = vadd.f32 %v1116, %v1200
  %v1202 = vpop.f32.mrb[0].mxu0
  %v1203 = vadd.f32 %v1120, %v1202
  %1204 = vdwg.mxu0
  %v1205 = vpack.c.bf16 %v1105, %v1105
  %v1206 = vpack.c.bf16 %v1108, %v1108
  %v1207 = vpack.c.bf16 %v1191, %v1187
  %v1208 = vpack.c.bf16 %v1201, %v1197
  %v1209 = vpack.c.bf16 %v1193, %v1189
  %v1210 = vpack.c.bf16 %v1203, %v1199
  %v1212 = vsel %vm126, %v1205, 0
  %v1215 = vsel %vm126, %v1207, 0
  %1217 = vmatprep.subr.bf16.mxu0 0
  %1218 = vmatpush1.bf16.xpose.msra.mxu0 %v1215
  %1219 = vmatprep.subr.bf16.mxu0 0
  %1220 = vmatpush1.bf16.xpose.msra.mxu0 0
  %1221 = vmatprep.subr.bf16.mxu0 0
  %1222 = vmatpush1.bf16.xpose.msra.mxu0 0
  %1223 = vmatprep.subr.bf16.mxu0 0
  %1224 = vmatpush1.bf16.xpose.msra.mxu0 0
  %1225 = vmatprep.subr.bf16.mxu0 0
  %1226 = vmatpush1.bf16.xpose.msra.mxu0 0
  %1227 = vmatprep.subr.bf16.mxu0 0
  %1228 = vmatpush1.bf16.xpose.msra.mxu0 0
  %1229 = vmatprep.subr.bf16.mxu0 0
  %1230 = vmatpush1.bf16.xpose.msra.mxu0 0
  %1231 = vmatprep.subr.bf16.mxu0 0
  %1232 = vmatpush1.bf16.xpose.msra.mxu0 0
  %1233 = vmatprep.subr.bf16.mxu0 0
  %1234 = vmatpush1.bf16.xpose.msra.mxu0 0
  %1235 = vmatprep.subr.bf16.mxu0 0
  %1236 = vmatpush1.bf16.xpose.msra.mxu0 0
  %1237 = vmatprep.subr.bf16.mxu0 0
  %1238 = vmatpush1.bf16.xpose.msra.mxu0 0
  %1239 = vmatprep.subr.bf16.mxu0 0
  %1240 = vmatpush1.bf16.xpose.msra.mxu0 0
  %1241 = vmatprep.subr.bf16.mxu0 0
  %1242 = vmatpush1.bf16.xpose.msra.mxu0 0
  %1243 = vmatprep.subr.bf16.mxu0 0
  %1244 = vmatpush1.bf16.xpose.msra.mxu0 0
  %1245 = vmatprep.subr.bf16.mxu0 0
  %1246 = vmatpush1.bf16.xpose.msra.mxu0 0
  %1247 = vmatprep.subr.bf16.mxu0 0
  %1248 = vmatpush1.bf16.xpose.msra.mxu0 0
  %1249 = vmatprep.mubr.bf16.mxu0 0
  %1250 = vmatmul.mubr.bf16.gmra.mrb[0].mxu0 %v1212
  %v1251 = vpop.f32.mrb[0].mxu0
  %v1252 = vadd.f32 0.0, %v1251
  %v1253 = vpop.f32.mrb[0].mxu0
  %v1254 = vpop.f32.mrb[0].mxu0
  %v1255 = vpop.f32.mrb[0].mxu0
  %1256 = vdwg.mxu0
  %v1258 = vsel %vm126, %v1206, 0
  %v1261 = vsel %vm126, %v1208, 0
  %1263 = vmatprep.subr.bf16.mxu0 0
  %1264 = vmatpush1.bf16.xpose.msra.mxu0 %v1261
  %1265 = vmatprep.subr.bf16.mxu0 0
  %1266 = vmatpush1.bf16.xpose.msra.mxu0 0
  %1267 = vmatprep.subr.bf16.mxu0 0
  %1268 = vmatpush1.bf16.xpose.msra.mxu0 0
  %1269 = vmatprep.subr.bf16.mxu0 0
  %1270 = vmatpush1.bf16.xpose.msra.mxu0 0
  %1271 = vmatprep.subr.bf16.mxu0 0
  %1272 = vmatpush1.bf16.xpose.msra.mxu0 0
  %1273 = vmatprep.subr.bf16.mxu0 0
  %1274 = vmatpush1.bf16.xpose.msra.mxu0 0
  %1275 = vmatprep.subr.bf16.mxu0 0
  %1276 = vmatpush1.bf16.xpose.msra.mxu0 0
  %1277 = vmatprep.subr.bf16.mxu0 0
  %1278 = vmatpush1.bf16.xpose.msra.mxu0 0
  %1279 = vmatprep.subr.bf16.mxu0 0
  %1280 = vmatpush1.bf16.xpose.msra.mxu0 0
  %1281 = vmatprep.subr.bf16.mxu0 0
  %1282 = vmatpush1.bf16.xpose.msra.mxu0 0
  %1283 = vmatprep.subr.bf16.mxu0 0
  %1284 = vmatpush1.bf16.xpose.msra.mxu0 0
  %1285 = vmatprep.subr.bf16.mxu0 0
  %1286 = vmatpush1.bf16.xpose.msra.mxu0 0
  %1287 = vmatprep.subr.bf16.mxu0 0
  %1288 = vmatpush1.bf16.xpose.msra.mxu0 0
  %1289 = vmatprep.subr.bf16.mxu0 0
  %1290 = vmatpush1.bf16.xpose.msra.mxu0 0
  %1291 = vmatprep.subr.bf16.mxu0 0
  %1292 = vmatpush1.bf16.xpose.msra.mxu0 0
  %1293 = vmatprep.subr.bf16.mxu0 0
  %1294 = vmatpush1.bf16.xpose.msra.mxu0 0
  %1295 = vmatprep.mubr.bf16.mxu0 0
  %1296 = vmatmul.mubr.bf16.gmra.mrb[0].mxu0 %v1258
  %v1297 = vpop.f32.mrb[0].mxu0
  %v1298 = vadd.f32 0.0, %v1297
  %v1299 = vpop.f32.mrb[0].mxu0
  %v1300 = vpop.f32.mrb[0].mxu0
  %v1301 = vpop.f32.mrb[0].mxu0
  %1302 = vdwg.mxu0
  %vm1303 = vcmask 130048
  %v1304 = vsel %vm1303, %v1252, -inf
  %1305 = vmax.xlane.f32.xlu0 %v1304
  %v1306 = vpop.xlane.xlu0 %1305
  %v1307 = vsel %vm1303, %v1298, -inf
  %1308 = vmax.xlane.f32.xlu0 %v1307
  %v1309 = vpop.xlane.xlu0 %1308
  %v1310 = vsub.f32 %v1252, %v1306
  %v1311 = vsub.f32 %v1298, %v1309
  %v1312 = vmul.f32 %v1310, 1.442695
  %v1313 = vpow.pop %v1312
  %v1314 = vmul.f32 %v1311, 1.442695
  %v1315 = vpow.pop %v1314
  %v1316 = vsel %vm1303, %v1313, 0.0
  %1317 = vadd.xlane.f32.xlu0 %v1316
  %v1318 = vpop.xlane.xlu0 %1317
  %v1319 = vsel %vm1303, %v1315, 0.0
  %1320 = vadd.xlane.f32.xlu0 %v1319
  %v1321 = vpop.xlane.xlu0 %1320
  %v1322 = vrcp.pop %v1318
  %v1323 = vrcp.pop %v1321
  %v1324 = vmul.f32 %v1313, %v1322
  %v1325 = vmul.f32 %v1315, %v1323
  %v1326 = vpack.c.bf16 %v1324, %v1324
  %v1327 = vpack.c.bf16 %v1325, %v1325
  %1329 = vrot.lane.b32.xlu0 %v1207, 96
  %v1330 = vpop.permute.xlu0 %1329
  %v1333 = vsel %vm1303, %v1326, 0
  %1335 = vmatprep.subr.bf16.mxu0 0
  %1336 = vmatpush1.bf16.msra.mxu0 %v1330
  %1337 = vmatprep.subr.bf16.mxu0 0
  %1338 = vmatpush1.bf16.msra.mxu0 0
  %1339 = vmatprep.subr.bf16.mxu0 0
  %1340 = vmatpush1.bf16.msra.mxu0 0
  %1341 = vmatprep.subr.bf16.mxu0 0
  %1342 = vmatpush1.bf16.msra.mxu0 0
  %1343 = vmatprep.subr.bf16.mxu0 0
  %1344 = vmatpush1.bf16.msra.mxu0 0
  %1345 = vmatprep.subr.bf16.mxu0 0
  %1346 = vmatpush1.bf16.msra.mxu0 0
  %1347 = vmatprep.subr.bf16.mxu0 0
  %1348 = vmatpush1.bf16.msra.mxu0 0
  %1349 = vmatprep.subr.bf16.mxu0 0
  %1350 = vmatpush1.bf16.msra.mxu0 0
  %1351 = vmatprep.subr.bf16.mxu0 0
  %1352 = vmatpush1.bf16.msra.mxu0 0
  %1353 = vmatprep.subr.bf16.mxu0 0
  %1354 = vmatpush1.bf16.msra.mxu0 0
  %1355 = vmatprep.subr.bf16.mxu0 0
  %1356 = vmatpush1.bf16.msra.mxu0 0
  %1357 = vmatprep.subr.bf16.mxu0 0
  %1358 = vmatpush1.bf16.msra.mxu0 0
  %1359 = vmatprep.subr.bf16.mxu0 0
  %1360 = vmatpush1.bf16.msra.mxu0 0
  %1361 = vmatprep.subr.bf16.mxu0 0
  %1362 = vmatpush1.bf16.msra.mxu0 0
  %1363 = vmatprep.subr.bf16.mxu0 0
  %1364 = vmatpush1.bf16.msra.mxu0 0
  %1365 = vmatprep.subr.bf16.mxu0 0
  %1366 = vmatpush1.bf16.msra.mxu0 0
  %1367 = vmatprep.mubr.bf16.mxu0 0
  %1368 = vmatmul.mubr.bf16.gmra.mrb[0].mxu0 %v1333
  %v1369 = vpop.f32.mrb[0].mxu0
  %v1370 = vadd.f32 0.0, %v1369
  %v1371 = vpop.f32.mrb[0].mxu0
  %v1372 = vpop.f32.mrb[0].mxu0
  %v1373 = vpop.f32.mrb[0].mxu0
  %1374 = vdwg.mxu0
  %1376 = vrot.lane.b32.xlu0 %v1208, 96
  %v1377 = vpop.permute.xlu0 %1376
  %v1380 = vsel %vm1303, %v1327, 0
  %1382 = vmatprep.subr.bf16.mxu0 0
  %1383 = vmatpush1.bf16.msra.mxu0 %v1377
  %1384 = vmatprep.subr.bf16.mxu0 0
  %1385 = vmatpush1.bf16.msra.mxu0 0
  %1386 = vmatprep.subr.bf16.mxu0 0
  %1387 = vmatpush1.bf16.msra.mxu0 0
  %1388 = vmatprep.subr.bf16.mxu0 0
  %1389 = vmatpush1.bf16.msra.mxu0 0
  %1390 = vmatprep.subr.bf16.mxu0 0
  %1391 = vmatpush1.bf16.msra.mxu0 0
  %1392 = vmatprep.subr.bf16.mxu0 0
  %1393 = vmatpush1.bf16.msra.mxu0 0
  %1394 = vmatprep.subr.bf16.mxu0 0
  %1395 = vmatpush1.bf16.msra.mxu0 0
  %1396 = vmatprep.subr.bf16.mxu0 0
  %1397 = vmatpush1.bf16.msra.mxu0 0
  %1398 = vmatprep.subr.bf16.mxu0 0
  %1399 = vmatpush1.bf16.msra.mxu0 0
  %1400 = vmatprep.subr.bf16.mxu0 0
  %1401 = vmatpush1.bf16.msra.mxu0 0
  %1402 = vmatprep.subr.bf16.mxu0 0
  %1403 = vmatpush1.bf16.msra.mxu0 0
  %1404 = vmatprep.subr.bf16.mxu0 0
  %1405 = vmatpush1.bf16.msra.mxu0 0
  %1406 = vmatprep.subr.bf16.mxu0 0
  %1407 = vmatpush1.bf16.msra.mxu0 0
  %1408 = vmatprep.subr.bf16.mxu0 0
  %1409 = vmatpush1.bf16.msra.mxu0 0
  %1410 = vmatprep.subr.bf16.mxu0 0
  %1411 = vmatpush1.bf16.msra.mxu0 0
  %1412 = vmatprep.subr.bf16.mxu0 0
  %1413 = vmatpush1.bf16.msra.mxu0 0
  %1414 = vmatprep.mubr.bf16.mxu0 0
  %1415 = vmatmul.mubr.bf16.gmra.mrb[0].mxu0 %v1380
  %v1416 = vpop.f32.mrb[0].mxu0
  %v1417 = vadd.f32 0.0, %v1416
  %v1418 = vpop.f32.mrb[0].mxu0
  %v1419 = vpop.f32.mrb[0].mxu0
  %v1420 = vpop.f32.mrb[0].mxu0
  %1421 = vdwg.mxu0
  %v1422 = vadd.f32 %v1370, 0.0
  %v1423 = vadd.f32 %v1417, 0.0
  %1425 = vrot.lane.b32.xlu0 %v1205, 120
  %v1426 = vpop.permute.xlu0 %1425
  %1427 = vrot.lane.b32.xlu0 %v1207, 120
  %v1428 = vpop.permute.xlu0 %1427
  %v1430 = vsel %vm126, %v1426, 0
  %v1433 = vsel %vm126, %v1428, 0
  %1435 = vmatprep.subr.bf16.mxu0 0
  %1436 = vmatpush1.bf16.xpose.msra.mxu0 %v1433
  %1437 = vmatprep.subr.bf16.mxu0 0
  %1438 = vmatpush1.bf16.xpose.msra.mxu0 0
  %1439 = vmatprep.subr.bf16.mxu0 0
  %1440 = vmatpush1.bf16.xpose.msra.mxu0 0
  %1441 = vmatprep.subr.bf16.mxu0 0
  %1442 = vmatpush1.bf16.xpose.msra.mxu0 0
  %1443 = vmatprep.subr.bf16.mxu0 0
  %1444 = vmatpush1.bf16.xpose.msra.mxu0 0
  %1445 = vmatprep.subr.bf16.mxu0 0
  %1446 = vmatpush1.bf16.xpose.msra.mxu0 0
  %1447 = vmatprep.subr.bf16.mxu0 0
  %1448 = vmatpush1.bf16.xpose.msra.mxu0 0
  %1449 = vmatprep.subr.bf16.mxu0 0
  %1450 = vmatpush1.bf16.xpose.msra.mxu0 0
  %1451 = vmatprep.subr.bf16.mxu0 0
  %1452 = vmatpush1.bf16.xpose.msra.mxu0 0
  %1453 = vmatprep.subr.bf16.mxu0 0
  %1454 = vmatpush1.bf16.xpose.msra.mxu0 0
  %1455 = vmatprep.subr.bf16.mxu0 0
  %1456 = vmatpush1.bf16.xpose.msra.mxu0 0
  %1457 = vmatprep.subr.bf16.mxu0 0
  %1458 = vmatpush1.bf16.xpose.msra.mxu0 0
  %1459 = vmatprep.subr.bf16.mxu0 0
  %1460 = vmatpush1.bf16.xpose.msra.mxu0 0
  %1461 = vmatprep.subr.bf16.mxu0 0
  %1462 = vmatpush1.bf16.xpose.msra.mxu0 0
  %1463 = vmatprep.subr.bf16.mxu0 0
  %1464 = vmatpush1.bf16.xpose.msra.mxu0 0
  %1465 = vmatprep.subr.bf16.mxu0 0
  %1466 = vmatpush1.bf16.xpose.msra.mxu0 0
  %1467 = vmatprep.mubr.bf16.mxu0 0
  %1468 = vmatmul.mubr.bf16.gmra.mrb[0].mxu0 %v1430
  %v1469 = vpop.f32.mrb[0].mxu0
  %v1470 = vadd.f32 0.0, %v1469
  %v1471 = vpop.f32.mrb[0].mxu0
  %v1472 = vpop.f32.mrb[0].mxu0
  %v1473 = vpop.f32.mrb[0].mxu0
  %1474 = vdwg.mxu0
  %1476 = vrot.lane.b32.xlu0 %v1206, 120
  %v1477 = vpop.permute.xlu0 %1476
  %1478 = vrot.lane.b32.xlu0 %v1208, 120
  %v1479 = vpop.permute.xlu0 %1478
  %v1481 = vsel %vm126, %v1477, 0
  %v1484 = vsel %vm126, %v1479, 0
  %1486 = vmatprep.subr.bf16.mxu0 0
  %1487 = vmatpush1.bf16.xpose.msra.mxu0 %v1484
  %1488 = vmatprep.subr.bf16.mxu0 0
  %1489 = vmatpush1.bf16.xpose.msra.mxu0 0
  %1490 = vmatprep.subr.bf16.mxu0 0
  %1491 = vmatpush1.bf16.xpose.msra.mxu0 0
  %1492 = vmatprep.subr.bf16.mxu0 0
  %1493 = vmatpush1.bf16.xpose.msra.mxu0 0
  %1494 = vmatprep.subr.bf16.mxu0 0
  %1495 = vmatpush1.bf16.xpose.msra.mxu0 0
  %1496 = vmatprep.subr.bf16.mxu0 0
  %1497 = vmatpush1.bf16.xpose.msra.mxu0 0
  %1498 = vmatprep.subr.bf16.mxu0 0
  %1499 = vmatpush1.bf16.xpose.msra.mxu0 0
  %1500 = vmatprep.subr.bf16.mxu0 0
  %1501 = vmatpush1.bf16.xpose.msra.mxu0 0
  %1502 = vmatprep.subr.bf16.mxu0 0
  %1503 = vmatpush1.bf16.xpose.msra.mxu0 0
  %1504 = vmatprep.subr.bf16.mxu0 0
  %1505 = vmatpush1.bf16.xpose.msra.mxu0 0
  %1506 = vmatprep.subr.bf16.mxu0 0
  %1507 = vmatpush1.bf16.xpose.msra.mxu0 0
  %1508 = vmatprep.subr.bf16.mxu0 0
  %1509 = vmatpush1.bf16.xpose.msra.mxu0 0
  %1510 = vmatprep.subr.bf16.mxu0 0
  %1511 = vmatpush1.bf16.xpose.msra.mxu0 0
  %1512 = vmatprep.subr.bf16.mxu0 0
  %1513 = vmatpush1.bf16.xpose.msra.mxu0 0
  %1514 = vmatprep.subr.bf16.mxu0 0
  %1515 = vmatpush1.bf16.xpose.msra.mxu0 0
  %1516 = vmatprep.subr.bf16.mxu0 0
  %1517 = vmatpush1.bf16.xpose.msra.mxu0 0
  %1518 = vmatprep.mubr.bf16.mxu0 0
  %1519 = vmatmul.mubr.bf16.gmra.mrb[0].mxu0 %v1481
  %v1520 = vpop.f32.mrb[0].mxu0
  %v1521 = vadd.f32 0.0, %v1520
  %v1522 = vpop.f32.mrb[0].mxu0
  %v1523 = vpop.f32.mrb[0].mxu0
  %v1524 = vpop.f32.mrb[0].mxu0
  %1525 = vdwg.mxu0
  %v1526 = vsel %vm1303, %v1470, -inf
  %1527 = vmax.xlane.f32.xlu0 %v1526
  %v1528 = vpop.xlane.xlu0 %1527
  %v1529 = vsel %vm1303, %v1521, -inf
  %1530 = vmax.xlane.f32.xlu0 %v1529
  %v1531 = vpop.xlane.xlu0 %1530
  %v1532 = vsub.f32 %v1470, %v1528
  %v1533 = vsub.f32 %v1521, %v1531
  %v1534 = vmul.f32 %v1532, 1.442695
  %v1535 = vpow.pop %v1534
  %v1536 = vmul.f32 %v1533, 1.442695
  %v1537 = vpow.pop %v1536
  %v1538 = vsel %vm1303, %v1535, 0.0
  %1539 = vadd.xlane.f32.xlu0 %v1538
  %v1540 = vpop.xlane.xlu0 %1539
  %v1541 = vsel %vm1303, %v1537, 0.0
  %1542 = vadd.xlane.f32.xlu0 %v1541
  %v1543 = vpop.xlane.xlu0 %1542
  %v1544 = vrcp.pop %v1540
  %v1545 = vrcp.pop %v1543
  %v1546 = vmul.f32 %v1535, %v1544
  %v1547 = vmul.f32 %v1537, %v1545
  %v1548 = vpack.c.bf16 %v1546, %v1546
  %v1549 = vpack.c.bf16 %v1547, %v1547
  %1550 = vrot.lane.b32.xlu0 %v1207, 64
  %v1551 = vpop.permute.xlu0 %1550
  %v1554 = vsel %vm1303, %v1548, 0
  %1556 = vmatprep.subr.bf16.mxu0 0
  %1557 = vmatpush1.bf16.msra.mxu0 %v1551
  %1558 = vmatprep.subr.bf16.mxu0 0
  %1559 = vmatpush1.bf16.msra.mxu0 0
  %1560 = vmatprep.subr.bf16.mxu0 0
  %1561 = vmatpush1.bf16.msra.mxu0 0
  %1562 = vmatprep.subr.bf16.mxu0 0
  %1563 = vmatpush1.bf16.msra.mxu0 0
  %1564 = vmatprep.subr.bf16.mxu0 0
  %1565 = vmatpush1.bf16.msra.mxu0 0
  %1566 = vmatprep.subr.bf16.mxu0 0
  %1567 = vmatpush1.bf16.msra.mxu0 0
  %1568 = vmatprep.subr.bf16.mxu0 0
  %1569 = vmatpush1.bf16.msra.mxu0 0
  %1570 = vmatprep.subr.bf16.mxu0 0
  %1571 = vmatpush1.bf16.msra.mxu0 0
  %1572 = vmatprep.subr.bf16.mxu0 0
  %1573 = vmatpush1.bf16.msra.mxu0 0
  %1574 = vmatprep.subr.bf16.mxu0 0
  %1575 = vmatpush1.bf16.msra.mxu0 0
  %1576 = vmatprep.subr.bf16.mxu0 0
  %1577 = vmatpush1.bf16.msra.mxu0 0
  %1578 = vmatprep.subr.bf16.mxu0 0
  %1579 = vmatpush1.bf16.msra.mxu0 0
  %1580 = vmatprep.subr.bf16.mxu0 0
  %1581 = vmatpush1.bf16.msra.mxu0 0
  %1582 = vmatprep.subr.bf16.mxu0 0
  %1583 = vmatpush1.bf16.msra.mxu0 0
  %1584 = vmatprep.subr.bf16.mxu0 0
  %1585 = vmatpush1.bf16.msra.mxu0 0
  %1586 = vmatprep.subr.bf16.mxu0 0
  %1587 = vmatpush1.bf16.msra.mxu0 0
  %1588 = vmatprep.mubr.bf16.mxu0 0
  %1589 = vmatmul.mubr.bf16.gmra.mrb[0].mxu0 %v1554
  %v1590 = vpop.f32.mrb[0].mxu0
  %v1591 = vadd.f32 0.0, %v1590
  %v1592 = vpop.f32.mrb[0].mxu0
  %v1593 = vpop.f32.mrb[0].mxu0
  %v1594 = vpop.f32.mrb[0].mxu0
  %1595 = vdwg.mxu0
  %1596 = vrot.lane.b32.xlu0 %v1208, 64
  %v1597 = vpop.permute.xlu0 %1596
  %v1600 = vsel %vm1303, %v1549, 0
  %1602 = vmatprep.subr.bf16.mxu0 0
  %1603 = vmatpush1.bf16.msra.mxu0 %v1597
  %1604 = vmatprep.subr.bf16.mxu0 0
  %1605 = vmatpush1.bf16.msra.mxu0 0
  %1606 = vmatprep.subr.bf16.mxu0 0
  %1607 = vmatpush1.bf16.msra.mxu0 0
  %1608 = vmatprep.subr.bf16.mxu0 0
  %1609 = vmatpush1.bf16.msra.mxu0 0
  %1610 = vmatprep.subr.bf16.mxu0 0
  %1611 = vmatpush1.bf16.msra.mxu0 0
  %1612 = vmatprep.subr.bf16.mxu0 0
  %1613 = vmatpush1.bf16.msra.mxu0 0
  %1614 = vmatprep.subr.bf16.mxu0 0
  %1615 = vmatpush1.bf16.msra.mxu0 0
  %1616 = vmatprep.subr.bf16.mxu0 0
  %1617 = vmatpush1.bf16.msra.mxu0 0
  %1618 = vmatprep.subr.bf16.mxu0 0
  %1619 = vmatpush1.bf16.msra.mxu0 0
  %1620 = vmatprep.subr.bf16.mxu0 0
  %1621 = vmatpush1.bf16.msra.mxu0 0
  %1622 = vmatprep.subr.bf16.mxu0 0
  %1623 = vmatpush1.bf16.msra.mxu0 0
  %1624 = vmatprep.subr.bf16.mxu0 0
  %1625 = vmatpush1.bf16.msra.mxu0 0
  %1626 = vmatprep.subr.bf16.mxu0 0
  %1627 = vmatpush1.bf16.msra.mxu0 0
  %1628 = vmatprep.subr.bf16.mxu0 0
  %1629 = vmatpush1.bf16.msra.mxu0 0
  %1630 = vmatprep.subr.bf16.mxu0 0
  %1631 = vmatpush1.bf16.msra.mxu0 0
  %1632 = vmatprep.subr.bf16.mxu0 0
  %1633 = vmatpush1.bf16.msra.mxu0 0
  %1634 = vmatprep.mubr.bf16.mxu0 0
  %1635 = vmatmul.mubr.bf16.gmra.mrb[0].mxu0 %v1600
  %v1636 = vpop.f32.mrb[0].mxu0
  %v1637 = vadd.f32 0.0, %v1636
  %v1638 = vpop.f32.mrb[0].mxu0
  %v1639 = vpop.f32.mrb[0].mxu0
  %v1640 = vpop.f32.mrb[0].mxu0
  %1641 = vdwg.mxu0
  %v1642 = vadd.f32 %v1422, %v1591
  %v1643 = vadd.f32 %v1423, %v1637
  %1644 = vrot.lane.b32.xlu0 %v1205, 112
  %v1645 = vpop.permute.xlu0 %1644
  %1646 = vrot.lane.b32.xlu0 %v1207, 112
  %v1647 = vpop.permute.xlu0 %1646
  %v1649 = vsel %vm126, %v1645, 0
  %v1652 = vsel %vm126, %v1647, 0
  %1654 = vmatprep.subr.bf16.mxu0 0
  %1655 = vmatpush1.bf16.xpose.msra.mxu0 %v1652
  %1656 = vmatprep.subr.bf16.mxu0 0
  %1657 = vmatpush1.bf16.xpose.msra.mxu0 0
  %1658 = vmatprep.subr.bf16.mxu0 0
  %1659 = vmatpush1.bf16.xpose.msra.mxu0 0
  %1660 = vmatprep.subr.bf16.mxu0 0
  %1661 = vmatpush1.bf16.xpose.msra.mxu0 0
  %1662 = vmatprep.subr.bf16.mxu0 0
  %1663 = vmatpush1.bf16.xpose.msra.mxu0 0
  %1664 = vmatprep.subr.bf16.mxu0 0
  %1665 = vmatpush1.bf16.xpose.msra.mxu0 0
  %1666 = vmatprep.subr.bf16.mxu0 0
  %1667 = vmatpush1.bf16.xpose.msra.mxu0 0
  %1668 = vmatprep.subr.bf16.mxu0 0
  %1669 = vmatpush1.bf16.xpose.msra.mxu0 0
  %1670 = vmatprep.subr.bf16.mxu0 0
  %1671 = vmatpush1.bf16.xpose.msra.mxu0 0
  %1672 = vmatprep.subr.bf16.mxu0 0
  %1673 = vmatpush1.bf16.xpose.msra.mxu0 0
  %1674 = vmatprep.subr.bf16.mxu0 0
  %1675 = vmatpush1.bf16.xpose.msra.mxu0 0
  %1676 = vmatprep.subr.bf16.mxu0 0
  %1677 = vmatpush1.bf16.xpose.msra.mxu0 0
  %1678 = vmatprep.subr.bf16.mxu0 0
  %1679 = vmatpush1.bf16.xpose.msra.mxu0 0
  %1680 = vmatprep.subr.bf16.mxu0 0
  %1681 = vmatpush1.bf16.xpose.msra.mxu0 0
  %1682 = vmatprep.subr.bf16.mxu0 0
  %1683 = vmatpush1.bf16.xpose.msra.mxu0 0
  %1684 = vmatprep.subr.bf16.mxu0 0
  %1685 = vmatpush1.bf16.xpose.msra.mxu0 0
  %1686 = vmatprep.mubr.bf16.mxu0 0
  %1687 = vmatmul.mubr.bf16.gmra.mrb[0].mxu0 %v1649
  %v1688 = vpop.f32.mrb[0].mxu0
  %v1689 = vadd.f32 0.0, %v1688
  %v1690 = vpop.f32.mrb[0].mxu0
  %v1691 = vpop.f32.mrb[0].mxu0
  %v1692 = vpop.f32.mrb[0].mxu0
  %1693 = vdwg.mxu0
  %1694 = vrot.lane.b32.xlu0 %v1206, 112
  %v1695 = vpop.permute.xlu0 %1694
  %1696 = vrot.lane.b32.xlu0 %v1208, 112
  %v1697 = vpop.permute.xlu0 %1696
  %v1699 = vsel %vm126, %v1695, 0
  %v1702 = vsel %vm126, %v1697, 0
  %1704 = vmatprep.subr.bf16.mxu0 0
  %1705 = vmatpush1.bf16.xpose.msra.mxu0 %v1702
  %1706 = vmatprep.subr.bf16.mxu0 0
  %1707 = vmatpush1.bf16.xpose.msra.mxu0 0
  %1708 = vmatprep.subr.bf16.mxu0 0
  %1709 = vmatpush1.bf16.xpose.msra.mxu0 0
  %1710 = vmatprep.subr.bf16.mxu0 0
  %1711 = vmatpush1.bf16.xpose.msra.mxu0 0
  %1712 = vmatprep.subr.bf16.mxu0 0
  %1713 = vmatpush1.bf16.xpose.msra.mxu0 0
  %1714 = vmatprep.subr.bf16.mxu0 0
  %1715 = vmatpush1.bf16.xpose.msra.mxu0 0
  %1716 = vmatprep.subr.bf16.mxu0 0
  %1717 = vmatpush1.bf16.xpose.msra.mxu0 0
  %1718 = vmatprep.subr.bf16.mxu0 0
  %1719 = vmatpush1.bf16.xpose.msra.mxu0 0
  %1720 = vmatprep.subr.bf16.mxu0 0
  %1721 = vmatpush1.bf16.xpose.msra.mxu0 0
  %1722 = vmatprep.subr.bf16.mxu0 0
  %1723 = vmatpush1.bf16.xpose.msra.mxu0 0
  %1724 = vmatprep.subr.bf16.mxu0 0
  %1725 = vmatpush1.bf16.xpose.msra.mxu0 0
  %1726 = vmatprep.subr.bf16.mxu0 0
  %1727 = vmatpush1.bf16.xpose.msra.mxu0 0
  %1728 = vmatprep.subr.bf16.mxu0 0
  %1729 = vmatpush1.bf16.xpose.msra.mxu0 0
  %1730 = vmatprep.subr.bf16.mxu0 0
  %1731 = vmatpush1.bf16.xpose.msra.mxu0 0
  %1732 = vmatprep.subr.bf16.mxu0 0
  %1733 = vmatpush1.bf16.xpose.msra.mxu0 0
  %1734 = vmatprep.subr.bf16.mxu0 0
  %1735 = vmatpush1.bf16.xpose.msra.mxu0 0
  %1736 = vmatprep.mubr.bf16.mxu0 0
  %1737 = vmatmul.mubr.bf16.gmra.mrb[0].mxu0 %v1699
  %v1738 = vpop.f32.mrb[0].mxu0
  %v1739 = vadd.f32 0.0, %v1738
  %v1740 = vpop.f32.mrb[0].mxu0
  %v1741 = vpop.f32.mrb[0].mxu0
  %v1742 = vpop.f32.mrb[0].mxu0
  %1743 = vdwg.mxu0
  %v1744 = vsel %vm1303, %v1689, -inf
  %1745 = vmax.xlane.f32.xlu0 %v1744
  %v1746 = vpop.xlane.xlu0 %1745
  %v1747 = vsel %vm1303, %v1739, -inf
  %1748 = vmax.xlane.f32.xlu0 %v1747
  %v1749 = vpop.xlane.xlu0 %1748
  %v1750 = vsub.f32 %v1689, %v1746
  %v1751 = vsub.f32 %v1739, %v1749
  %v1752 = vmul.f32 %v1750, 1.442695
  %v1753 = vpow.pop %v1752
  %v1754 = vmul.f32 %v1751, 1.442695
  %v1755 = vpow.pop %v1754
  %v1756 = vsel %vm1303, %v1753, 0.0
  %1757 = vadd.xlane.f32.xlu0 %v1756
  %v1758 = vpop.xlane.xlu0 %1757
  %v1759 = vsel %vm1303, %v1755, 0.0
  %1760 = vadd.xlane.f32.xlu0 %v1759
  %v1761 = vpop.xlane.xlu0 %1760
  %v1762 = vrcp.pop %v1758
  %v1763 = vrcp.pop %v1761
  %v1764 = vmul.f32 %v1753, %v1762
  %v1765 = vmul.f32 %v1755, %v1763
  %v1766 = vpack.c.bf16 %v1764, %v1764
  %v1767 = vpack.c.bf16 %v1765, %v1765
  %1768 = vrot.lane.b32.xlu0 %v1207, 32
  %v1769 = vpop.permute.xlu0 %1768
  %v1772 = vsel %vm1303, %v1766, 0
  %1774 = vmatprep.subr.bf16.mxu0 0
  %1775 = vmatpush1.bf16.msra.mxu0 %v1769
  %1776 = vmatprep.subr.bf16.mxu0 0
  %1777 = vmatpush1.bf16.msra.mxu0 0
  %1778 = vmatprep.subr.bf16.mxu0 0
  %1779 = vmatpush1.bf16.msra.mxu0 0
  %1780 = vmatprep.subr.bf16.mxu0 0
  %1781 = vmatpush1.bf16.msra.mxu0 0
  %1782 = vmatprep.subr.bf16.mxu0 0
  %1783 = vmatpush1.bf16.msra.mxu0 0
  %1784 = vmatprep.subr.bf16.mxu0 0
  %1785 = vmatpush1.bf16.msra.mxu0 0
  %1786 = vmatprep.subr.bf16.mxu0 0
  %1787 = vmatpush1.bf16.msra.mxu0 0
  %1788 = vmatprep.subr.bf16.mxu0 0
  %1789 = vmatpush1.bf16.msra.mxu0 0
  %1790 = vmatprep.subr.bf16.mxu0 0
  %1791 = vmatpush1.bf16.msra.mxu0 0
  %1792 = vmatprep.subr.bf16.mxu0 0
  %1793 = vmatpush1.bf16.msra.mxu0 0
  %1794 = vmatprep.subr.bf16.mxu0 0
  %1795 = vmatpush1.bf16.msra.mxu0 0
  %1796 = vmatprep.subr.bf16.mxu0 0
  %1797 = vmatpush1.bf16.msra.mxu0 0
  %1798 = vmatprep.subr.bf16.mxu0 0
  %1799 = vmatpush1.bf16.msra.mxu0 0
  %1800 = vmatprep.subr.bf16.mxu0 0
  %1801 = vmatpush1.bf16.msra.mxu0 0
  %1802 = vmatprep.subr.bf16.mxu0 0
  %1803 = vmatpush1.bf16.msra.mxu0 0
  %1804 = vmatprep.subr.bf16.mxu0 0
  %1805 = vmatpush1.bf16.msra.mxu0 0
  %1806 = vmatprep.mubr.bf16.mxu0 0
  %1807 = vmatmul.mubr.bf16.gmra.mrb[0].mxu0 %v1772
  %v1808 = vpop.f32.mrb[0].mxu0
  %v1809 = vadd.f32 0.0, %v1808
  %v1810 = vpop.f32.mrb[0].mxu0
  %v1811 = vpop.f32.mrb[0].mxu0
  %v1812 = vpop.f32.mrb[0].mxu0
  %1813 = vdwg.mxu0
  %1814 = vrot.lane.b32.xlu0 %v1208, 32
  %v1815 = vpop.permute.xlu0 %1814
  %v1818 = vsel %vm1303, %v1767, 0
  %1820 = vmatprep.subr.bf16.mxu0 0
  %1821 = vmatpush1.bf16.msra.mxu0 %v1815
  %1822 = vmatprep.subr.bf16.mxu0 0
  %1823 = vmatpush1.bf16.msra.mxu0 0
  %1824 = vmatprep.subr.bf16.mxu0 0
  %1825 = vmatpush1.bf16.msra.mxu0 0
  %1826 = vmatprep.subr.bf16.mxu0 0
  %1827 = vmatpush1.bf16.msra.mxu0 0
  %1828 = vmatprep.subr.bf16.mxu0 0
  %1829 = vmatpush1.bf16.msra.mxu0 0
  %1830 = vmatprep.subr.bf16.mxu0 0
  %1831 = vmatpush1.bf16.msra.mxu0 0
  %1832 = vmatprep.subr.bf16.mxu0 0
  %1833 = vmatpush1.bf16.msra.mxu0 0
  %1834 = vmatprep.subr.bf16.mxu0 0
  %1835 = vmatpush1.bf16.msra.mxu0 0
  %1836 = vmatprep.subr.bf16.mxu0 0
  %1837 = vmatpush1.bf16.msra.mxu0 0
  %1838 = vmatprep.subr.bf16.mxu0 0
  %1839 = vmatpush1.bf16.msra.mxu0 0
  %1840 = vmatprep.subr.bf16.mxu0 0
  %1841 = vmatpush1.bf16.msra.mxu0 0
  %1842 = vmatprep.subr.bf16.mxu0 0
  %1843 = vmatpush1.bf16.msra.mxu0 0
  %1844 = vmatprep.subr.bf16.mxu0 0
  %1845 = vmatpush1.bf16.msra.mxu0 0
  %1846 = vmatprep.subr.bf16.mxu0 0
  %1847 = vmatpush1.bf16.msra.mxu0 0
  %1848 = vmatprep.subr.bf16.mxu0 0
  %1849 = vmatpush1.bf16.msra.mxu0 0
  %1850 = vmatprep.subr.bf16.mxu0 0
  %1851 = vmatpush1.bf16.msra.mxu0 0
  %1852 = vmatprep.mubr.bf16.mxu0 0
  %1853 = vmatmul.mubr.bf16.gmra.mrb[0].mxu0 %v1818
  %v1854 = vpop.f32.mrb[0].mxu0
  %v1855 = vadd.f32 0.0, %v1854
  %v1856 = vpop.f32.mrb[0].mxu0
  %v1857 = vpop.f32.mrb[0].mxu0
  %v1858 = vpop.f32.mrb[0].mxu0
  %1859 = vdwg.mxu0
  %v1860 = vadd.f32 %v1642, %v1809
  %v1861 = vadd.f32 %v1643, %v1855
  %1862 = vrot.lane.b32.xlu0 %v1205, 104
  %v1863 = vpop.permute.xlu0 %1862
  %1864 = vrot.lane.b32.xlu0 %v1207, 104
  %v1865 = vpop.permute.xlu0 %1864
  %v1867 = vsel %vm126, %v1863, 0
  %v1870 = vsel %vm126, %v1865, 0
  %1872 = vmatprep.subr.bf16.mxu0 0
  %1873 = vmatpush1.bf16.xpose.msra.mxu0 %v1870
  %1874 = vmatprep.subr.bf16.mxu0 0
  %1875 = vmatpush1.bf16.xpose.msra.mxu0 0
  %1876 = vmatprep.subr.bf16.mxu0 0
  %1877 = vmatpush1.bf16.xpose.msra.mxu0 0
  %1878 = vmatprep.subr.bf16.mxu0 0
  %1879 = vmatpush1.bf16.xpose.msra.mxu0 0
  %1880 = vmatprep.subr.bf16.mxu0 0
  %1881 = vmatpush1.bf16.xpose.msra.mxu0 0
  %1882 = vmatprep.subr.bf16.mxu0 0
  %1883 = vmatpush1.bf16.xpose.msra.mxu0 0
  %1884 = vmatprep.subr.bf16.mxu0 0
  %1885 = vmatpush1.bf16.xpose.msra.mxu0 0
  %1886 = vmatprep.subr.bf16.mxu0 0
  %1887 = vmatpush1.bf16.xpose.msra.mxu0 0
  %1888 = vmatprep.subr.bf16.mxu0 0
  %1889 = vmatpush1.bf16.xpose.msra.mxu0 0
  %1890 = vmatprep.subr.bf16.mxu0 0
  %1891 = vmatpush1.bf16.xpose.msra.mxu0 0
  %1892 = vmatprep.subr.bf16.mxu0 0
  %1893 = vmatpush1.bf16.xpose.msra.mxu0 0
  %1894 = vmatprep.subr.bf16.mxu0 0
  %1895 = vmatpush1.bf16.xpose.msra.mxu0 0
  %1896 = vmatprep.subr.bf16.mxu0 0
  %1897 = vmatpush1.bf16.xpose.msra.mxu0 0
  %1898 = vmatprep.subr.bf16.mxu0 0
  %1899 = vmatpush1.bf16.xpose.msra.mxu0 0
  %1900 = vmatprep.subr.bf16.mxu0 0
  %1901 = vmatpush1.bf16.xpose.msra.mxu0 0
  %1902 = vmatprep.subr.bf16.mxu0 0
  %1903 = vmatpush1.bf16.xpose.msra.mxu0 0
  %1904 = vmatprep.mubr.bf16.mxu0 0
  %1905 = vmatmul.mubr.bf16.gmra.mrb[0].mxu0 %v1867
  %v1906 = vpop.f32.mrb[0].mxu0
  %v1907 = vadd.f32 0.0, %v1906
  %v1908 = vpop.f32.mrb[0].mxu0
  %v1909 = vpop.f32.mrb[0].mxu0
  %v1910 = vpop.f32.mrb[0].mxu0
  %1911 = vdwg.mxu0
  %1912 = vrot.lane.b32.xlu0 %v1206, 104
  %v1913 = vpop.permute.xlu0 %1912
  %1914 = vrot.lane.b32.xlu0 %v1208, 104
  %v1915 = vpop.permute.xlu0 %1914
  %v1917 = vsel %vm126, %v1913, 0
  %v1920 = vsel %vm126, %v1915, 0
  %1922 = vmatprep.subr.bf16.mxu0 0
  %1923 = vmatpush1.bf16.xpose.msra.mxu0 %v1920
  %1924 = vmatprep.subr.bf16.mxu0 0
  %1925 = vmatpush1.bf16.xpose.msra.mxu0 0
  %1926 = vmatprep.subr.bf16.mxu0 0
  %1927 = vmatpush1.bf16.xpose.msra.mxu0 0
  %1928 = vmatprep.subr.bf16.mxu0 0
  %1929 = vmatpush1.bf16.xpose.msra.mxu0 0
  %1930 = vmatprep.subr.bf16.mxu0 0
  %1931 = vmatpush1.bf16.xpose.msra.mxu0 0
  %1932 = vmatprep.subr.bf16.mxu0 0
  %1933 = vmatpush1.bf16.xpose.msra.mxu0 0
  %1934 = vmatprep.subr.bf16.mxu0 0
  %1935 = vmatpush1.bf16.xpose.msra.mxu0 0
  %1936 = vmatprep.subr.bf16.mxu0 0
  %1937 = vmatpush1.bf16.xpose.msra.mxu0 0
  %1938 = vmatprep.subr.bf16.mxu0 0
  %1939 = vmatpush1.bf16.xpose.msra.mxu0 0
  %1940 = vmatprep.subr.bf16.mxu0 0
  %1941 = vmatpush1.bf16.xpose.msra.mxu0 0
  %1942 = vmatprep.subr.bf16.mxu0 0
  %1943 = vmatpush1.bf16.xpose.msra.mxu0 0
  %1944 = vmatprep.subr.bf16.mxu0 0
  %1945 = vmatpush1.bf16.xpose.msra.mxu0 0
  %1946 = vmatprep.subr.bf16.mxu0 0
  %1947 = vmatpush1.bf16.xpose.msra.mxu0 0
  %1948 = vmatprep.subr.bf16.mxu0 0
  %1949 = vmatpush1.bf16.xpose.msra.mxu0 0
  %1950 = vmatprep.subr.bf16.mxu0 0
  %1951 = vmatpush1.bf16.xpose.msra.mxu0 0
  %1952 = vmatprep.subr.bf16.mxu0 0
  %1953 = vmatpush1.bf16.xpose.msra.mxu0 0
  %1954 = vmatprep.mubr.bf16.mxu0 0
  %1955 = vmatmul.mubr.bf16.gmra.mrb[0].mxu0 %v1917
  %v1956 = vpop.f32.mrb[0].mxu0
  %v1957 = vadd.f32 0.0, %v1956
  %v1958 = vpop.f32.mrb[0].mxu0
  %v1959 = vpop.f32.mrb[0].mxu0
  %v1960 = vpop.f32.mrb[0].mxu0
  %1961 = vdwg.mxu0
  %v1962 = vsel %vm1303, %v1907, -inf
  %1963 = vmax.xlane.f32.xlu0 %v1962
  %v1964 = vpop.xlane.xlu0 %1963
  %v1965 = vsel %vm1303, %v1957, -inf
  %1966 = vmax.xlane.f32.xlu0 %v1965
  %v1967 = vpop.xlane.xlu0 %1966
  %v1968 = vsub.f32 %v1907, %v1964
  %v1969 = vsub.f32 %v1957, %v1967
  %v1970 = vmul.f32 %v1968, 1.442695
  %v1971 = vpow.pop %v1970
  %v1972 = vmul.f32 %v1969, 1.442695
  %v1973 = vpow.pop %v1972
  %v1974 = vsel %vm1303, %v1971, 0.0
  %1975 = vadd.xlane.f32.xlu0 %v1974
  %v1976 = vpop.xlane.xlu0 %1975
  %v1977 = vsel %vm1303, %v1973, 0.0
  %1978 = vadd.xlane.f32.xlu0 %v1977
  %v1979 = vpop.xlane.xlu0 %1978
  %v1980 = vrcp.pop %v1976
  %v1981 = vrcp.pop %v1979
  %v1982 = vmul.f32 %v1971, %v1980
  %v1983 = vmul.f32 %v1973, %v1981
  %v1984 = vpack.c.bf16 %v1982, %v1982
  %v1985 = vpack.c.bf16 %v1983, %v1983
  %v1987 = vsel %vm1303, %v1984, 0
  %1989 = vmatprep.subr.bf16.mxu0 0
  %1990 = vmatpush1.bf16.msra.mxu0 %v1209
  %1991 = vmatprep.subr.bf16.mxu0 0
  %1992 = vmatpush1.bf16.msra.mxu0 0
  %1993 = vmatprep.subr.bf16.mxu0 0
  %1994 = vmatpush1.bf16.msra.mxu0 0
  %1995 = vmatprep.subr.bf16.mxu0 0
  %1996 = vmatpush1.bf16.msra.mxu0 0
  %1997 = vmatprep.subr.bf16.mxu0 0
  %1998 = vmatpush1.bf16.msra.mxu0 0
  %1999 = vmatprep.subr.bf16.mxu0 0
  %2000 = vmatpush1.bf16.msra.mxu0 0
  %2001 = vmatprep.subr.bf16.mxu0 0
  %2002 = vmatpush1.bf16.msra.mxu0 0
  %2003 = vmatprep.subr.bf16.mxu0 0
  %2004 = vmatpush1.bf16.msra.mxu0 0
  %2005 = vmatprep.subr.bf16.mxu0 0
  %2006 = vmatpush1.bf16.msra.mxu0 0
  %2007 = vmatprep.subr.bf16.mxu0 0
  %2008 = vmatpush1.bf16.msra.mxu0 0
  %2009 = vmatprep.subr.bf16.mxu0 0
  %2010 = vmatpush1.bf16.msra.mxu0 0
  %2011 = vmatprep.subr.bf16.mxu0 0
  %2012 = vmatpush1.bf16.msra.mxu0 0
  %2013 = vmatprep.subr.bf16.mxu0 0
  %2014 = vmatpush1.bf16.msra.mxu0 0
  %2015 = vmatprep.subr.bf16.mxu0 0
  %2016 = vmatpush1.bf16.msra.mxu0 0
  %2017 = vmatprep.subr.bf16.mxu0 0
  %2018 = vmatpush1.bf16.msra.mxu0 0
  %2019 = vmatprep.subr.bf16.mxu0 0
  %2020 = vmatpush1.bf16.msra.mxu0 0
  %2021 = vmatprep.mubr.bf16.mxu0 0
  %2022 = vmatmul.mubr.bf16.gmra.mrb[0].mxu0 %v1987
  %v2023 = vpop.f32.mrb[0].mxu0
  %v2024 = vadd.f32 0.0, %v2023
  %v2025 = vpop.f32.mrb[0].mxu0
  %v2026 = vpop.f32.mrb[0].mxu0
  %v2027 = vpop.f32.mrb[0].mxu0
  %2028 = vdwg.mxu0
  %v2030 = vsel %vm1303, %v1985, 0
  %2032 = vmatprep.subr.bf16.mxu0 0
  %2033 = vmatpush1.bf16.msra.mxu0 %v1210
  %2034 = vmatprep.subr.bf16.mxu0 0
  %2035 = vmatpush1.bf16.msra.mxu0 0
  %2036 = vmatprep.subr.bf16.mxu0 0
  %2037 = vmatpush1.bf16.msra.mxu0 0
  %2038 = vmatprep.subr.bf16.mxu0 0
  %2039 = vmatpush1.bf16.msra.mxu0 0
  %2040 = vmatprep.subr.bf16.mxu0 0
  %2041 = vmatpush1.bf16.msra.mxu0 0
  %2042 = vmatprep.subr.bf16.mxu0 0
  %2043 = vmatpush1.bf16.msra.mxu0 0
  %2044 = vmatprep.subr.bf16.mxu0 0
  %2045 = vmatpush1.bf16.msra.mxu0 0
  %2046 = vmatprep.subr.bf16.mxu0 0
  %2047 = vmatpush1.bf16.msra.mxu0 0
  %2048 = vmatprep.subr.bf16.mxu0 0
  %2049 = vmatpush1.bf16.msra.mxu0 0
  %2050 = vmatprep.subr.bf16.mxu0 0
  %2051 = vmatpush1.bf16.msra.mxu0 0
  %2052 = vmatprep.subr.bf16.mxu0 0
  %2053 = vmatpush1.bf16.msra.mxu0 0
  %2054 = vmatprep.subr.bf16.mxu0 0
  %2055 = vmatpush1.bf16.msra.mxu0 0
  %2056 = vmatprep.subr.bf16.mxu0 0
  %2057 = vmatpush1.bf16.msra.mxu0 0
  %2058 = vmatprep.subr.bf16.mxu0 0
  %2059 = vmatpush1.bf16.msra.mxu0 0
  %2060 = vmatprep.subr.bf16.mxu0 0
  %2061 = vmatpush1.bf16.msra.mxu0 0
  %2062 = vmatprep.subr.bf16.mxu0 0
  %2063 = vmatpush1.bf16.msra.mxu0 0
  %2064 = vmatprep.mubr.bf16.mxu0 0
  %2065 = vmatmul.mubr.bf16.gmra.mrb[0].mxu0 %v2030
  %v2066 = vpop.f32.mrb[0].mxu0
  %v2067 = vadd.f32 0.0, %v2066
  %v2068 = vpop.f32.mrb[0].mxu0
  %v2069 = vpop.f32.mrb[0].mxu0
  %v2070 = vpop.f32.mrb[0].mxu0
  %2071 = vdwg.mxu0
  %v2072 = vadd.f32 %v1860, %v2024
  %v2073 = vadd.f32 %v1861, %v2067
  %v2074 = vlaneseq
  %v2075 = vshrl.u32 %v2074, 7
  %v2076 = vsub.s32 4, %v2075
  %v2077 = vrot.slane %v38, %v2076
  %v2078 = vadd.f32 %v2072, %v2077
  %v2079 = vadd.f32 %v2073, %v2077
  %v2080 = vadd.f32 %v1054, %v2078
  %v2081 = vadd.f32 %v1055, %v2079
  %v2082 = vsel %vm72, %v2080, 0.0
  %2083 = vadd.xlane.f32.xlu0 %v2082
  %v2084 = vpop.xlane.xlu0 %2083
  %v2085 = vsel %vm72, %v2081, 0.0
  %2086 = vadd.xlane.f32.xlu0 %v2085
  %v2087 = vpop.xlane.xlu0 %2086
  %v2088 = vmul.f32 %v2084, %v1023
  %v2089 = vmul.f32 %v2087, %v1023
  %v2090 = vsub.f32 %v2080, %v2088
  %v2091 = vsub.f32 %v2081, %v2089
  %v2092 = vmul.f32 %v2090, %v2090
  %v2093 = vmul.f32 %v2091, %v2091
  %v2094 = vsel %vm72, %v2092, 0.0
  %2095 = vadd.xlane.f32.xlu0 %v2094
  %v2096 = vpop.xlane.xlu0 %2095
  %v2097 = vsel %vm72, %v2093, 0.0
  %2098 = vadd.xlane.f32.xlu0 %v2097
  %v2099 = vpop.xlane.xlu0 %2098
  %v2100 = vmul.f32 %v2096, %v1023
  %v2101 = vmul.f32 %v2099, %v1023
  %v2102 = vadd.f32 %v2100, 1e-05
  %v2103 = vadd.f32 %v2101, 1e-05
  %v2104 = vrsqrt.pop %v2102
  %v2105 = vrsqrt.pop %v2103
  %v2106 = vmul.f32 %v2090, %v2104
  %v2107 = vmul.f32 %v2091, %v2105
  %v2108 = vlaneseq
  %v2109 = vshrl.u32 %v2108, 7
  %v2110 = vsub.s32 1, %v2109
  %v2111 = vrot.slane %v42, %v2110
  %v2112 = vmul.f32 %v2106, %v2111
  %v2113 = vmul.f32 %v2107, %v2111
  %v2114 = vlaneseq
  %v2115 = vshrl.u32 %v2114, 7
  %v2116 = vsub.s32 2, %v2115
  %v2117 = vrot.slane %v42, %v2116
  %v2118 = vadd.f32 %v2112, %v2117
  %v2119 = vadd.f32 %v2113, %v2117
  %v2120 = vpack.c.bf16 %v2119, %v2118
  %v2121 = vld [vmem:[%s3] sm:$0xff]
  %v2122 = vld [vmem:[%s3 + $0x8] sm:$0xff]
  %v2123 = vld [vmem:[%s3 + $0x10] sm:$0xff]
  %v2124 = vld [vmem:[%s3 + $0x18] sm:$0xff]
  %v2125 = vld [vmem:[%s3 + $0x20] sm:$0xff]
  %v2126 = vld [vmem:[%s3 + $0x28] sm:$0xff]
  %v2127 = vld [vmem:[%s3 + $0x30] sm:$0xff]
  %v2128 = vld [vmem:[%s3 + $0x38] sm:$0xff]
  %v2129 = vlaneseq
  %v2130 = vshrl.u32 %v2129, 7
  %v2131 = vsub.s32 5, %v2130
  %v2132 = vrot.slane %v38, %v2131
  %v2133 = vlaneseq
  %v2134 = vshrl.u32 %v2133, 7
  %v2135 = vsub.s32 5, %v2134
  %v2136 = vrot.slane %v39, %v2135
  %v2137 = vlaneseq
  %v2138 = vshrl.u32 %v2137, 7
  %v2139 = vsub.s32 5, %v2138
  %v2140 = vrot.slane %v40, %v2139
  %v2141 = vlaneseq
  %v2142 = vshrl.u32 %v2141, 7
  %v2143 = vsub.s32 5, %v2142
  %v2144 = vrot.slane %v41, %v2143
  %v2153 = vunpack.c.l.b16 %v2121
  %v2154 = vunpack.c.h.b16 %v2121
  %v2155 = vunpack.c.l.b16 %v2122
  %v2156 = vunpack.c.h.b16 %v2122
  %v2157 = vunpack.c.l.b16 %v2123
  %v2158 = vunpack.c.h.b16 %v2123
  %v2159 = vunpack.c.l.b16 %v2124
  %v2160 = vunpack.c.h.b16 %v2124
  %v2161 = vunpack.c.l.b16 %v2125
  %v2162 = vunpack.c.h.b16 %v2125
  %v2163 = vunpack.c.l.b16 %v2126
  %v2164 = vunpack.c.h.b16 %v2126
  %v2165 = vunpack.c.l.b16 %v2127
  %v2166 = vunpack.c.h.b16 %v2127
  %v2167 = vunpack.c.l.b16 %v2128
  %v2168 = vunpack.c.h.b16 %v2128
  %v2169 = vpack.c.b16 %v2157, %v2153
  %v2170 = vpack.c.b16 %v2158, %v2154
  %v2171 = vpack.c.b16 %v2159, %v2155
  %v2172 = vpack.c.b16 %v2160, %v2156
  %v2173 = vpack.c.b16 %v2165, %v2161
  %v2174 = vpack.c.b16 %v2166, %v2162
  %v2175 = vpack.c.b16 %v2167, %v2163
  %v2176 = vpack.c.b16 %v2168, %v2164
  %v2186 = vsel %vm72, %v2120, 0
  %2188 = vmatprep.subr.bf16.mxu0 %v2170
  %2189 = vmatpush1.bf16.msra.mxu0 %v2169
  %2190 = vmatprep.subr.bf16.mxu0 %v2174
  %2191 = vmatpush1.bf16.msra.mxu0 %v2173
  %2192 = vmatprep.subr.bf16.mxu0 0
  %2193 = vmatpush1.bf16.msra.mxu0 0
  %2194 = vmatprep.subr.bf16.mxu0 0
  %2195 = vmatpush1.bf16.msra.mxu0 0
  %2196 = vmatprep.subr.bf16.mxu0 0
  %2197 = vmatpush1.bf16.msra.mxu0 0
  %2198 = vmatprep.subr.bf16.mxu0 0
  %2199 = vmatpush1.bf16.msra.mxu0 0
  %2200 = vmatprep.subr.bf16.mxu0 0
  %2201 = vmatpush1.bf16.msra.mxu0 0
  %2202 = vmatprep.subr.bf16.mxu0 0
  %2203 = vmatpush1.bf16.msra.mxu0 0
  %2204 = vmatprep.subr.bf16.mxu0 0
  %2205 = vmatpush1.bf16.msra.mxu0 0
  %2206 = vmatprep.subr.bf16.mxu0 0
  %2207 = vmatpush1.bf16.msra.mxu0 0
  %2208 = vmatprep.subr.bf16.mxu0 0
  %2209 = vmatpush1.bf16.msra.mxu0 0
  %2210 = vmatprep.subr.bf16.mxu0 0
  %2211 = vmatpush1.bf16.msra.mxu0 0
  %2212 = vmatprep.subr.bf16.mxu0 0
  %2213 = vmatpush1.bf16.msra.mxu0 0
  %2214 = vmatprep.subr.bf16.mxu0 0
  %2215 = vmatpush1.bf16.msra.mxu0 0
  %2216 = vmatprep.subr.bf16.mxu0 0
  %2217 = vmatpush1.bf16.msra.mxu0 0
  %2218 = vmatprep.subr.bf16.mxu0 0
  %2219 = vmatpush1.bf16.msra.mxu0 0
  %2220 = vmatprep.mubr.bf16.mxu0 0
  %2221 = vmatmul.mubr.bf16.gmra.mrb[0].mxu0 %v2186
  %v2222 = vpop.f32.mrb[0].mxu0
  %v2223 = vadd.f32 %v2132, %v2222
  %v2224 = vpop.f32.mrb[0].mxu0
  %v2225 = vadd.f32 %v2136, %v2224
  %v2226 = vpop.f32.mrb[0].mxu0
  %v2227 = vadd.f32 %v2132, %v2226
  %v2228 = vpop.f32.mrb[0].mxu0
  %v2229 = vadd.f32 %v2136, %v2228
  %2230 = vdwg.mxu0
  %2231 = vmatprep.subr.bf16.mxu0 %v2172
  %2232 = vmatpush1.bf16.msra.mxu0 %v2171
  %2233 = vmatprep.subr.bf16.mxu0 %v2176
  %2234 = vmatpush1.bf16.msra.mxu0 %v2175
  %2235 = vmatprep.subr.bf16.mxu0 0
  %2236 = vmatpush1.bf16.msra.mxu0 0
  %2237 = vmatprep.subr.bf16.mxu0 0
  %2238 = vmatpush1.bf16.msra.mxu0 0
  %2239 = vmatprep.subr.bf16.mxu0 0
  %2240 = vmatpush1.bf16.msra.mxu0 0
  %2241 = vmatprep.subr.bf16.mxu0 0
  %2242 = vmatpush1.bf16.msra.mxu0 0
  %2243 = vmatprep.subr.bf16.mxu0 0
  %2244 = vmatpush1.bf16.msra.mxu0 0
  %2245 = vmatprep.subr.bf16.mxu0 0
  %2246 = vmatpush1.bf16.msra.mxu0 0
  %2247 = vmatprep.subr.bf16.mxu0 0
  %2248 = vmatpush1.bf16.msra.mxu0 0
  %2249 = vmatprep.subr.bf16.mxu0 0
  %2250 = vmatpush1.bf16.msra.mxu0 0
  %2251 = vmatprep.subr.bf16.mxu0 0
  %2252 = vmatpush1.bf16.msra.mxu0 0
  %2253 = vmatprep.subr.bf16.mxu0 0
  %2254 = vmatpush1.bf16.msra.mxu0 0
  %2255 = vmatprep.subr.bf16.mxu0 0
  %2256 = vmatpush1.bf16.msra.mxu0 0
  %2257 = vmatprep.subr.bf16.mxu0 0
  %2258 = vmatpush1.bf16.msra.mxu0 0
  %2259 = vmatprep.subr.bf16.mxu0 0
  %2260 = vmatpush1.bf16.msra.mxu0 0
  %2261 = vmatprep.subr.bf16.mxu0 0
  %2262 = vmatpush1.bf16.msra.mxu0 0
  %2263 = vmatprep.mubr.bf16.mxu0 0
  %2264 = vmatmul.mubr.bf16.gmra.mrb[0].mxu0 %v2186
  %v2265 = vpop.f32.mrb[0].mxu0
  %v2266 = vadd.f32 %v2140, %v2265
  %v2267 = vpop.f32.mrb[0].mxu0
  %v2268 = vadd.f32 %v2144, %v2267
  %v2269 = vpop.f32.mrb[0].mxu0
  %v2270 = vadd.f32 %v2140, %v2269
  %v2271 = vpop.f32.mrb[0].mxu0
  %v2272 = vadd.f32 %v2144, %v2271
  %2273 = vdwg.mxu0
  %v2274 = vmax.f32 %v2223, 0.0
  %v2275 = vmax.f32 %v2225, 0.0
  %v2276 = vmax.f32 %v2266, 0.0
  %v2277 = vmax.f32 %v2268, 0.0
  %v2278 = vmax.f32 %v2227, 0.0
  %v2279 = vmax.f32 %v2229, 0.0
  %v2280 = vmax.f32 %v2270, 0.0
  %v2281 = vmax.f32 %v2272, 0.0
  %v2282 = vpack.c.bf16 %v2278, %v2274
  %v2283 = vpack.c.bf16 %v2279, %v2275
  %v2284 = vpack.c.bf16 %v2280, %v2276
  %v2285 = vpack.c.bf16 %v2281, %v2277
  %v2286 = vld [vmem:[%s4] sm:$0xf]
  %v2287 = vld [vmem:[%s4 + $0x4] sm:$0xf]
  %v2288 = vld [vmem:[%s4 + $0x8] sm:$0xf]
  %v2289 = vld [vmem:[%s4 + $0xc] sm:$0xf]
  %v2290 = vld [vmem:[%s4 + $0x10] sm:$0xf]
  %v2291 = vld [vmem:[%s4 + $0x14] sm:$0xf]
  %v2292 = vld [vmem:[%s4 + $0x18] sm:$0xf]
  %v2293 = vld [vmem:[%s4 + $0x1c] sm:$0xf]
  %v2294 = vld [vmem:[%s4 + $0x20] sm:$0xf]
  %v2295 = vld [vmem:[%s4 + $0x24] sm:$0xf]
  %v2296 = vld [vmem:[%s4 + $0x28] sm:$0xf]
  %v2297 = vld [vmem:[%s4 + $0x2c] sm:$0xf]
  %v2298 = vld [vmem:[%s4 + $0x30] sm:$0xf]
  %v2299 = vld [vmem:[%s4 + $0x34] sm:$0xf]
  %v2300 = vld [vmem:[%s4 + $0x38] sm:$0xf]
  %v2301 = vld [vmem:[%s4 + $0x3c] sm:$0xf]
  %v2302 = vld [vmem:[%s4 + $0x40] sm:$0xf]
  %v2303 = vld [vmem:[%s4 + $0x44] sm:$0xf]
  %v2304 = vld [vmem:[%s4 + $0x48] sm:$0xf]
  %v2305 = vld [vmem:[%s4 + $0x4c] sm:$0xf]
  %v2306 = vld [vmem:[%s4 + $0x50] sm:$0xf]
  %v2307 = vld [vmem:[%s4 + $0x54] sm:$0xf]
  %v2308 = vld [vmem:[%s4 + $0x58] sm:$0xf]
  %v2309 = vld [vmem:[%s4 + $0x5c] sm:$0xf]
  %v2310 = vld [vmem:[%s4 + $0x60] sm:$0xf]
  %v2311 = vld [vmem:[%s4 + $0x64] sm:$0xf]
  %v2312 = vld [vmem:[%s4 + $0x68] sm:$0xf]
  %v2313 = vld [vmem:[%s4 + $0x6c] sm:$0xf]
  %v2314 = vld [vmem:[%s4 + $0x70] sm:$0xf]
  %v2315 = vld [vmem:[%s4 + $0x74] sm:$0xf]
  %v2316 = vld [vmem:[%s4 + $0x78] sm:$0xf]
  %v2317 = vld [vmem:[%s4 + $0x7c] sm:$0xf]
  %v2318 = vld [vmem:[%s4 + $0x80] sm:$0xf]
  %v2319 = vld [vmem:[%s4 + $0x84] sm:$0xf]
  %v2320 = vld [vmem:[%s4 + $0x88] sm:$0xf]
  %v2321 = vld [vmem:[%s4 + $0x8c] sm:$0xf]
  %v2322 = vld [vmem:[%s4 + $0x90] sm:$0xf]
  %v2323 = vld [vmem:[%s4 + $0x94] sm:$0xf]
  %v2324 = vld [vmem:[%s4 + $0x98] sm:$0xf]
  %v2325 = vld [vmem:[%s4 + $0x9c] sm:$0xf]
  %v2326 = vld [vmem:[%s4 + $0xa0] sm:$0xf]
  %v2327 = vld [vmem:[%s4 + $0xa4] sm:$0xf]
  %v2328 = vld [vmem:[%s4 + $0xa8] sm:$0xf]
  %v2329 = vld [vmem:[%s4 + $0xac] sm:$0xf]
  %v2330 = vld [vmem:[%s4 + $0xb0] sm:$0xf]
  %v2331 = vld [vmem:[%s4 + $0xb4] sm:$0xf]
  %v2332 = vld [vmem:[%s4 + $0xb8] sm:$0xf]
  %v2333 = vld [vmem:[%s4 + $0xbc] sm:$0xf]
  %v2334 = vld [vmem:[%s4 + $0xc0] sm:$0xf]
  %v2335 = vld [vmem:[%s4 + $0xc4] sm:$0xf]
  %v2336 = vld [vmem:[%s4 + $0xc8] sm:$0xf]
  %v2337 = vld [vmem:[%s4 + $0xcc] sm:$0xf]
  %v2338 = vld [vmem:[%s4 + $0xd0] sm:$0xf]
  %v2339 = vld [vmem:[%s4 + $0xd4] sm:$0xf]
  %v2340 = vld [vmem:[%s4 + $0xd8] sm:$0xf]
  %v2341 = vld [vmem:[%s4 + $0xdc] sm:$0xf]
  %v2342 = vld [vmem:[%s4 + $0xe0] sm:$0xf]
  %v2343 = vld [vmem:[%s4 + $0xe4] sm:$0xf]
  %v2344 = vld [vmem:[%s4 + $0xe8] sm:$0xf]
  %v2345 = vld [vmem:[%s4 + $0xec] sm:$0xf]
  %v2346 = vld [vmem:[%s4 + $0xf0] sm:$0xf]
  %v2347 = vld [vmem:[%s4 + $0xf4] sm:$0xf]
  %v2348 = vld [vmem:[%s4 + $0xf8] sm:$0xf]
  %v2349 = vld [vmem:[%s4 + $0xfc] sm:$0xf]
  %v2350 = vlaneseq
  %v2351 = vshrl.u32 %v2350, 7
  %v2352 = vsub.s32 6, %v2351
  %v2353 = vrot.slane %v38, %v2352
  %v2418 = vunpack.c.l.b16 %v2286
  %v2419 = vunpack.c.l.b16 %v2287
  %v2420 = vunpack.c.l.b16 %v2288
  %v2421 = vunpack.c.l.b16 %v2289
  %v2422 = vunpack.c.l.b16 %v2290
  %v2423 = vunpack.c.l.b16 %v2291
  %v2424 = vunpack.c.l.b16 %v2292
  %v2425 = vunpack.c.l.b16 %v2293
  %v2426 = vunpack.c.l.b16 %v2294
  %v2427 = vunpack.c.l.b16 %v2295
  %v2428 = vunpack.c.l.b16 %v2296
  %v2429 = vunpack.c.l.b16 %v2297
  %v2430 = vunpack.c.l.b16 %v2298
  %v2431 = vunpack.c.l.b16 %v2299
  %v2432 = vunpack.c.l.b16 %v2300
  %v2433 = vunpack.c.l.b16 %v2301
  %v2434 = vunpack.c.l.b16 %v2302
  %v2435 = vunpack.c.l.b16 %v2303
  %v2436 = vunpack.c.l.b16 %v2304
  %v2437 = vunpack.c.l.b16 %v2305
  %v2438 = vunpack.c.l.b16 %v2306
  %v2439 = vunpack.c.l.b16 %v2307
  %v2440 = vunpack.c.l.b16 %v2308
  %v2441 = vunpack.c.l.b16 %v2309
  %v2442 = vunpack.c.l.b16 %v2310
  %v2443 = vunpack.c.l.b16 %v2311
  %v2444 = vunpack.c.l.b16 %v2312
  %v2445 = vunpack.c.l.b16 %v2313
  %v2446 = vunpack.c.l.b16 %v2314
  %v2447 = vunpack.c.l.b16 %v2315
  %v2448 = vunpack.c.l.b16 %v2316
  %v2449 = vunpack.c.l.b16 %v2317
  %v2450 = vunpack.c.l.b16 %v2318
  %v2451 = vunpack.c.l.b16 %v2319
  %v2452 = vunpack.c.l.b16 %v2320
  %v2453 = vunpack.c.l.b16 %v2321
  %v2454 = vunpack.c.l.b16 %v2322
  %v2455 = vunpack.c.l.b16 %v2323
  %v2456 = vunpack.c.l.b16 %v2324
  %v2457 = vunpack.c.l.b16 %v2325
  %v2458 = vunpack.c.l.b16 %v2326
  %v2459 = vunpack.c.l.b16 %v2327
  %v2460 = vunpack.c.l.b16 %v2328
  %v2461 = vunpack.c.l.b16 %v2329
  %v2462 = vunpack.c.l.b16 %v2330
  %v2463 = vunpack.c.l.b16 %v2331
  %v2464 = vunpack.c.l.b16 %v2332
  %v2465 = vunpack.c.l.b16 %v2333
  %v2466 = vunpack.c.l.b16 %v2334
  %v2467 = vunpack.c.l.b16 %v2335
  %v2468 = vunpack.c.l.b16 %v2336
  %v2469 = vunpack.c.l.b16 %v2337
  %v2470 = vunpack.c.l.b16 %v2338
  %v2471 = vunpack.c.l.b16 %v2339
  %v2472 = vunpack.c.l.b16 %v2340
  %v2473 = vunpack.c.l.b16 %v2341
  %v2474 = vunpack.c.l.b16 %v2342
  %v2475 = vunpack.c.l.b16 %v2343
  %v2476 = vunpack.c.l.b16 %v2344
  %v2477 = vunpack.c.l.b16 %v2345
  %v2478 = vunpack.c.l.b16 %v2346
  %v2479 = vunpack.c.l.b16 %v2347
  %v2480 = vunpack.c.l.b16 %v2348
  %v2481 = vunpack.c.l.b16 %v2349
  %v2482 = vpack.c.b16 %v2419, %v2418
  %v2483 = vpack.c.b16 %v2421, %v2420
  %v2484 = vpack.c.b16 %v2423, %v2422
  %v2485 = vpack.c.b16 %v2425, %v2424
  %v2486 = vpack.c.b16 %v2427, %v2426
  %v2487 = vpack.c.b16 %v2429, %v2428
  %v2488 = vpack.c.b16 %v2431, %v2430
  %v2489 = vpack.c.b16 %v2433, %v2432
  %v2490 = vpack.c.b16 %v2435, %v2434
  %v2491 = vpack.c.b16 %v2437, %v2436
  %v2492 = vpack.c.b16 %v2439, %v2438
  %v2493 = vpack.c.b16 %v2441, %v2440
  %v2494 = vpack.c.b16 %v2443, %v2442
  %v2495 = vpack.c.b16 %v2445, %v2444
  %v2496 = vpack.c.b16 %v2447, %v2446
  %v2497 = vpack.c.b16 %v2449, %v2448
  %v2498 = vpack.c.b16 %v2451, %v2450
  %v2499 = vpack.c.b16 %v2453, %v2452
  %v2500 = vpack.c.b16 %v2455, %v2454
  %v2501 = vpack.c.b16 %v2457, %v2456
  %v2502 = vpack.c.b16 %v2459, %v2458
  %v2503 = vpack.c.b16 %v2461, %v2460
  %v2504 = vpack.c.b16 %v2463, %v2462
  %v2505 = vpack.c.b16 %v2465, %v2464
  %v2506 = vpack.c.b16 %v2467, %v2466
  %v2507 = vpack.c.b16 %v2469, %v2468
  %v2508 = vpack.c.b16 %v2471, %v2470
  %v2509 = vpack.c.b16 %v2473, %v2472
  %v2510 = vpack.c.b16 %v2475, %v2474
  %v2511 = vpack.c.b16 %v2477, %v2476
  %v2512 = vpack.c.b16 %v2479, %v2478
  %v2513 = vpack.c.b16 %v2481, %v2480
  %2546 = vmatprep.subr.bf16.mxu0 0
  %2547 = vmatpush1.bf16.msra.mxu0 %v2482
  %2548 = vmatprep.subr.bf16.mxu0 0
  %2549 = vmatpush1.bf16.msra.mxu0 %v2483
  %2550 = vmatprep.subr.bf16.mxu0 0
  %2551 = vmatpush1.bf16.msra.mxu0 %v2484
  %2552 = vmatprep.subr.bf16.mxu0 0
  %2553 = vmatpush1.bf16.msra.mxu0 %v2485
  %2554 = vmatprep.subr.bf16.mxu0 0
  %2555 = vmatpush1.bf16.msra.mxu0 %v2486
  %2556 = vmatprep.subr.bf16.mxu0 0
  %2557 = vmatpush1.bf16.msra.mxu0 %v2487
  %2558 = vmatprep.subr.bf16.mxu0 0
  %2559 = vmatpush1.bf16.msra.mxu0 %v2488
  %2560 = vmatprep.subr.bf16.mxu0 0
  %2561 = vmatpush1.bf16.msra.mxu0 %v2489
  %2562 = vmatprep.subr.bf16.mxu0 0
  %2563 = vmatpush1.bf16.msra.mxu0 %v2490
  %2564 = vmatprep.subr.bf16.mxu0 0
  %2565 = vmatpush1.bf16.msra.mxu0 %v2491
  %2566 = vmatprep.subr.bf16.mxu0 0
  %2567 = vmatpush1.bf16.msra.mxu0 %v2492
  %2568 = vmatprep.subr.bf16.mxu0 0
  %2569 = vmatpush1.bf16.msra.mxu0 %v2493
  %2570 = vmatprep.subr.bf16.mxu0 0
  %2571 = vmatpush1.bf16.msra.mxu0 %v2494
  %2572 = vmatprep.subr.bf16.mxu0 0
  %2573 = vmatpush1.bf16.msra.mxu0 %v2495
  %2574 = vmatprep.subr.bf16.mxu0 0
  %2575 = vmatpush1.bf16.msra.mxu0 %v2496
  %2576 = vmatprep.subr.bf16.mxu0 0
  %2577 = vmatpush1.bf16.msra.mxu0 %v2497
  %2578 = vmatprep.mubr.bf16.mxu0 %v2283
  %2579 = vmatmul.mubr.bf16.gmra.mrb[0].mxu0 %v2282
  %v2580 = vpop.f32.mrb[0].mxu0
  %v2581 = vadd.f32 %v2353, %v2580
  %v2582 = vpop.f32.mrb[0].mxu0
  %v2583 = vpop.f32.mrb[0].mxu0
  %v2584 = vadd.f32 %v2353, %v2583
  %v2585 = vpop.f32.mrb[0].mxu0
  %2586 = vdwg.mxu0
  %2587 = vmatprep.subr.bf16.mxu0 0
  %2588 = vmatpush1.bf16.msra.mxu0 %v2498
  %2589 = vmatprep.subr.bf16.mxu0 0
  %2590 = vmatpush1.bf16.msra.mxu0 %v2499
  %2591 = vmatprep.subr.bf16.mxu0 0
  %2592 = vmatpush1.bf16.msra.mxu0 %v2500
  %2593 = vmatprep.subr.bf16.mxu0 0
  %2594 = vmatpush1.bf16.msra.mxu0 %v2501
  %2595 = vmatprep.subr.bf16.mxu0 0
  %2596 = vmatpush1.bf16.msra.mxu0 %v2502
  %2597 = vmatprep.subr.bf16.mxu0 0
  %2598 = vmatpush1.bf16.msra.mxu0 %v2503
  %2599 = vmatprep.subr.bf16.mxu0 0
  %2600 = vmatpush1.bf16.msra.mxu0 %v2504
  %2601 = vmatprep.subr.bf16.mxu0 0
  %2602 = vmatpush1.bf16.msra.mxu0 %v2505
  %2603 = vmatprep.subr.bf16.mxu0 0
  %2604 = vmatpush1.bf16.msra.mxu0 %v2506
  %2605 = vmatprep.subr.bf16.mxu0 0
  %2606 = vmatpush1.bf16.msra.mxu0 %v2507
  %2607 = vmatprep.subr.bf16.mxu0 0
  %2608 = vmatpush1.bf16.msra.mxu0 %v2508
  %2609 = vmatprep.subr.bf16.mxu0 0
  %2610 = vmatpush1.bf16.msra.mxu0 %v2509
  %2611 = vmatprep.subr.bf16.mxu0 0
  %2612 = vmatpush1.bf16.msra.mxu0 %v2510
  %2613 = vmatprep.subr.bf16.mxu0 0
  %2614 = vmatpush1.bf16.msra.mxu0 %v2511
  %2615 = vmatprep.subr.bf16.mxu0 0
  %2616 = vmatpush1.bf16.msra.mxu0 %v2512
  %2617 = vmatprep.subr.bf16.mxu0 0
  %2618 = vmatpush1.bf16.msra.mxu0 %v2513
  %2619 = vmatprep.mubr.bf16.mxu0 %v2285
  %2620 = vmatmul.mubr.bf16.gmra.mrb[0].mxu0 %v2284
  %v2621 = vpop.f32.mrb[0].mxu0
  %v2622 = vadd.f32 %v2581, %v2621
  %v2623 = vpop.f32.mrb[0].mxu0
  %v2624 = vpop.f32.mrb[0].mxu0
  %v2625 = vadd.f32 %v2584, %v2624
  %v2626 = vpop.f32.mrb[0].mxu0
  %2627 = vdwg.mxu0
  %v2628 = vadd.f32 %v2118, %v2622
  %v2629 = vadd.f32 %v2119, %v2625
  %v2630 = vsel %vm72, %v2628, 0.0
  %2631 = vadd.xlane.f32.xlu0 %v2630
  %v2632 = vpop.xlane.xlu0 %2631
  %v2633 = vsel %vm72, %v2629, 0.0
  %2634 = vadd.xlane.f32.xlu0 %v2633
  %v2635 = vpop.xlane.xlu0 %2634
  %v2636 = vmul.f32 %v2632, %v1023
  %v2637 = vmul.f32 %v2635, %v1023
  %v2638 = vsub.f32 %v2628, %v2636
  %v2639 = vsub.f32 %v2629, %v2637
  %v2640 = vmul.f32 %v2638, %v2638
  %v2641 = vmul.f32 %v2639, %v2639
  %v2642 = vsel %vm72, %v2640, 0.0
  %2643 = vadd.xlane.f32.xlu0 %v2642
  %v2644 = vpop.xlane.xlu0 %2643
  %v2645 = vsel %vm72, %v2641, 0.0
  %2646 = vadd.xlane.f32.xlu0 %v2645
  %v2647 = vpop.xlane.xlu0 %2646
  %v2648 = vmul.f32 %v2644, %v1023
  %v2649 = vmul.f32 %v2647, %v1023
  %v2650 = vadd.f32 %v2648, 1e-05
  %v2651 = vadd.f32 %v2649, 1e-05
  %v2652 = vrsqrt.pop %v2650
  %v2653 = vrsqrt.pop %v2651
  %v2654 = vmul.f32 %v2638, %v2652
  %v2655 = vmul.f32 %v2639, %v2653
  %v2656 = vlaneseq
  %v2657 = vshrl.u32 %v2656, 7
  %v2658 = vsub.s32 3, %v2657
  %v2659 = vrot.slane %v42, %v2658
  %v2660 = vmul.f32 %v2654, %v2659
  %v2661 = vmul.f32 %v2655, %v2659
  %v2662 = vlaneseq
  %v2663 = vshrl.u32 %v2662, 7
  %v2664 = vsub.s32 4, %v2663
  %v2665 = vrot.slane %v42, %v2664
  %v2666 = vadd.f32 %v2660, %v2665
  %v2667 = vadd.f32 %v2661, %v2665
  %2668 = vst.msk [vmem:[%s6] sm:$0xff] %vm72, %v2666
  %2669 = vst.msk [vmem:[%s6 + $0x8] sm:$0xff] %vm72, %v2667
  // Predicated region
  $region26: #{transformer_decoder_layer.1} parent=0 // pred_check
    _
  $region27: #{transformer_decoder_layer.1} parent=0 // pred_check_branch
    %2671 = sbr.rel (0) target = $region29
  $region28: #{transformer_decoder_layer.1} parent=0 // pred_region
    _
  $region29: #{transformer_decoder_layer.1} parent=0 // pred_fallthru
    _
  // Predicated region
  $region30: #{transformer_decoder_layer.1} parent=0 // pred_check
    _
  $region31: #{transformer_decoder_layer.1} parent=0 // pred_check_branch
    %2673 = sbr.rel (0) target = $region33
  $region32: #{transformer_decoder_layer.1} parent=0 // pred_region
    _
  $region33: #{transformer_decoder_layer.1} parent=0 // pred_fallthru
    _

</llo_original>
